<compile_context>
chip_gen: v7x
topology: tpu7x:2x2x1
jax: 0.10.0
libtpu: 0.0.40
codegen_flags: <defaults>
</compile_context>

<pallas_src>
from functools import partial

import jax
import jax.numpy as jnp
import numpy as np
from jax.experimental import pallas as pl
from jax.experimental.pallas import tpu as pltpu

TEMP_CHANNEL = 256  # matches `temp_channel = 256` in the PyTorch module


def _round_up(x, m):
    return (x + m - 1) // m * m


def _vmem_limit_bytes():
    """Scoped-VMEM limit, clamped below physical capacity (v7x: 64 MiB/TC)."""
    try:
        cap = int(pltpu.get_tpu_info().vmem_capacity_bytes)
    except Exception:
        cap = 64 * 1024 * 1024  # conservative: v7x per-TensorCore capacity
    return min(48 * 1024 * 1024, cap * 3 // 4)


def _pick_strip_height(H, W, dil, cmid, coutp, cin, vmem_budget_bytes):
    """Largest row-strip height TH that divides H, keeps the boundary-halo
    zeroing logic valid (TH >= dilation, or a single strip), prefers >= 2
    strips (megacore) and fits a conservative VMEM budget."""
    wp_pad = _round_up(W + 2 * dil, 8)

    def cost(th):
        thp = th + 2 * dil
        return (thp * wp_pad * cmid * 4          # mid scratch (f32, single buffer)
                + 2 * th * W * coutp * 4         # double-buffered output block
                + 2 * thp * wp_pad * cin * 4     # double-buffered input strip
                + 2 * 9 * cmid * coutp * 4)      # double-buffered conv2 weights

    divs = [t for t in range(1, H + 1) if H % t == 0]
    valid = [t for t in divs if t >= dil or t == H]   # halo-zeroing correctness
    fitting = [t for t in valid if cost(t) <= vmem_budget_bytes]
    multi = [t for t in fitting if H // t >= 2]
    if multi:
        return max(multi)
    if fitting:
        return max(fitting)
    return H


# ---------------------------------------------------------------------------
# Fused kernel: relu(conv1x1) -> relu(dilated 3x3 conv) for one (batch, strip)
# ---------------------------------------------------------------------------
def _fused_spatial_block_kernel(x_ref, w1_ref, b1_ref, w2_ref, b2_ref,
                                o_ref, mid_ref, *, TH, W, dil):
    # x_ref:  (1, THp*Wp_pad, Cin)   zero-padded input strip incl. dilation halo
    # w1_ref: (Cin, Cmid)    b1_ref: (1, Cmid)
    # w2_ref: (9, Cmid, Coutp)   b2_ref: (1, Coutp)   (Coutp lane-padded to 128)
    # o_ref:  (1, TH*W, Coutp)
    # mid_ref: VMEM scratch (THp, Wp_pad, Cmid)
    THp, Wp_pad, Cmid = mid_ref.shape
    Coutp = w2_ref.shape[2]
    s = pl.program_id(1)
    last_s = pl.num_programs(1) - 1

    # ---- stage 1: 1x1 conv + bias + ReLU over the whole haloed strip -------
    mid = jnp.dot(x_ref[0], w1_ref[...], preferred_element_type=jnp.float32)
    mid = jnp.maximum(mid + b1_ref[...], 0.0)
    mid_ref[...] = mid.reshape(THp, Wp_pad, Cmid)   # Wp_pad % 8 == 0 -> free reshape

    # conv2 zero-pads *mid*: overwrite halo pixels lying in that padding
    # (x was zero there, but conv1's bias would leave relu(b1) != 0).
    mid_ref[:, 0:dil, :] = jnp.zeros((THp, dil, Cmid), jnp.float32)
    mid_ref[:, W + dil:Wp_pad, :] = jnp.zeros((THp, Wp_pad - W - dil, Cmid),
                                              jnp.float32)

    @pl.when(s == 0)
    def _():
        mid_ref[0:dil, :, :] = jnp.zeros((dil, Wp_pad, Cmid), jnp.float32)

    @pl.when(s == last_s)
    def _():
        mid_ref[TH + dil:THp, :, :] = jnp.zeros((dil, Wp_pad, Cmid), jnp.float32)

    # ---- stage 2: dilated 3x3 conv = 9 straight-line tap matmuls (MXU) -----
    # conv2 bias folded into the accumulator init (hoisted broadcast).
    acc = jnp.broadcast_to(b2_ref[...], (TH * W, Coutp))
    for kh in range(3):
        for kw in range(3):
            tap = mid_ref[kh * dil:kh * dil + TH, kw * dil:kw * dil + W, :]
            # reshape is layout-preserving when W % 8 == 0 (true at demo shapes)
            acc = acc + jnp.dot(tap.reshape(TH * W, Cmid), w2_ref[kh * 3 + kw],
                                preferred_element_type=jnp.float32)

    o_ref[0] = jnp.maximum(acc, 0.0).astype(o_ref.dtype)
    # TODO(synk): optionally carry mid in bf16 (halves scratch / load traffic)
    # for very large strips; kept f32 here for accuracy.


# ---------------------------------------------------------------------------
# Wrapper
# ---------------------------------------------------------------------------
def spatial_block_forward(x_nchw, params, dilation):
    w1, b1, w2, b2 = params["w1"], params["b1"], params["w2"], params["b2"]
    B, Cin, H, W = x_nchw.shape
    Cmid = w1.shape[1]
    Cout = w2.shape[-1]
    d = int(dilation)
    assert d >= 1, "SpatialBlock uses padding == dilation >= 1"

    Coutp = _round_up(Cout, 128)                     # lane-dense output channels
    Wp_pad = _round_up(W + 2 * d, 8)                 # sublane-aligned padded width
    vmem_limit = _vmem_limit_bytes()
    TH = _pick_strip_height(H, W, d, Cmid, Coutp, Cin,
                            vmem_budget_bytes=vmem_limit - 8 * 1024 * 1024)
    n_strips = H // TH
    THp = TH + 2 * d

    # lane-dense conv2 weights / bias (zero-padded output channels)
    w2p = jnp.pad(w2, ((0, 0), (0, 0), (0, 0), (0, Coutp - Cout)))
    w2p = w2p.reshape(9, Cmid, Coutp)
    b2p = jnp.pad(b2, (0, Coutp - Cout)).reshape(1, Coutp)
    b1r = b1.reshape(1, Cmid)

    # NCHW -> NHWC, zero-pad spatially (cheap: only Cin channels)
    x_nhwc = jnp.transpose(x_nchw, (0, 2, 3, 1))
    x_pad = jnp.pad(x_nhwc, ((0, 0), (d, d), (d, Wp_pad - W - d), (0, 0)))

    # Overlapping row strips with a dilation halo; static slices (no gather),
    # duplication only on the tiny-Cin input.
    x_strips = jnp.stack(
        [x_pad[:, s * TH:s * TH + THp] for s in range(n_strips)], axis=1)
    x_strips = x_strips.reshape(B * n_strips, THp * Wp_pad, Cin)

    kernel = partial(_fused_spatial_block_kernel, TH=TH, W=W, dil=d)

    out_p = pl.pallas_call(
        kernel,
        out_shape=jax.ShapeDtypeStruct((B * n_strips, TH * W, Coutp), jnp.float32),
        grid_spec=pltpu.PrefetchScalarGridSpec(
            num_scalar_prefetch=0,
            grid=(B, n_strips),
            in_specs=[
                pl.BlockSpec((1, THp * Wp_pad, Cin),
                             lambda b, s: (b * n_strips + s, 0, 0)),
                pl.BlockSpec((Cin, Cmid), lambda b, s: (0, 0)),
                pl.BlockSpec((1, Cmid), lambda b, s: (0, 0)),
                pl.BlockSpec((9, Cmid, Coutp), lambda b, s: (0, 0, 0)),
                pl.BlockSpec((1, Coutp), lambda b, s: (0, 0)),
            ],
            out_specs=pl.BlockSpec((1, TH * W, Coutp),
                                   lambda b, s: (b * n_strips + s, 0, 0)),
            scratch_shapes=[pltpu.VMEM((THp, Wp_pad, Cmid), jnp.float32)],
        ),
        compiler_params=pltpu.CompilerParams(
            dimension_semantics=("parallel", "parallel"),
            vmem_limit_bytes=vmem_limit,
        ),
    )(x_strips, w1, b1r, w2p, b2p)

    # (B*n_strips, TH*W, Coutp) -> (B, H, W, Coutp): contiguous, metadata-only.
    out = out_p.reshape(B, H, W, Coutp)[..., :Cout]  # drop zero-padded channels
    # TODO(synk): training-mode dropout (p=0.1) omitted; identity at inference.
    return jnp.transpose(out, (0, 3, 1, 2))          # NHWC -> NCHW


# ---------------------------------------------------------------------------
# Pure-JAX reference (correctness check)
# ---------------------------------------------------------------------------
def reference_forward(x_nchw, params, dilation):
    w1, b1, w2, b2 = params["w1"], params["b1"], params["w2"], params["b2"]
    Cin, Cmid = w1.shape
    d = int(dilation)
    x = jnp.transpose(x_nchw, (0, 2, 3, 1))
    y = jax.lax.conv_general_dilated(
        x, w1.reshape(1, 1, Cin, Cmid), (1, 1), "VALID",
        dimension_numbers=("NHWC", "HWIO", "NHWC"),
        precision=jax.lax.Precision.HIGHEST) + b1
    y = jnp.maximum(y, 0.0)
    y = jax.lax.conv_general_dilated(
        y, w2, (1, 1), padding=[(d, d), (d, d)], rhs_dilation=(d, d),
        dimension_numbers=("NHWC", "HWIO", "NHWC"),
        precision=jax.lax.Precision.HIGHEST) + b2
    y = jnp.maximum(y, 0.0)
    return jnp.transpose(y, (0, 3, 1, 2))


def init_params(key, n_inputs, n_outputs):
    k1, k2, k3, k4 = jax.random.split(key, 4)
    # conv1: torch weight (Cmid, Cin, 1, 1) -> stored as (Cin, Cmid)
    w1 = jax.random.normal(k1, (n_inputs, TEMP_CHANNEL), jnp.float32) * 0.05
    b1 = jax.random.normal(k2, (TEMP_CHANNEL,), jnp.float32) * 0.05
    # conv2: torch weight (Cout, Cmid, 3, 3) -> stored HWIO (3, 3, Cmid, Cout)
    w2 = jax.random.normal(k3, (3, 3, TEMP_CHANNEL, n_outputs), jnp.float32) * 0.05
    b2 = jax.random.normal(k4, (n_outputs,), jnp.float32) * 0.05
    return {"w1": w1, "b1": b1, "w2": w2, "b2": b2}


if __name__ == "__main__":
    key = jax.random.PRNGKey(0)
    kx, kp = jax.random.split(key)

    B, n_inputs, H, W = 2, 4, 16, 16
    n_outputs, dilation = 8, 2

    x = jax.random.normal(kx, (B, n_inputs, H, W), jnp.float32)
    params = init_params(kp, n_inputs, n_outputs)

    fwd = jax.jit(spatial_block_forward, static_argnums=(2,))
    out = jax.block_until_ready(fwd(x, params, dilation))

    ref = jax.block_until_ready(reference_forward(x, params, dilation))
    np.testing.assert_allclose(np.asarray(out), np.asarray(ref),
                               rtol=1e-3, atol=1e-3)
    assert out.shape == (B, n_outputs, H, W)
    print("KERNEL_OK")
</pallas_src>

<mosaic_0001>
module attributes {stable_mosaic.version = 11 : i64} {
  func.func @_fused_spatial_block_kernel(%arg0: i32, %arg1: i32, %arg2: memref<1x288x4xf32, #tpu.memory_space<vmem>>, %arg3: memref<4x256xf32, #tpu.memory_space<vmem>>, %arg4: memref<1x256xf32, #tpu.memory_space<vmem>>, %arg5: memref<9x256x128xf32, #tpu.memory_space<vmem>>, %arg6: memref<1x128xf32, #tpu.memory_space<vmem>>, %arg7: memref<1x128x128xf32, #tpu.memory_space<vmem>>, %arg8: memref<12x24x256xf32, #tpu.memory_space<vmem>>) attributes {dimension_semantics = [#tpu.dimension_semantics<parallel>, #tpu.dimension_semantics<parallel>], iteration_bounds = array<i64: 2, 2>, scalar_prefetch = 0 : i64, scratch_operands = 1 : i64, tpu.core_type = #tpu.core_type<tc>, window_params = [{transform_indices = @transform_0, window_bounds = array<i64: 1, 288, 4>}, {pipeline_mode = #tpu.pipeline_mode<synchronous>, transform_indices = @transform_1, window_bounds = array<i64: 4, 256>}, {pipeline_mode = #tpu.pipeline_mode<synchronous>, transform_indices = @transform_2, window_bounds = array<i64: 1, 256>}, {pipeline_mode = #tpu.pipeline_mode<synchronous>, transform_indices = @transform_3, window_bounds = array<i64: 9, 256, 128>}, {pipeline_mode = #tpu.pipeline_mode<synchronous>, transform_indices = @transform_4, window_bounds = array<i64: 1, 128>}, {transform_indices = @transform_5, window_bounds = array<i64: 1, 128, 128>}]} {
    %c0 = arith.constant 0 : index
    %c0_0 = arith.constant 0 : index
    %c0_1 = arith.constant 0 : index
    %0 = vector.load %arg2[%c0, %c0_0, %c0_1] : memref<1x288x4xf32, #tpu.memory_space<vmem>>, vector<1x288x4xf32>
    %1 = vector.shape_cast %0 : vector<1x288x4xf32> to vector<288x4xf32>
    %c0_2 = arith.constant 0 : index
    %c0_3 = arith.constant 0 : index
    %2 = vector.load %arg3[%c0_2, %c0_3] : memref<4x256xf32, #tpu.memory_space<vmem>>, vector<4x256xf32>
    %cst = arith.constant dense<0.000000e+00> : vector<288x256xf32>
    %3 = tpu.matmul %1, %2, %cst {dimension_numbers = #tpu.dot_dimension_numbers<[1], [0], [0], [1], [0, 0, 1, 1], [], []>} : vector<288x4xf32>, vector<4x256xf32>, vector<288x256xf32> -> vector<288x256xf32>
    %c0_4 = arith.constant 0 : index
    %c0_5 = arith.constant 0 : index
    %4 = vector.load %arg4[%c0_4, %c0_5] : memref<1x256xf32, #tpu.memory_space<vmem>>, vector<1x256xf32>
    %5 = vector.broadcast %4 : vector<1x256xf32> to vector<288x256xf32>
    %6 = arith.addf %3, %5 : vector<288x256xf32>
    %cst_6 = arith.constant 0.000000e+00 : f32
    %7 = vector.broadcast %cst_6 : f32 to vector<288x256xf32>
    %8 = arith.maximumf %6, %7 : vector<288x256xf32>
    %9 = vector.shape_cast %8 : vector<288x256xf32> to vector<12x24x256xf32>
    %c0_7 = arith.constant 0 : index
    %c0_8 = arith.constant 0 : index
    %c0_9 = arith.constant 0 : index
    %10 = vector.load %arg8[%c0_7, %c0_8, %c0_9] : memref<12x24x256xf32, #tpu.memory_space<vmem>>, vector<12x24x256xf32>
    tpu.vector_store %arg8[%c0_7, %c0_8, %c0_9], %9 {strides = array<i32>} : memref<12x24x256xf32, #tpu.memory_space<vmem>>, vector<12x24x256xf32>,
    %cst_10 = arith.constant 0.000000e+00 : f32
    %11 = vector.broadcast %cst_10 : f32 to vector<12x2x256xf32>
    %c0_11 = arith.constant 0 : index
    %c0_12 = arith.constant 0 : index
    %c0_13 = arith.constant 0 : index
    %12 = vector.load %arg8[%c0_11, %c0_12, %c0_13] : memref<12x24x256xf32, #tpu.memory_space<vmem>>, vector<12x2x256xf32>
    tpu.vector_store %arg8[%c0_11, %c0_12, %c0_13], %11 {strides = array<i32>} : memref<12x24x256xf32, #tpu.memory_space<vmem>>, vector<12x2x256xf32>,
    %cst_14 = arith.constant 0.000000e+00 : f32
    %13 = vector.broadcast %cst_14 : f32 to vector<12x6x256xf32>
    %c0_15 = arith.constant 0 : index
    %c18 = arith.constant 18 : index
    %c0_16 = arith.constant 0 : index
    %14 = vector.load %arg8[%c0_15, %c18, %c0_16] : memref<12x24x256xf32, #tpu.memory_space<vmem>>, vector<12x6x256xf32>
    tpu.vector_store %arg8[%c0_15, %c18, %c0_16], %13 {strides = array<i32>} : memref<12x24x256xf32, #tpu.memory_space<vmem>>, vector<12x6x256xf32>,
    %c0_i32 = arith.constant 0 : i32
    %15 = arith.cmpi eq, %arg1, %c0_i32 : i32
    %16 = arith.extui %15 : i1 to i32
    %c0_i32_17 = arith.constant 0 : i32
    %17 = arith.cmpi ne, %16, %c0_i32_17 : i32
    scf.if %17 {
      %cst_80 = arith.constant 0.000000e+00 : f32
      %83 = vector.broadcast %cst_80 : f32 to vector<2x24x256xf32>
      %c0_81 = arith.constant 0 : index
      %c0_82 = arith.constant 0 : index
      %c0_83 = arith.constant 0 : index
      %84 = vector.load %arg8[%c0_81, %c0_82, %c0_83] : memref<12x24x256xf32, #tpu.memory_space<vmem>>, vector<2x24x256xf32>
      tpu.vector_store %arg8[%c0_81, %c0_82, %c0_83], %83 {strides = array<i32>} : memref<12x24x256xf32, #tpu.memory_space<vmem>>, vector<2x24x256xf32>,
    } else {
    }
    %c1_i32 = arith.constant 1 : i32
    %18 = arith.cmpi eq, %arg1, %c1_i32 : i32
    %19 = arith.extui %18 : i1 to i32
    %c0_i32_18 = arith.constant 0 : i32
    %20 = arith.cmpi ne, %19, %c0_i32_18 : i32
    scf.if %20 {
      %cst_80 = arith.constant 0.000000e+00 : f32
      %83 = vector.broadcast %cst_80 : f32 to vector<2x24x256xf32>
      %c10 = arith.constant 10 : index
      %c0_81 = arith.constant 0 : index
      %c0_82 = arith.constant 0 : index
      %84 = vector.load %arg8[%c10, %c0_81, %c0_82] : memref<12x24x256xf32, #tpu.memory_space<vmem>>, vector<2x24x256xf32>
      tpu.vector_store %arg8[%c10, %c0_81, %c0_82], %83 {strides = array<i32>} : memref<12x24x256xf32, #tpu.memory_space<vmem>>, vector<2x24x256xf32>,
    } else {
    }
    %c0_19 = arith.constant 0 : index
    %c0_20 = arith.constant 0 : index
    %21 = vector.load %arg6[%c0_19, %c0_20] : memref<1x128xf32, #tpu.memory_space<vmem>>, vector<1x128xf32>
    %22 = vector.shape_cast %21 : vector<1x128xf32> to vector<1x128xf32>
    %23 = vector.broadcast %22 : vector<1x128xf32> to vector<128x128xf32>
    %c0_21 = arith.constant 0 : index
    %c0_22 = arith.constant 0 : index
    %c0_23 = arith.constant 0 : index
    %24 = vector.load %arg8[%c0_21, %c0_22, %c0_23] : memref<12x24x256xf32, #tpu.memory_space<vmem>>, vector<8x16x256xf32>
    %25 = vector.shape_cast %24 : vector<8x16x256xf32> to vector<128x256xf32>
    %c0_24 = arith.constant 0 : index
    %c0_25 = arith.constant 0 : index
    %c0_26 = arith.constant 0 : index
    %26 = vector.load %arg5[%c0_24, %c0_25, %c0_26] : memref<9x256x128xf32, #tpu.memory_space<vmem>>, vector<1x256x128xf32>
    %27 = vector.shape_cast %26 : vector<1x256x128xf32> to vector<256x128xf32>
    %cst_27 = arith.constant dense<0.000000e+00> : vector<128x128xf32>
    %28 = tpu.matmul %25, %27, %cst_27 {dimension_numbers = #tpu.dot_dimension_numbers<[1], [0], [0], [1], [0, 0, 1, 1], [], []>} : vector<128x256xf32>, vector<256x128xf32>, vector<128x128xf32> -> vector<128x128xf32>
    %29 = arith.addf %23, %28 : vector<128x128xf32>
    %c0_28 = arith.constant 0 : index
    %c2 = arith.constant 2 : index
    %c0_29 = arith.constant 0 : index
    %30 = vector.load %arg8[%c0_28, %c2, %c0_29] : memref<12x24x256xf32, #tpu.memory_space<vmem>>, vector<8x16x256xf32>
    %31 = vector.shape_cast %30 : vector<8x16x256xf32> to vector<128x256xf32>
    %c1 = arith.constant 1 : index
    %c0_30 = arith.constant 0 : index
    %c0_31 = arith.constant 0 : index
    %32 = vector.load %arg5[%c1, %c0_30, %c0_31] : memref<9x256x128xf32, #tpu.memory_space<vmem>>, vector<1x256x128xf32>
    %33 = vector.shape_cast %32 : vector<1x256x128xf32> to vector<256x128xf32>
    %cst_32 = arith.constant dense<0.000000e+00> : vector<128x128xf32>
    %34 = tpu.matmul %31, %33, %cst_32 {dimension_numbers = #tpu.dot_dimension_numbers<[1], [0], [0], [1], [0, 0, 1, 1], [], []>} : vector<128x256xf32>, vector<256x128xf32>, vector<128x128xf32> -> vector<128x128xf32>
    %35 = arith.addf %29, %34 : vector<128x128xf32>
    %c0_33 = arith.constant 0 : index
    %c4 = arith.constant 4 : index
    %c0_34 = arith.constant 0 : index
    %36 = vector.load %arg8[%c0_33, %c4, %c0_34] : memref<12x24x256xf32, #tpu.memory_space<vmem>>, vector<8x16x256xf32>
    %37 = vector.shape_cast %36 : vector<8x16x256xf32> to vector<128x256xf32>
    %c2_35 = arith.constant 2 : index
    %c0_36 = arith.constant 0 : index
    %c0_37 = arith.constant 0 : index
    %38 = vector.load %arg5[%c2_35, %c0_36, %c0_37] : memref<9x256x128xf32, #tpu.memory_space<vmem>>, vector<1x256x128xf32>
    %39 = vector.shape_cast %38 : vector<1x256x128xf32> to vector<256x128xf32>
    %cst_38 = arith.constant dense<0.000000e+00> : vector<128x128xf32>
    %40 = tpu.matmul %37, %39, %cst_38 {dimension_numbers = #tpu.dot_dimension_numbers<[1], [0], [0], [1], [0, 0, 1, 1], [], []>} : vector<128x256xf32>, vector<256x128xf32>, vector<128x128xf32> -> vector<128x128xf32>
    %41 = arith.addf %35, %40 : vector<128x128xf32>
    %c2_39 = arith.constant 2 : index
    %c0_40 = arith.constant 0 : index
    %c0_41 = arith.constant 0 : index
    %42 = vector.load %arg8[%c2_39, %c0_40, %c0_41] : memref<12x24x256xf32, #tpu.memory_space<vmem>>, vector<8x16x256xf32>
    %43 = vector.shape_cast %42 : vector<8x16x256xf32> to vector<128x256xf32>
    %c3 = arith.constant 3 : index
    %c0_42 = arith.constant 0 : index
    %c0_43 = arith.constant 0 : index
    %44 = vector.load %arg5[%c3, %c0_42, %c0_43] : memref<9x256x128xf32, #tpu.memory_space<vmem>>, vector<1x256x128xf32>
    %45 = vector.shape_cast %44 : vector<1x256x128xf32> to vector<256x128xf32>
    %cst_44 = arith.constant dense<0.000000e+00> : vector<128x128xf32>
    %46 = tpu.matmul %43, %45, %cst_44 {dimension_numbers = #tpu.dot_dimension_numbers<[1], [0], [0], [1], [0, 0, 1, 1], [], []>} : vector<128x256xf32>, vector<256x128xf32>, vector<128x128xf32> -> vector<128x128xf32>
    %47 = arith.addf %41, %46 : vector<128x128xf32>
    %c2_45 = arith.constant 2 : index
    %c2_46 = arith.constant 2 : index
    %c0_47 = arith.constant 0 : index
    %48 = vector.load %arg8[%c2_45, %c2_46, %c0_47] : memref<12x24x256xf32, #tpu.memory_space<vmem>>, vector<8x16x256xf32>
    %49 = vector.shape_cast %48 : vector<8x16x256xf32> to vector<128x256xf32>
    %c4_48 = arith.constant 4 : index
    %c0_49 = arith.constant 0 : index
    %c0_50 = arith.constant 0 : index
    %50 = vector.load %arg5[%c4_48, %c0_49, %c0_50] : memref<9x256x128xf32, #tpu.memory_space<vmem>>, vector<1x256x128xf32>
    %51 = vector.shape_cast %50 : vector<1x256x128xf32> to vector<256x128xf32>
    %cst_51 = arith.constant dense<0.000000e+00> : vector<128x128xf32>
    %52 = tpu.matmul %49, %51, %cst_51 {dimension_numbers = #tpu.dot_dimension_numbers<[1], [0], [0], [1], [0, 0, 1, 1], [], []>} : vector<128x256xf32>, vector<256x128xf32>, vector<128x128xf32> -> vector<128x128xf32>
    %53 = arith.addf %47, %52 : vector<128x128xf32>
    %c2_52 = arith.constant 2 : index
    %c4_53 = arith.constant 4 : index
    %c0_54 = arith.constant 0 : index
    %54 = vector.load %arg8[%c2_52, %c4_53, %c0_54] : memref<12x24x256xf32, #tpu.memory_space<vmem>>, vector<8x16x256xf32>
    %55 = vector.shape_cast %54 : vector<8x16x256xf32> to vector<128x256xf32>
    %c5 = arith.constant 5 : index
    %c0_55 = arith.constant 0 : index
    %c0_56 = arith.constant 0 : index
    %56 = vector.load %arg5[%c5, %c0_55, %c0_56] : memref<9x256x128xf32, #tpu.memory_space<vmem>>, vector<1x256x128xf32>
    %57 = vector.shape_cast %56 : vector<1x256x128xf32> to vector<256x128xf32>
    %cst_57 = arith.constant dense<0.000000e+00> : vector<128x128xf32>
    %58 = tpu.matmul %55, %57, %cst_57 {dimension_numbers = #tpu.dot_dimension_numbers<[1], [0], [0], [1], [0, 0, 1, 1], [], []>} : vector<128x256xf32>, vector<256x128xf32>, vector<128x128xf32> -> vector<128x128xf32>
    %59 = arith.addf %53, %58 : vector<128x128xf32>
    %c4_58 = arith.constant 4 : index
    %c0_59 = arith.constant 0 : index
    %c0_60 = arith.constant 0 : index
    %60 = vector.load %arg8[%c4_58, %c0_59, %c0_60] : memref<12x24x256xf32, #tpu.memory_space<vmem>>, vector<8x16x256xf32>
    %61 = vector.shape_cast %60 : vector<8x16x256xf32> to vector<128x256xf32>
    %c6 = arith.constant 6 : index
    %c0_61 = arith.constant 0 : index
    %c0_62 = arith.constant 0 : index
    %62 = vector.load %arg5[%c6, %c0_61, %c0_62] : memref<9x256x128xf32, #tpu.memory_space<vmem>>, vector<1x256x128xf32>
    %63 = vector.shape_cast %62 : vector<1x256x128xf32> to vector<256x128xf32>
    %cst_63 = arith.constant dense<0.000000e+00> : vector<128x128xf32>
    %64 = tpu.matmul %61, %63, %cst_63 {dimension_numbers = #tpu.dot_dimension_numbers<[1], [0], [0], [1], [0, 0, 1, 1], [], []>} : vector<128x256xf32>, vector<256x128xf32>, vector<128x128xf32> -> vector<128x128xf32>
    %65 = arith.addf %59, %64 : vector<128x128xf32>
    %c4_64 = arith.constant 4 : index
    %c2_65 = arith.constant 2 : index
    %c0_66 = arith.constant 0 : index
    %66 = vector.load %arg8[%c4_64, %c2_65, %c0_66] : memref<12x24x256xf32, #tpu.memory_space<vmem>>, vector<8x16x256xf32>
    %67 = vector.shape_cast %66 : vector<8x16x256xf32> to vector<128x256xf32>
    %c7 = arith.constant 7 : index
    %c0_67 = arith.constant 0 : index
    %c0_68 = arith.constant 0 : index
    %68 = vector.load %arg5[%c7, %c0_67, %c0_68] : memref<9x256x128xf32, #tpu.memory_space<vmem>>, vector<1x256x128xf32>
    %69 = vector.shape_cast %68 : vector<1x256x128xf32> to vector<256x128xf32>
    %cst_69 = arith.constant dense<0.000000e+00> : vector<128x128xf32>
    %70 = tpu.matmul %67, %69, %cst_69 {dimension_numbers = #tpu.dot_dimension_numbers<[1], [0], [0], [1], [0, 0, 1, 1], [], []>} : vector<128x256xf32>, vector<256x128xf32>, vector<128x128xf32> -> vector<128x128xf32>
    %71 = arith.addf %65, %70 : vector<128x128xf32>
    %c4_70 = arith.constant 4 : index
    %c4_71 = arith.constant 4 : index
    %c0_72 = arith.constant 0 : index
    %72 = vector.load %arg8[%c4_70, %c4_71, %c0_72] : memref<12x24x256xf32, #tpu.memory_space<vmem>>, vector<8x16x256xf32>
    %73 = vector.shape_cast %72 : vector<8x16x256xf32> to vector<128x256xf32>
    %c8 = arith.constant 8 : index
    %c0_73 = arith.constant 0 : index
    %c0_74 = arith.constant 0 : index
    %74 = vector.load %arg5[%c8, %c0_73, %c0_74] : memref<9x256x128xf32, #tpu.memory_space<vmem>>, vector<1x256x128xf32>
    %75 = vector.shape_cast %74 : vector<1x256x128xf32> to vector<256x128xf32>
    %cst_75 = arith.constant dense<0.000000e+00> : vector<128x128xf32>
    %76 = tpu.matmul %73, %75, %cst_75 {dimension_numbers = #tpu.dot_dimension_numbers<[1], [0], [0], [1], [0, 0, 1, 1], [], []>} : vector<128x256xf32>, vector<256x128xf32>, vector<128x128xf32> -> vector<128x128xf32>
    %77 = arith.addf %71, %76 : vector<128x128xf32>
    %cst_76 = arith.constant 0.000000e+00 : f32
    %78 = vector.broadcast %cst_76 : f32 to vector<128x128xf32>
    %79 = arith.maximumf %77, %78 : vector<128x128xf32>
    %c0_77 = arith.constant 0 : index
    %c0_78 = arith.constant 0 : index
    %c0_79 = arith.constant 0 : index
    %80 = vector.load %arg7[%c0_77, %c0_78, %c0_79] : memref<1x128x128xf32, #tpu.memory_space<vmem>>, vector<1x128x128xf32>
    %81 = vector.shape_cast %80 : vector<1x128x128xf32> to vector<128x128xf32>
    %82 = vector.shape_cast %79 : vector<128x128xf32> to vector<1x128x128xf32>
    tpu.vector_store %arg7[%c0_77, %c0_78, %c0_79], %82 {strides = array<i32>} : memref<1x128x128xf32, #tpu.memory_space<vmem>>, vector<1x128x128xf32>,
    return
  }
  func.func @transform_0(%arg0: i32, %arg1: i32) -> (i32, i32, i32) {
    %c2_i32 = arith.constant 2 : i32
    %0 = arith.muli %arg0, %c2_i32 : i32
    %1 = arith.addi %0, %arg1 : i32
    %c0_i32 = arith.constant 0 : i32
    %c0_i32_0 = arith.constant 0 : i32
    %c0_i32_1 = arith.constant 0 : i32
    return %1, %c0_i32, %c0_i32_0 : i32, i32, i32
  }
  func.func @transform_1(%arg0: i32, %arg1: i32) -> (i32, i32) {
    %c0_i32 = arith.constant 0 : i32
    %c0_i32_0 = arith.constant 0 : i32
    %c0_i32_1 = arith.constant 0 : i32
    return %c0_i32, %c0_i32_0 : i32, i32
  }
  func.func @transform_2(%arg0: i32, %arg1: i32) -> (i32, i32) {
    %c0_i32 = arith.constant 0 : i32
    %c0_i32_0 = arith.constant 0 : i32
    %c0_i32_1 = arith.constant 0 : i32
    return %c0_i32, %c0_i32_0 : i32, i32
  }
  func.func @transform_3(%arg0: i32, %arg1: i32) -> (i32, i32, i32) {
    %c0_i32 = arith.constant 0 : i32
    %c0_i32_0 = arith.constant 0 : i32
    %c0_i32_1 = arith.constant 0 : i32
    %c0_i32_2 = arith.constant 0 : i32
    return %c0_i32, %c0_i32_0, %c0_i32_1 : i32, i32, i32
  }
  func.func @transform_4(%arg0: i32, %arg1: i32) -> (i32, i32) {
    %c0_i32 = arith.constant 0 : i32
    %c0_i32_0 = arith.constant 0 : i32
    %c0_i32_1 = arith.constant 0 : i32
    return %c0_i32, %c0_i32_0 : i32, i32
  }
  func.func @transform_5(%arg0: i32, %arg1: i32) -> (i32, i32, i32) {
    %c2_i32 = arith.constant 2 : i32
    %0 = arith.muli %arg0, %c2_i32 : i32
    %1 = arith.addi %0, %arg1 : i32
    %c0_i32 = arith.constant 0 : i32
    %c0_i32_0 = arith.constant 0 : i32
    %c0_i32_1 = arith.constant 0 : i32
    return %1, %c0_i32, %c0_i32_0 : i32, i32, i32
  }
}

</mosaic_0001>

<llo_original>
// kernel: spatial_block_forward.1
$region0: #{spatial_block_forward.1}
  #allocation0 [shape = 'u32[]', space=smem, size = 0x4, offset = 0x4, fixed_abs, tag = 'smem constant byte address 0x4 - core index']
  #allocation1 [shape = 'u32[144,128]{1,0:T(1,128)}', space=vmem, size = 0x12000, scoped, tag = 'internal scratch']
  #allocation2 [shape = 'f32[12,24,256]{2,1,0:T(8,128)}', space=vmem, size = 0x48000, scoped, tag = 'scratch operand']
  %s0 = inlined_call_operand.vmem [shape: f32[4,288,4], index: 0, kind: input, shape index: {}]
  %s1 = inlined_call_operand.vmem [shape: f32[4,256], index: 1, kind: input, shape index: {}]
  %s2 = inlined_call_operand.vmem [shape: f32[1,256], index: 2, kind: input, shape index: {}]
  %s3 = inlined_call_operand.vmem [shape: f32[9,256,128], index: 3, kind: input, shape index: {}]
  %s4 = inlined_call_operand.vmem [shape: f32[1,128], index: 4, kind: input, shape index: {}]
  %s5 = inlined_call_operand.vmem [shape: f32[4,128,128], index: 5, kind: output, shape index: {}]
  %s6 = sld [smem:[#allocation0]]
  $region61: #{spatial_block_forward.1} parent=0
    _
  %s8 = ssub.s32 1, %s6
  %s9 = scalar_select 0, %s8, %s6
  loop: start=0, step=1, limit=6
  $region2: #{spatial_block_forward.1} parent=0 // loop_pre_header
    _
  $region3: #{spatial_block_forward.1} parent=0 // loop_header
    %s11 = sphi 0, %s15
    %p12 = scmp.ge.s32.totalorder %s11, 6
    %s18 = sphi 0, %s30
    %s19 = sphi 0, %s26
    %s20 = sphi 0, %s18
    %s21 = sphi 0, %s19
    %s22 = sphi 0, %s20
    %s23 = sphi 0, %s21
    %s37 = sphi 0, %s39
    %s40 = sphi 0, %s37
    %s41 = sphi 0, %s40
    %s57 = sphi 0, %s41
    %s61 = sphi 0, %s61
    %s63 = sphi 0, %s61
    %s64 = sphi 0, %s63
    %s78 = sphi 0, %s64
    %s82 = sphi 0, %s82
    %s84 = sphi 0, %s82
    %s85 = sphi 0, %s84
    %s99 = sphi 0, %s85
    %s103 = sphi 0, %s103
    %s105 = sphi 0, %s103
    %s106 = sphi 0, %s105
    %s120 = sphi 0, %s106
    %s124 = sphi 0, %s124
    %s126 = sphi 0, %s124
    %s127 = sphi 0, %s126
    %s141 = sphi 0, %s127
    %s151 = sphi 0, %s153
    %s154 = sphi 0, %s151
    %s155 = sphi 0, %s154
    %s171 = sphi 0, %s155
  $region4: #{spatial_block_forward.1} parent=0 // loop_header_branch
    %14 = sbr.rel (%p12) target = $region8
  $region5: #{spatial_block_forward.1} parent=0 // loop_body
    %s16 = ssub.s32 %s11, 1
    %s17 = ssub.s32 %s11, 2
    %s24 = sadd.s32 1, %s19
    %p25 = scmp.ge.s32.totalorder %s24, 2
    %s26 = scalar_select %p25, 0, %s24
    %s27 = sadd.s32 1, %s18
    %s28 = scalar_select %p25, %s27, %s18
    %p29 = scmp.ge.s32.totalorder %s28, 2
    %s30 = scalar_select %p29, 0, %s28
    %s31 = smul.u32 %s18, 2
    %s32 = sadd.s32 %s31, %s19
    %s33 = smul.u32 %s30, 2
    %s34 = sadd.s32 %s33, %s26
    %s35 = ssub.s32 %s32, %s34
    %p36 = scmp.eq.s32.totalorder %s35, 0
    %s38 = sadd.s32 %s37, 1
    %s39 = scalar_select %p36, %s37, %s38
    %p42 = pneg %p36
    %p43 = scmp.eq.s32.totalorder %s11, 3
    %p44 = por %p42, %p43
    %p45 = scmp.ne.s32.totalorder %s37, %s40
    %p46 = scmp.eq.s32.totalorder %s11, 0
    %p47 = por %p45, %p46
    %p48 = scmp.ne.s32.totalorder %s37, %s40
    %p49 = scmp.eq.s32.totalorder %s16, 3
    %p50 = por %p48, %p49
    %p51 = scmp.ne.s32.totalorder %s40, %s41
    %p52 = scmp.eq.s32.totalorder %s16, 0
    %p53 = por %p51, %p52
    %p54 = scmp.ne.s32.totalorder %s40, %s41
    %p55 = scmp.eq.s32.totalorder %s17, 3
    %p56 = por %p54, %p55
    %p58 = scmp.ne.s32.totalorder %s41, %s57
    %p59 = scmp.eq.s32.totalorder %s17, 0
    %p60 = por %p58, %p59
    %s62 = sadd.s32 %s61, 1
    %p65 = scmp.eq.s32.totalorder %s11, 3
    %p66 = scmp.ne.s32.totalorder %s61, %s63
    %p67 = scmp.eq.s32.totalorder %s11, 0
    %p68 = por %p66, %p67
    %p69 = scmp.ne.s32.totalorder %s61, %s63
    %p70 = scmp.eq.s32.totalorder %s16, 3
    %p71 = por %p69, %p70
    %p72 = scmp.ne.s32.totalorder %s63, %s64
    %p73 = scmp.eq.s32.totalorder %s16, 0
    %p74 = por %p72, %p73
    %p75 = scmp.ne.s32.totalorder %s63, %s64
    %p76 = scmp.eq.s32.totalorder %s17, 3
    %p77 = por %p75, %p76
    %p79 = scmp.ne.s32.totalorder %s64, %s78
    %p80 = scmp.eq.s32.totalorder %s17, 0
    %p81 = por %p79, %p80
    %s83 = sadd.s32 %s82, 1
    %p86 = scmp.eq.s32.totalorder %s11, 3
    %p87 = scmp.ne.s32.totalorder %s82, %s84
    %p88 = scmp.eq.s32.totalorder %s11, 0
    %p89 = por %p87, %p88
    %p90 = scmp.ne.s32.totalorder %s82, %s84
    %p91 = scmp.eq.s32.totalorder %s16, 3
    %p92 = por %p90, %p91
    %p93 = scmp.ne.s32.totalorder %s84, %s85
    %p94 = scmp.eq.s32.totalorder %s16, 0
    %p95 = por %p93, %p94
    %p96 = scmp.ne.s32.totalorder %s84, %s85
    %p97 = scmp.eq.s32.totalorder %s17, 3
    %p98 = por %p96, %p97
    %p100 = scmp.ne.s32.totalorder %s85, %s99
    %p101 = scmp.eq.s32.totalorder %s17, 0
    %p102 = por %p100, %p101
    %s104 = sadd.s32 %s103, 1
    %p107 = scmp.eq.s32.totalorder %s11, 3
    %p108 = scmp.ne.s32.totalorder %s103, %s105
    %p109 = scmp.eq.s32.totalorder %s11, 0
    %p110 = por %p108, %p109
    %p111 = scmp.ne.s32.totalorder %s103, %s105
    %p112 = scmp.eq.s32.totalorder %s16, 3
    %p113 = por %p111, %p112
    %p114 = scmp.ne.s32.totalorder %s105, %s106
    %p115 = scmp.eq.s32.totalorder %s16, 0
    %p116 = por %p114, %p115
    %p117 = scmp.ne.s32.totalorder %s105, %s106
    %p118 = scmp.eq.s32.totalorder %s17, 3
    %p119 = por %p117, %p118
    %p121 = scmp.ne.s32.totalorder %s106, %s120
    %p122 = scmp.eq.s32.totalorder %s17, 0
    %p123 = por %p121, %p122
    %s125 = sadd.s32 %s124, 1
    %p128 = scmp.eq.s32.totalorder %s11, 3
    %p129 = scmp.ne.s32.totalorder %s124, %s126
    %p130 = scmp.eq.s32.totalorder %s11, 0
    %p131 = por %p129, %p130
    %p132 = scmp.ne.s32.totalorder %s124, %s126
    %p133 = scmp.eq.s32.totalorder %s16, 3
    %p134 = por %p132, %p133
    %p135 = scmp.ne.s32.totalorder %s126, %s127
    %p136 = scmp.eq.s32.totalorder %s16, 0
    %p137 = por %p135, %p136
    %p138 = scmp.ne.s32.totalorder %s126, %s127
    %p139 = scmp.eq.s32.totalorder %s17, 3
    %p140 = por %p138, %p139
    %p142 = scmp.ne.s32.totalorder %s127, %s141
    %p143 = scmp.eq.s32.totalorder %s17, 0
    %p144 = por %p142, %p143
    %s145 = smul.u32 %s18, 2
    %s146 = sadd.s32 %s145, %s19
    %s147 = smul.u32 %s30, 2
    %s148 = sadd.s32 %s147, %s26
    %s149 = ssub.s32 %s146, %s148
    %p150 = scmp.eq.s32.totalorder %s149, 0
    %s152 = sadd.s32 %s151, 1
    %s153 = scalar_select %p150, %s151, %s152
    %p156 = pneg %p150
    %p157 = scmp.eq.s32.totalorder %s11, 3
    %p158 = por %p156, %p157
    %p159 = scmp.ne.s32.totalorder %s151, %s154
    %p160 = scmp.eq.s32.totalorder %s11, 0
    %p161 = por %p159, %p160
    %p162 = scmp.ne.s32.totalorder %s151, %s154
    %p163 = scmp.eq.s32.totalorder %s16, 3
    %p164 = por %p162, %p163
    %p165 = scmp.ne.s32.totalorder %s154, %s155
    %p166 = scmp.eq.s32.totalorder %s16, 0
    %p167 = por %p165, %p166
    %p168 = scmp.ne.s32.totalorder %s154, %s155
    %p169 = scmp.eq.s32.totalorder %s17, 3
    %p170 = por %p168, %p169
    %p172 = scmp.ne.s32.totalorder %s155, %s171
    %p173 = scmp.eq.s32.totalorder %s17, 0
    %p174 = por %p172, %p173
    %p175 = scmp.le.s32.totalorder 1, %s11
    %p176 = scmp.lt.s32.totalorder %s11, 5
    %p177 = pnand %p175, %p176
    %p178 = pneg %p177
    // Predicated region
    $region9: #{spatial_block_forward.1} parent=5 // pred_check
      _
    $region10: #{spatial_block_forward.1} parent=5 // pred_check_branch
      %180 = sbr.rel (%p177) target = $region12
    $region11: #{spatial_block_forward.1} parent=5 // pred_region
      %s181 = ssub.s32 %s11, 1
      // Predicated region
      $region13: #{spatial_block_forward.1} parent=11 // pred_check
        %p182 = pneg %p74
      $region14: #{spatial_block_forward.1} parent=11 // pred_check_branch
        %184 = sbr.rel (%p182) target = $region16
      $region15: #{spatial_block_forward.1} parent=11 // pred_region
        _
      $region16: #{spatial_block_forward.1} parent=11 // pred_fallthru
        _
      // Predicated region
      $region17: #{spatial_block_forward.1} parent=11 // pred_check
        %p185 = pneg %p95
      $region18: #{spatial_block_forward.1} parent=11 // pred_check_branch
        %187 = sbr.rel (%p185) target = $region20
      $region19: #{spatial_block_forward.1} parent=11 // pred_region
        _
      $region20: #{spatial_block_forward.1} parent=11 // pred_fallthru
        _
      // Predicated region
      $region21: #{spatial_block_forward.1} parent=11 // pred_check
        %p188 = pneg %p116
      $region22: #{spatial_block_forward.1} parent=11 // pred_check_branch
        %190 = sbr.rel (%p188) target = $region24
      $region23: #{spatial_block_forward.1} parent=11 // pred_region
        _
      $region24: #{spatial_block_forward.1} parent=11 // pred_fallthru
        _
      // Predicated region
      $region25: #{spatial_block_forward.1} parent=11 // pred_check
        %p191 = pneg %p137
      $region26: #{spatial_block_forward.1} parent=11 // pred_check_branch
        %193 = sbr.rel (%p191) target = $region28
      $region27: #{spatial_block_forward.1} parent=11 // pred_region
        _
      $region28: #{spatial_block_forward.1} parent=11 // pred_fallthru
        _
    $region12: #{spatial_block_forward.1} parent=5 // pred_fallthru
      _
    %p194 = scmp.lt.s32.totalorder %s11, 4
    // Predicated region
    $region29: #{spatial_block_forward.1} parent=5 // pred_check
      %p195 = pneg %p194
    $region30: #{spatial_block_forward.1} parent=5 // pred_check_branch
      %197 = sbr.rel (%p195) target = $region32
    $region31: #{spatial_block_forward.1} parent=5 // pred_region
      // Predicated region
      $region33: #{spatial_block_forward.1} parent=31 // pred_check
        %p198 = pneg %p47
      $region34: #{spatial_block_forward.1} parent=31 // pred_check_branch
        %200 = sbr.rel (%p198) target = $region36
      $region35: #{spatial_block_forward.1} parent=31 // pred_region
        %s201 = smul.u32 %s18, 2
        %s202 = sadd.s32 %s201, %s19
        %p203 = scmp.lt.s32.totalorder %s202, 3
        %s204 = scalar_select %p203, %s202, 3
        %s205 = smul.addr %s204, 36
        %s206 = smul.addr %s205, 8
        %s207 = scalar_lea.vmem %s0, %s206
        %s208 = smul.u32 %s18, 2
        %s209 = sadd.s32 %s208, %s19
      $region36: #{spatial_block_forward.1} parent=31 // pred_fallthru
        _
    $region32: #{spatial_block_forward.1} parent=5 // pred_fallthru
      _
    %p210 = scmp.le.s32.totalorder 1, %s11
    %p211 = scmp.lt.s32.totalorder %s11, 5
    %p212 = pnand %p210, %p211
    %p213 = pneg %p212
    // Predicated region
    $region37: #{spatial_block_forward.1} parent=5 // pred_check
      _
    $region38: #{spatial_block_forward.1} parent=5 // pred_check_branch
      %215 = sbr.rel (%p212) target = $region40
    $region39: #{spatial_block_forward.1} parent=5 // pred_region
      %s216 = ssub.s32 %s11, 1
      %s217 = smul.u32 %s20, 2
      %s218 = sadd.s32 %s217, %s21
      %p219 = scmp.lt.s32.totalorder %s218, 3
      %s220 = scalar_select %p219, %s218, 3
      %s221 = smul.addr %s220, 36
      %s222 = smul.addr %s221, 8
      %s223 = scalar_lea.vmem %s0, %s222
      %p224 = pneg %p53
      %p225 = pneg %p50
      %p226 = pneg %p74
      %p227 = pneg %p71
      %p228 = pneg %p95
      %p229 = pneg %p92
      %p230 = pneg %p116
      %p231 = pneg %p113
      %p232 = pneg %p137
      %p233 = pneg %p134
      %p234 = pneg %p167
      %p235 = pneg %p164
      %s236 = smul.u32 %s20, 2
      %s237 = sadd.s32 %s236, %s21
      %p238 = scmp.lt.s32.totalorder %s237, 3
      %s239 = scalar_select %p238, %s237, 3
      %s240 = smul.addr %s239, 16
      %s241 = smul.addr %s240, 8
      %s242 = scalar_lea.vmem %s5, %s241
      %s243 = smul.u32 %s20, 2
      %s244 = sadd.s32 %s243, %s21
      %p245 = scmp.lt.s32.totalorder %s244, 3
      %s246 = scalar_select %p245, %s244, 3
      %s247 = smul.addr %s246, 36
      %s248 = smul.addr %s247, 8
      %s249 = scalar_lea.vmem %s0, %s248
      %s250 = smul.u32 %s20, 2
      %s251 = sadd.s32 %s250, %s21
      %s252 = smul.u32 %s20, 2
      %s253 = sadd.s32 %s252, %s21
      %p254 = scmp.lt.s32.totalorder %s253, 3
      %s255 = scalar_select %p254, %s253, 3
      %s256 = smul.addr %s255, 16
      %s257 = smul.addr %s256, 8
      %s258 = scalar_lea.vmem %s5, %s257
      %s259 = smul.u32 %s20, 2
      %s260 = sadd.s32 %s259, %s21
      %v261 = vld [vmem:[%s249] sm:$0xff]
      %v262 = vld [vmem:[%s249 + $0x8] sm:$0xff]
      %v263 = vld [vmem:[%s249 + $0x10] sm:$0xff]
      %v264 = vld [vmem:[%s249 + $0x18] sm:$0xff]
      %v265 = vld [vmem:[%s249 + $0x20] sm:$0xff]
      %v266 = vld [vmem:[%s249 + $0x28] sm:$0xff]
      %v267 = vld [vmem:[%s249 + $0x30] sm:$0xff]
      %v268 = vld [vmem:[%s249 + $0x38] sm:$0xff]
      %v269 = vld [vmem:[%s249 + $0x40] sm:$0xff]
      %v270 = vld [vmem:[%s249 + $0x48] sm:$0xff]
      %v271 = vld [vmem:[%s249 + $0x50] sm:$0xff]
      %v272 = vld [vmem:[%s249 + $0x58] sm:$0xff]
      %v273 = vld [vmem:[%s249 + $0x60] sm:$0xff]
      %v274 = vld [vmem:[%s249 + $0x68] sm:$0xff]
      %v275 = vld [vmem:[%s249 + $0x70] sm:$0xff]
      %v276 = vld [vmem:[%s249 + $0x78] sm:$0xff]
      %v277 = vld [vmem:[%s249 + $0x80] sm:$0xff]
      %v278 = vld [vmem:[%s249 + $0x88] sm:$0xff]
      %v279 = vld [vmem:[%s249 + $0x90] sm:$0xff]
      %v280 = vld [vmem:[%s249 + $0x98] sm:$0xff]
      %v281 = vld [vmem:[%s249 + $0xa0] sm:$0xff]
      %v282 = vld [vmem:[%s249 + $0xa8] sm:$0xff]
      %v283 = vld [vmem:[%s249 + $0xb0] sm:$0xff]
      %v284 = vld [vmem:[%s249 + $0xb8] sm:$0xff]
      %v285 = vld [vmem:[%s249 + $0xc0] sm:$0xff]
      %v286 = vld [vmem:[%s249 + $0xc8] sm:$0xff]
      %v287 = vld [vmem:[%s249 + $0xd0] sm:$0xff]
      %v288 = vld [vmem:[%s249 + $0xd8] sm:$0xff]
      %v289 = vld [vmem:[%s249 + $0xe0] sm:$0xff]
      %v290 = vld [vmem:[%s249 + $0xe8] sm:$0xff]
      %v291 = vld [vmem:[%s249 + $0xf0] sm:$0xff]
      %v292 = vld [vmem:[%s249 + $0xf8] sm:$0xff]
      %v293 = vld [vmem:[%s249 + $0x100] sm:$0xff]
      %v294 = vld [vmem:[%s249 + $0x108] sm:$0xff]
      %v295 = vld [vmem:[%s249 + $0x110] sm:$0xff]
      %v296 = vld [vmem:[%s249 + $0x118] sm:$0xff]
      %v297 = vld [vmem:[%s1] sm:$0xff]
      %v298 = vld [vmem:[%s2] sm:$0x3]
      %v300 = vlaneseq
      %v301 = vshrl.u32 %v300, 7
      %v302 = vsub.s32 0, %v301
      %v303 = vrot.slane %v298, %v302
      %v304 = vlaneseq
      %v305 = vshrl.u32 %v304, 7
      %v306 = vsub.s32 1, %v305
      %v307 = vrot.slane %v298, %v306
      %v311 = vcombine.high %v297, %v297
      %vm312 = vcmask 31744
      %v314 = vsel %vm312, %v261, 0
      %v317 = vsel %vm312, %v262, 0
      %v320 = vsel %vm312, %v263, 0
      %v323 = vsel %vm312, %v264, 0
      %v326 = vsel %vm312, %v265, 0
      %v329 = vsel %vm312, %v266, 0
      %v332 = vsel %vm312, %v267, 0
      %v335 = vsel %vm312, %v268, 0
      %v338 = vsel %vm312, %v269, 0
      %v341 = vsel %vm312, %v270, 0
      %v344 = vsel %vm312, %v271, 0
      %v347 = vsel %vm312, %v272, 0
      %v350 = vsel %vm312, %v273, 0
      %v353 = vsel %vm312, %v274, 0
      %v356 = vsel %vm312, %v275, 0
      %v359 = vsel %vm312, %v276, 0
      %v362 = vsel %vm312, %v277, 0
      %v365 = vsel %vm312, %v278, 0
      %v368 = vsel %vm312, %v279, 0
      %v371 = vsel %vm312, %v280, 0
      %v374 = vsel %vm312, %v281, 0
      %v377 = vsel %vm312, %v282, 0
      %v380 = vsel %vm312, %v283, 0
      %v383 = vsel %vm312, %v284, 0
      %v386 = vsel %vm312, %v285, 0
      %v389 = vsel %vm312, %v286, 0
      %v392 = vsel %vm312, %v287, 0
      %v395 = vsel %vm312, %v288, 0
      %v398 = vsel %vm312, %v289, 0
      %v401 = vsel %vm312, %v290, 0
      %v404 = vsel %vm312, %v291, 0
      %v407 = vsel %vm312, %v292, 0
      %v410 = vsel %vm312, %v293, 0
      %v413 = vsel %vm312, %v294, 0
      %v416 = vsel %vm312, %v295, 0
      %v419 = vsel %vm312, %v296, 0
      %vm421 = vcmask 1043456
      %v422 = vsel %vm421, %v297, 0
      %v424 = vsel %vm421, %v311, 0
      %426 = vmatprep.subr.mxu0 %v424
      %427 = vmatpush1.msra.mxu0 %v422
      %428 = vmatprep.subr.mxu0 0.0
      %429 = vmatpush1.msra.mxu0 0.0
      %430 = vmatprep.subr.mxu0 0.0
      %431 = vmatpush1.msra.mxu0 0.0
      %432 = vmatprep.subr.mxu0 0.0
      %433 = vmatpush1.msra.mxu0 0.0
      %434 = vmatprep.subr.mxu0 0.0
      %435 = vmatpush1.msra.mxu0 0.0
      %436 = vmatprep.subr.mxu0 0.0
      %437 = vmatpush1.msra.mxu0 0.0
      %438 = vmatprep.subr.mxu0 0.0
      %439 = vmatpush1.msra.mxu0 0.0
      %440 = vmatprep.subr.mxu0 0.0
      %441 = vmatpush1.msra.mxu0 0.0
      %442 = vmatprep.subr.mxu0 0.0
      %443 = vmatpush1.msra.mxu0 0.0
      %444 = vmatprep.subr.mxu0 0.0
      %445 = vmatpush1.msra.mxu0 0.0
      %446 = vmatprep.subr.mxu0 0.0
      %447 = vmatpush1.msra.mxu0 0.0
      %448 = vmatprep.subr.mxu0 0.0
      %449 = vmatpush1.msra.mxu0 0.0
      %450 = vmatprep.subr.mxu0 0.0
      %451 = vmatpush1.msra.mxu0 0.0
      %452 = vmatprep.subr.mxu0 0.0
      %453 = vmatpush1.msra.mxu0 0.0
      %454 = vmatprep.subr.mxu0 0.0
      %455 = vmatpush1.msra.mxu0 0.0
      %456 = vmatprep.subr.mxu0 0.0
      %457 = vmatpush1.msra.mxu0 0.0
      %458 = vmatprep.subr.mxu0 0.0
      %459 = vmatpush1.msra.mxu0 0.0
      %460 = vmatprep.subr.mxu0 0.0
      %461 = vmatpush1.msra.mxu0 0.0
      %462 = vmatprep.subr.mxu0 0.0
      %463 = vmatpush1.msra.mxu0 0.0
      %464 = vmatprep.subr.mxu0 0.0
      %465 = vmatpush1.msra.mxu0 0.0
      %466 = vmatprep.subr.mxu0 0.0
      %467 = vmatpush1.msra.mxu0 0.0
      %468 = vmatprep.subr.mxu0 0.0
      %469 = vmatpush1.msra.mxu0 0.0
      %470 = vmatprep.subr.mxu0 0.0
      %471 = vmatpush1.msra.mxu0 0.0
      %472 = vmatprep.subr.mxu0 0.0
      %473 = vmatpush1.msra.mxu0 0.0
      %474 = vmatprep.subr.mxu0 0.0
      %475 = vmatpush1.msra.mxu0 0.0
      %476 = vmatprep.subr.mxu0 0.0
      %477 = vmatpush1.msra.mxu0 0.0
      %478 = vmatprep.subr.mxu0 0.0
      %479 = vmatpush1.msra.mxu0 0.0
      %480 = vmatprep.subr.mxu0 0.0
      %481 = vmatpush1.msra.mxu0 0.0
      %482 = vmatprep.subr.mxu0 0.0
      %483 = vmatpush1.msra.mxu0 0.0
      %484 = vmatprep.subr.mxu0 0.0
      %485 = vmatpush1.msra.mxu0 0.0
      %486 = vmatprep.subr.mxu0 0.0
      %487 = vmatpush1.msra.mxu0 0.0
      %488 = vmatprep.subr.mxu0 0.0
      %489 = vmatpush1.msra.mxu0 0.0
      %490 = vmatprep.mubr.f32.mxu0 0.0
      %491 = vmatmul.mubr.f32.gmra.mrb[0].mxu0 %v314
      %v492 = vpop.f32.mrb[0].mxu0
      %v493 = vadd.f32 %v303, %v492
      %v494 = vpop.f32.mrb[0].mxu0
      %v495 = vadd.f32 %v307, %v494
      %496 = vmatprep.mubr.f32.mxu0 0.0
      %497 = vmatmul.mubr.f32.gmra.mrb[0].mxu0 %v317
      %v498 = vpop.f32.mrb[0].mxu0
      %v499 = vadd.f32 %v303, %v498
      %v500 = vpop.f32.mrb[0].mxu0
      %v501 = vadd.f32 %v307, %v500
      %502 = vmatprep.mubr.f32.mxu0 0.0
      %503 = vmatmul.mubr.f32.gmra.mrb[0].mxu0 %v320
      %v504 = vpop.f32.mrb[0].mxu0
      %v505 = vadd.f32 %v303, %v504
      %v506 = vpop.f32.mrb[0].mxu0
      %v507 = vadd.f32 %v307, %v506
      %508 = vmatprep.mubr.f32.mxu0 0.0
      %509 = vmatmul.mubr.f32.gmra.mrb[0].mxu0 %v323
      %v510 = vpop.f32.mrb[0].mxu0
      %v511 = vadd.f32 %v303, %v510
      %v512 = vpop.f32.mrb[0].mxu0
      %v513 = vadd.f32 %v307, %v512
      %514 = vmatprep.mubr.f32.mxu0 0.0
      %515 = vmatmul.mubr.f32.gmra.mrb[0].mxu0 %v326
      %v516 = vpop.f32.mrb[0].mxu0
      %v517 = vadd.f32 %v303, %v516
      %v518 = vpop.f32.mrb[0].mxu0
      %v519 = vadd.f32 %v307, %v518
      %520 = vmatprep.mubr.f32.mxu0 0.0
      %521 = vmatmul.mubr.f32.gmra.mrb[0].mxu0 %v329
      %v522 = vpop.f32.mrb[0].mxu0
      %v523 = vadd.f32 %v303, %v522
      %v524 = vpop.f32.mrb[0].mxu0
      %v525 = vadd.f32 %v307, %v524
      %526 = vmatprep.mubr.f32.mxu0 0.0
      %527 = vmatmul.mubr.f32.gmra.mrb[0].mxu0 %v332
      %v528 = vpop.f32.mrb[0].mxu0
      %v529 = vadd.f32 %v303, %v528
      %v530 = vpop.f32.mrb[0].mxu0
      %v531 = vadd.f32 %v307, %v530
      %532 = vmatprep.mubr.f32.mxu0 0.0
      %533 = vmatmul.mubr.f32.gmra.mrb[0].mxu0 %v335
      %v534 = vpop.f32.mrb[0].mxu0
      %v535 = vadd.f32 %v303, %v534
      %v536 = vpop.f32.mrb[0].mxu0
      %v537 = vadd.f32 %v307, %v536
      %538 = vmatprep.mubr.f32.mxu0 0.0
      %539 = vmatmul.mubr.f32.gmra.mrb[0].mxu0 %v338
      %v540 = vpop.f32.mrb[0].mxu0
      %v541 = vadd.f32 %v303, %v540
      %v542 = vpop.f32.mrb[0].mxu0
      %v543 = vadd.f32 %v307, %v542
      %544 = vmatprep.mubr.f32.mxu0 0.0
      %545 = vmatmul.mubr.f32.gmra.mrb[0].mxu0 %v341
      %v546 = vpop.f32.mrb[0].mxu0
      %v547 = vadd.f32 %v303, %v546
      %v548 = vpop.f32.mrb[0].mxu0
      %v549 = vadd.f32 %v307, %v548
      %550 = vmatprep.mubr.f32.mxu0 0.0
      %551 = vmatmul.mubr.f32.gmra.mrb[0].mxu0 %v344
      %v552 = vpop.f32.mrb[0].mxu0
      %v553 = vadd.f32 %v303, %v552
      %v554 = vpop.f32.mrb[0].mxu0
      %v555 = vadd.f32 %v307, %v554
      %556 = vmatprep.mubr.f32.mxu0 0.0
      %557 = vmatmul.mubr.f32.gmra.mrb[0].mxu0 %v347
      %v558 = vpop.f32.mrb[0].mxu0
      %v559 = vadd.f32 %v303, %v558
      %v560 = vpop.f32.mrb[0].mxu0
      %v561 = vadd.f32 %v307, %v560
      %562 = vmatprep.mubr.f32.mxu0 0.0
      %563 = vmatmul.mubr.f32.gmra.mrb[0].mxu0 %v350
      %v564 = vpop.f32.mrb[0].mxu0
      %v565 = vadd.f32 %v303, %v564
      %v566 = vpop.f32.mrb[0].mxu0
      %v567 = vadd.f32 %v307, %v566
      %568 = vmatprep.mubr.f32.mxu0 0.0
      %569 = vmatmul.mubr.f32.gmra.mrb[0].mxu0 %v353
      %v570 = vpop.f32.mrb[0].mxu0
      %v571 = vadd.f32 %v303, %v570
      %v572 = vpop.f32.mrb[0].mxu0
      %v573 = vadd.f32 %v307, %v572
      %574 = vmatprep.mubr.f32.mxu0 0.0
      %575 = vmatmul.mubr.f32.gmra.mrb[0].mxu0 %v356
      %v576 = vpop.f32.mrb[0].mxu0
      %v577 = vadd.f32 %v303, %v576
      %v578 = vpop.f32.mrb[0].mxu0
      %v579 = vadd.f32 %v307, %v578
      %580 = vmatprep.mubr.f32.mxu0 0.0
      %581 = vmatmul.mubr.f32.gmra.mrb[0].mxu0 %v359
      %v582 = vpop.f32.mrb[0].mxu0
      %v583 = vadd.f32 %v303, %v582
      %v584 = vpop.f32.mrb[0].mxu0
      %v585 = vadd.f32 %v307, %v584
      %586 = vmatprep.mubr.f32.mxu0 0.0
      %587 = vmatmul.mubr.f32.gmra.mrb[0].mxu0 %v362
      %v588 = vpop.f32.mrb[0].mxu0
      %v589 = vadd.f32 %v303, %v588
      %v590 = vpop.f32.mrb[0].mxu0
      %v591 = vadd.f32 %v307, %v590
      %592 = vmatprep.mubr.f32.mxu0 0.0
      %593 = vmatmul.mubr.f32.gmra.mrb[0].mxu0 %v365
      %v594 = vpop.f32.mrb[0].mxu0
      %v595 = vadd.f32 %v303, %v594
      %v596 = vpop.f32.mrb[0].mxu0
      %v597 = vadd.f32 %v307, %v596
      %598 = vmatprep.mubr.f32.mxu0 0.0
      %599 = vmatmul.mubr.f32.gmra.mrb[0].mxu0 %v368
      %v600 = vpop.f32.mrb[0].mxu0
      %v601 = vadd.f32 %v303, %v600
      %v602 = vpop.f32.mrb[0].mxu0
      %v603 = vadd.f32 %v307, %v602
      %604 = vmatprep.mubr.f32.mxu0 0.0
      %605 = vmatmul.mubr.f32.gmra.mrb[0].mxu0 %v371
      %v606 = vpop.f32.mrb[0].mxu0
      %v607 = vadd.f32 %v303, %v606
      %v608 = vpop.f32.mrb[0].mxu0
      %v609 = vadd.f32 %v307, %v608
      %610 = vmatprep.mubr.f32.mxu0 0.0
      %611 = vmatmul.mubr.f32.gmra.mrb[0].mxu0 %v374
      %v612 = vpop.f32.mrb[0].mxu0
      %v613 = vadd.f32 %v303, %v612
      %v614 = vpop.f32.mrb[0].mxu0
      %v615 = vadd.f32 %v307, %v614
      %616 = vmatprep.mubr.f32.mxu0 0.0
      %617 = vmatmul.mubr.f32.gmra.mrb[0].mxu0 %v377
      %v618 = vpop.f32.mrb[0].mxu0
      %v619 = vadd.f32 %v303, %v618
      %v620 = vpop.f32.mrb[0].mxu0
      %v621 = vadd.f32 %v307, %v620
      %622 = vmatprep.mubr.f32.mxu0 0.0
      %623 = vmatmul.mubr.f32.gmra.mrb[0].mxu0 %v380
      %v624 = vpop.f32.mrb[0].mxu0
      %v625 = vadd.f32 %v303, %v624
      %v626 = vpop.f32.mrb[0].mxu0
      %v627 = vadd.f32 %v307, %v626
      %628 = vmatprep.mubr.f32.mxu0 0.0
      %629 = vmatmul.mubr.f32.gmra.mrb[0].mxu0 %v383
      %v630 = vpop.f32.mrb[0].mxu0
      %v631 = vadd.f32 %v303, %v630
      %v632 = vpop.f32.mrb[0].mxu0
      %v633 = vadd.f32 %v307, %v632
      %634 = vmatprep.mubr.f32.mxu0 0.0
      %635 = vmatmul.mubr.f32.gmra.mrb[0].mxu0 %v386
      %v636 = vpop.f32.mrb[0].mxu0
      %v637 = vadd.f32 %v303, %v636
      %v638 = vpop.f32.mrb[0].mxu0
      %v639 = vadd.f32 %v307, %v638
      %640 = vmatprep.mubr.f32.mxu0 0.0
      %641 = vmatmul.mubr.f32.gmra.mrb[0].mxu0 %v389
      %v642 = vpop.f32.mrb[0].mxu0
      %v643 = vadd.f32 %v303, %v642
      %v644 = vpop.f32.mrb[0].mxu0
      %v645 = vadd.f32 %v307, %v644
      %646 = vmatprep.mubr.f32.mxu0 0.0
      %647 = vmatmul.mubr.f32.gmra.mrb[0].mxu0 %v392
      %v648 = vpop.f32.mrb[0].mxu0
      %v649 = vadd.f32 %v303, %v648
      %v650 = vpop.f32.mrb[0].mxu0
      %v651 = vadd.f32 %v307, %v650
      %652 = vmatprep.mubr.f32.mxu0 0.0
      %653 = vmatmul.mubr.f32.gmra.mrb[0].mxu0 %v395
      %v654 = vpop.f32.mrb[0].mxu0
      %v655 = vadd.f32 %v303, %v654
      %v656 = vpop.f32.mrb[0].mxu0
      %v657 = vadd.f32 %v307, %v656
      %658 = vmatprep.mubr.f32.mxu0 0.0
      %659 = vmatmul.mubr.f32.gmra.mrb[0].mxu0 %v398
      %v660 = vpop.f32.mrb[0].mxu0
      %v661 = vadd.f32 %v303, %v660
      %v662 = vpop.f32.mrb[0].mxu0
      %v663 = vadd.f32 %v307, %v662
      %664 = vmatprep.mubr.f32.mxu0 0.0
      %665 = vmatmul.mubr.f32.gmra.mrb[0].mxu0 %v401
      %v666 = vpop.f32.mrb[0].mxu0
      %v667 = vadd.f32 %v303, %v666
      %v668 = vpop.f32.mrb[0].mxu0
      %v669 = vadd.f32 %v307, %v668
      %670 = vmatprep.mubr.f32.mxu0 0.0
      %671 = vmatmul.mubr.f32.gmra.mrb[0].mxu0 %v404
      %v672 = vpop.f32.mrb[0].mxu0
      %v673 = vadd.f32 %v303, %v672
      %v674 = vpop.f32.mrb[0].mxu0
      %v675 = vadd.f32 %v307, %v674
      %676 = vmatprep.mubr.f32.mxu0 0.0
      %677 = vmatmul.mubr.f32.gmra.mrb[0].mxu0 %v407
      %v678 = vpop.f32.mrb[0].mxu0
      %v679 = vadd.f32 %v303, %v678
      %v680 = vpop.f32.mrb[0].mxu0
      %v681 = vadd.f32 %v307, %v680
      %682 = vmatprep.mubr.f32.mxu0 0.0
      %683 = vmatmul.mubr.f32.gmra.mrb[0].mxu0 %v410
      %v684 = vpop.f32.mrb[0].mxu0
      %v685 = vadd.f32 %v303, %v684
      %v686 = vpop.f32.mrb[0].mxu0
      %v687 = vadd.f32 %v307, %v686
      %688 = vmatprep.mubr.f32.mxu0 0.0
      %689 = vmatmul.mubr.f32.gmra.mrb[0].mxu0 %v413
      %v690 = vpop.f32.mrb[0].mxu0
      %v691 = vadd.f32 %v303, %v690
      %v692 = vpop.f32.mrb[0].mxu0
      %v693 = vadd.f32 %v307, %v692
      %694 = vmatprep.mubr.f32.mxu0 0.0
      %695 = vmatmul.mubr.f32.gmra.mrb[0].mxu0 %v416
      %v696 = vpop.f32.mrb[0].mxu0
      %v697 = vadd.f32 %v303, %v696
      %v698 = vpop.f32.mrb[0].mxu0
      %v699 = vadd.f32 %v307, %v698
      %700 = vmatprep.mubr.f32.mxu0 0.0
      %701 = vmatmul.mubr.f32.gmra.mrb[0].mxu0 %v419
      %v702 = vpop.f32.mrb[0].mxu0
      %v703 = vadd.f32 %v303, %v702
      %v704 = vpop.f32.mrb[0].mxu0
      %v705 = vadd.f32 %v307, %v704
      %706 = vdwg.mxu0
      %v707 = vmax.f32 %v493, 0.0
      %v708 = vmax.f32 %v495, 0.0
      %v709 = vmax.f32 %v499, 0.0
      %v710 = vmax.f32 %v501, 0.0
      %v711 = vmax.f32 %v505, 0.0
      %v712 = vmax.f32 %v507, 0.0
      %v713 = vmax.f32 %v511, 0.0
      %v714 = vmax.f32 %v513, 0.0
      %v715 = vmax.f32 %v517, 0.0
      %v716 = vmax.f32 %v519, 0.0
      %v717 = vmax.f32 %v523, 0.0
      %v718 = vmax.f32 %v525, 0.0
      %v719 = vmax.f32 %v529, 0.0
      %v720 = vmax.f32 %v531, 0.0
      %v721 = vmax.f32 %v535, 0.0
      %v722 = vmax.f32 %v537, 0.0
      %v723 = vmax.f32 %v541, 0.0
      %v724 = vmax.f32 %v543, 0.0
      %v725 = vmax.f32 %v547, 0.0
      %v726 = vmax.f32 %v549, 0.0
      %v727 = vmax.f32 %v553, 0.0
      %v728 = vmax.f32 %v555, 0.0
      %v729 = vmax.f32 %v559, 0.0
      %v730 = vmax.f32 %v561, 0.0
      %v731 = vmax.f32 %v565, 0.0
      %v732 = vmax.f32 %v567, 0.0
      %v733 = vmax.f32 %v571, 0.0
      %v734 = vmax.f32 %v573, 0.0
      %v735 = vmax.f32 %v577, 0.0
      %v736 = vmax.f32 %v579, 0.0
      %v737 = vmax.f32 %v583, 0.0
      %v738 = vmax.f32 %v585, 0.0
      %v739 = vmax.f32 %v589, 0.0
      %v740 = vmax.f32 %v591, 0.0
      %v741 = vmax.f32 %v595, 0.0
      %v742 = vmax.f32 %v597, 0.0
      %v743 = vmax.f32 %v601, 0.0
      %v744 = vmax.f32 %v603, 0.0
      %v745 = vmax.f32 %v607, 0.0
      %v746 = vmax.f32 %v609, 0.0
      %v747 = vmax.f32 %v613, 0.0
      %v748 = vmax.f32 %v615, 0.0
      %v749 = vmax.f32 %v619, 0.0
      %v750 = vmax.f32 %v621, 0.0
      %v751 = vmax.f32 %v625, 0.0
      %v752 = vmax.f32 %v627, 0.0
      %v753 = vmax.f32 %v631, 0.0
      %v754 = vmax.f32 %v633, 0.0
      %v755 = vmax.f32 %v637, 0.0
      %v756 = vmax.f32 %v639, 0.0
      %v757 = vmax.f32 %v643, 0.0
      %v758 = vmax.f32 %v645, 0.0
      %v759 = vmax.f32 %v649, 0.0
      %v760 = vmax.f32 %v651, 0.0
      %v761 = vmax.f32 %v655, 0.0
      %v762 = vmax.f32 %v657, 0.0
      %v763 = vmax.f32 %v661, 0.0
      %v764 = vmax.f32 %v663, 0.0
      %v765 = vmax.f32 %v667, 0.0
      %v766 = vmax.f32 %v669, 0.0
      %v767 = vmax.f32 %v673, 0.0
      %v768 = vmax.f32 %v675, 0.0
      %v769 = vmax.f32 %v679, 0.0
      %v770 = vmax.f32 %v681, 0.0
      %v771 = vmax.f32 %v685, 0.0
      %v772 = vmax.f32 %v687, 0.0
      %v773 = vmax.f32 %v691, 0.0
      %v774 = vmax.f32 %v693, 0.0
      %v775 = vmax.f32 %v697, 0.0
      %v776 = vmax.f32 %v699, 0.0
      %v777 = vmax.f32 %v703, 0.0
      %v778 = vmax.f32 %v705, 0.0
      %779 = vst [vmem:[#allocation2] sm:$0xff] %v707
      %780 = vst [vmem:[#allocation2 + $0x8] sm:$0xff] %v708
      %781 = vst [vmem:[#allocation2 + $0x10] sm:$0xff] %v709
      %782 = vst [vmem:[#allocation2 + $0x18] sm:$0xff] %v710
      %783 = vst [vmem:[#allocation2 + $0x20] sm:$0xff] %v711
      %784 = vst [vmem:[#allocation2 + $0x28] sm:$0xff] %v712
      %785 = vst [vmem:[#allocation2 + $0x30] sm:$0xff] %v713
      %786 = vst [vmem:[#allocation2 + $0x38] sm:$0xff] %v714
      %787 = vst [vmem:[#allocation2 + $0x40] sm:$0xff] %v715
      %788 = vst [vmem:[#allocation2 + $0x48] sm:$0xff] %v716
      %789 = vst [vmem:[#allocation2 + $0x50] sm:$0xff] %v717
      %790 = vst [vmem:[#allocation2 + $0x58] sm:$0xff] %v718
      %791 = vst [vmem:[#allocation2 + $0x60] sm:$0xff] %v719
      %792 = vst [vmem:[#allocation2 + $0x68] sm:$0xff] %v720
      %793 = vst [vmem:[#allocation2 + $0x70] sm:$0xff] %v721
      %794 = vst [vmem:[#allocation2 + $0x78] sm:$0xff] %v722
      %795 = vst [vmem:[#allocation2 + $0x80] sm:$0xff] %v723
      %796 = vst [vmem:[#allocation2 + $0x88] sm:$0xff] %v724
      %797 = vst [vmem:[#allocation2 + $0x90] sm:$0xff] %v725
      %798 = vst [vmem:[#allocation2 + $0x98] sm:$0xff] %v726
      %799 = vst [vmem:[#allocation2 + $0xa0] sm:$0xff] %v727
      %800 = vst [vmem:[#allocation2 + $0xa8] sm:$0xff] %v728
      %801 = vst [vmem:[#allocation2 + $0xb0] sm:$0xff] %v729
      %802 = vst [vmem:[#allocation2 + $0xb8] sm:$0xff] %v730
      %803 = vst [vmem:[#allocation2 + $0xc0] sm:$0xff] %v731
      %804 = vst [vmem:[#allocation2 + $0xc8] sm:$0xff] %v732
      %805 = vst [vmem:[#allocation2 + $0xd0] sm:$0xff] %v733
      %806 = vst [vmem:[#allocation2 + $0xd8] sm:$0xff] %v734
      %807 = vst [vmem:[#allocation2 + $0xe0] sm:$0xff] %v735
      %808 = vst [vmem:[#allocation2 + $0xe8] sm:$0xff] %v736
      %809 = vst [vmem:[#allocation2 + $0xf0] sm:$0xff] %v737
      %810 = vst [vmem:[#allocation2 + $0xf8] sm:$0xff] %v738
      %811 = vst [vmem:[#allocation2 + $0x100] sm:$0xff] %v739
      %812 = vst [vmem:[#allocation2 + $0x108] sm:$0xff] %v740
      %813 = vst [vmem:[#allocation2 + $0x110] sm:$0xff] %v741
      %814 = vst [vmem:[#allocation2 + $0x118] sm:$0xff] %v742
      %815 = vst [vmem:[#allocation2 + $0x120] sm:$0xff] %v743
      %816 = vst [vmem:[#allocation2 + $0x128] sm:$0xff] %v744
      %817 = vst [vmem:[#allocation2 + $0x130] sm:$0xff] %v745
      %818 = vst [vmem:[#allocation2 + $0x138] sm:$0xff] %v746
      %819 = vst [vmem:[#allocation2 + $0x140] sm:$0xff] %v747
      %820 = vst [vmem:[#allocation2 + $0x148] sm:$0xff] %v748
      %821 = vst [vmem:[#allocation2 + $0x150] sm:$0xff] %v749
      %822 = vst [vmem:[#allocation2 + $0x158] sm:$0xff] %v750
      %823 = vst [vmem:[#allocation2 + $0x160] sm:$0xff] %v751
      %824 = vst [vmem:[#allocation2 + $0x168] sm:$0xff] %v752
      %825 = vst [vmem:[#allocation2 + $0x170] sm:$0xff] %v753
      %826 = vst [vmem:[#allocation2 + $0x178] sm:$0xff] %v754
      %827 = vst [vmem:[#allocation2 + $0x180] sm:$0xff] %v755
      %828 = vst [vmem:[#allocation2 + $0x188] sm:$0xff] %v756
      %829 = vst [vmem:[#allocation2 + $0x190] sm:$0xff] %v757
      %830 = vst [vmem:[#allocation2 + $0x198] sm:$0xff] %v758
      %831 = vst [vmem:[#allocation2 + $0x1a0] sm:$0xff] %v759
      %832 = vst [vmem:[#allocation2 + $0x1a8] sm:$0xff] %v760
      %833 = vst [vmem:[#allocation2 + $0x1b0] sm:$0xff] %v761
      %834 = vst [vmem:[#allocation2 + $0x1b8] sm:$0xff] %v762
      %835 = vst [vmem:[#allocation2 + $0x1c0] sm:$0xff] %v763
      %836 = vst [vmem:[#allocation2 + $0x1c8] sm:$0xff] %v764
      %837 = vst [vmem:[#allocation2 + $0x1d0] sm:$0xff] %v765
      %838 = vst [vmem:[#allocation2 + $0x1d8] sm:$0xff] %v766
      %839 = vst [vmem:[#allocation2 + $0x1e0] sm:$0xff] %v767
      %840 = vst [vmem:[#allocation2 + $0x1e8] sm:$0xff] %v768
      %841 = vst [vmem:[#allocation2 + $0x1f0] sm:$0xff] %v769
      %842 = vst [vmem:[#allocation2 + $0x1f8] sm:$0xff] %v770
      %843 = vst [vmem:[#allocation2 + $0x200] sm:$0xff] %v771
      %844 = vst [vmem:[#allocation2 + $0x208] sm:$0xff] %v772
      %845 = vst [vmem:[#allocation2 + $0x210] sm:$0xff] %v773
      %846 = vst [vmem:[#allocation2 + $0x218] sm:$0xff] %v774
      %847 = vst [vmem:[#allocation2 + $0x220] sm:$0xff] %v775
      %848 = vst [vmem:[#allocation2 + $0x228] sm:$0xff] %v776
      %849 = vst [vmem:[#allocation2 + $0x230] sm:$0xff] %v777
      %850 = vst [vmem:[#allocation2 + $0x238] sm:$0xff] %v778
      %851 = vst [vmem:[#allocation2] sm:$0x3] 0.0
      %852 = vst [vmem:[#allocation2 + $0x8] sm:$0x3] 0.0
      %853 = vst [vmem:[#allocation2 + $0x30] sm:$0x3] 0.0
      %854 = vst [vmem:[#allocation2 + $0x38] sm:$0x3] 0.0
      %855 = vst [vmem:[#allocation2 + $0x60] sm:$0x3] 0.0
      %856 = vst [vmem:[#allocation2 + $0x68] sm:$0x3] 0.0
      %857 = vst [vmem:[#allocation2 + $0x90] sm:$0x3] 0.0
      %858 = vst [vmem:[#allocation2 + $0x98] sm:$0x3] 0.0
      %859 = vst [vmem:[#allocation2 + $0xc0] sm:$0x3] 0.0
      %860 = vst [vmem:[#allocation2 + $0xc8] sm:$0x3] 0.0
      %861 = vst [vmem:[#allocation2 + $0xf0] sm:$0x3] 0.0
      %862 = vst [vmem:[#allocation2 + $0xf8] sm:$0x3] 0.0
      %863 = vst [vmem:[#allocation2 + $0x120] sm:$0x3] 0.0
      %864 = vst [vmem:[#allocation2 + $0x128] sm:$0x3] 0.0
      %865 = vst [vmem:[#allocation2 + $0x150] sm:$0x3] 0.0
      %866 = vst [vmem:[#allocation2 + $0x158] sm:$0x3] 0.0
      %867 = vst [vmem:[#allocation2 + $0x180] sm:$0x3] 0.0
      %868 = vst [vmem:[#allocation2 + $0x188] sm:$0x3] 0.0
      %869 = vst [vmem:[#allocation2 + $0x1b0] sm:$0x3] 0.0
      %870 = vst [vmem:[#allocation2 + $0x1b8] sm:$0x3] 0.0
      %871 = vst [vmem:[#allocation2 + $0x1e0] sm:$0x3] 0.0
      %872 = vst [vmem:[#allocation2 + $0x1e8] sm:$0x3] 0.0
      %873 = vst [vmem:[#allocation2 + $0x210] sm:$0x3] 0.0
      %874 = vst [vmem:[#allocation2 + $0x218] sm:$0x3] 0.0
      %875 = vst [vmem:[#allocation2 + $0x20] sm:$0xfc] 0.0
      %876 = vst [vmem:[#allocation2 + $0x28] sm:$0xfc] 0.0
      %877 = vst [vmem:[#allocation2 + $0x50] sm:$0xfc] 0.0
      %878 = vst [vmem:[#allocation2 + $0x58] sm:$0xfc] 0.0
      %879 = vst [vmem:[#allocation2 + $0x80] sm:$0xfc] 0.0
      %880 = vst [vmem:[#allocation2 + $0x88] sm:$0xfc] 0.0
      %881 = vst [vmem:[#allocation2 + $0xb0] sm:$0xfc] 0.0
      %882 = vst [vmem:[#allocation2 + $0xb8] sm:$0xfc] 0.0
      %883 = vst [vmem:[#allocation2 + $0xe0] sm:$0xfc] 0.0
      %884 = vst [vmem:[#allocation2 + $0xe8] sm:$0xfc] 0.0
      %885 = vst [vmem:[#allocation2 + $0x110] sm:$0xfc] 0.0
      %886 = vst [vmem:[#allocation2 + $0x118] sm:$0xfc] 0.0
      %887 = vst [vmem:[#allocation2 + $0x140] sm:$0xfc] 0.0
      %888 = vst [vmem:[#allocation2 + $0x148] sm:$0xfc] 0.0
      %889 = vst [vmem:[#allocation2 + $0x170] sm:$0xfc] 0.0
      %890 = vst [vmem:[#allocation2 + $0x178] sm:$0xfc] 0.0
      %891 = vst [vmem:[#allocation2 + $0x1a0] sm:$0xfc] 0.0
      %892 = vst [vmem:[#allocation2 + $0x1a8] sm:$0xfc] 0.0
      %893 = vst [vmem:[#allocation2 + $0x1d0] sm:$0xfc] 0.0
      %894 = vst [vmem:[#allocation2 + $0x1d8] sm:$0xfc] 0.0
      %895 = vst [vmem:[#allocation2 + $0x200] sm:$0xfc] 0.0
      %896 = vst [vmem:[#allocation2 + $0x208] sm:$0xfc] 0.0
      %897 = vst [vmem:[#allocation2 + $0x230] sm:$0xfc] 0.0
      %898 = vst [vmem:[#allocation2 + $0x238] sm:$0xfc] 0.0
      %p899 = scmp.eq.s32.totalorder %s21, 0
      // Predicated region
      $region41: #{spatial_block_forward.1} parent=39 // pred_check
        %p900 = pneg %p899
      $region42: #{spatial_block_forward.1} parent=39 // pred_check_branch
        %902 = sbr.rel (%p900) target = $region44
      $region43: #{spatial_block_forward.1} parent=39 // pred_region
        %903 = vst [vmem:[#allocation2] sm:$0xff] 0.0
        %904 = vst [vmem:[#allocation2 + $0x8] sm:$0xff] 0.0
        %905 = vst [vmem:[#allocation2 + $0x10] sm:$0xff] 0.0
        %906 = vst [vmem:[#allocation2 + $0x18] sm:$0xff] 0.0
        %907 = vst [vmem:[#allocation2 + $0x20] sm:$0xff] 0.0
        %908 = vst [vmem:[#allocation2 + $0x28] sm:$0xff] 0.0
        %909 = vst [vmem:[#allocation2 + $0x30] sm:$0xff] 0.0
        %910 = vst [vmem:[#allocation2 + $0x38] sm:$0xff] 0.0
        %911 = vst [vmem:[#allocation2 + $0x40] sm:$0xff] 0.0
        %912 = vst [vmem:[#allocation2 + $0x48] sm:$0xff] 0.0
        %913 = vst [vmem:[#allocation2 + $0x50] sm:$0xff] 0.0
        %914 = vst [vmem:[#allocation2 + $0x58] sm:$0xff] 0.0
      $region44: #{spatial_block_forward.1} parent=39 // pred_fallthru
        _
      %p915 = scmp.eq.s32.totalorder %s21, 1
      // Predicated region
      $region45: #{spatial_block_forward.1} parent=39 // pred_check
        %p916 = pneg %p915
      $region46: #{spatial_block_forward.1} parent=39 // pred_check_branch
        %918 = sbr.rel (%p916) target = $region48
      $region47: #{spatial_block_forward.1} parent=39 // pred_region
        %s919 = scalar_lea.vmem [#allocation2], 480
        %920 = vst [vmem:[%s919] sm:$0xff] 0.0
        %921 = vst [vmem:[%s919 + $0x8] sm:$0xff] 0.0
        %922 = vst [vmem:[%s919 + $0x10] sm:$0xff] 0.0
        %923 = vst [vmem:[%s919 + $0x18] sm:$0xff] 0.0
        %924 = vst [vmem:[%s919 + $0x20] sm:$0xff] 0.0
        %925 = vst [vmem:[%s919 + $0x28] sm:$0xff] 0.0
        %926 = vst [vmem:[%s919 + $0x30] sm:$0xff] 0.0
        %927 = vst [vmem:[%s919 + $0x38] sm:$0xff] 0.0
        %928 = vst [vmem:[%s919 + $0x40] sm:$0xff] 0.0
        %929 = vst [vmem:[%s919 + $0x48] sm:$0xff] 0.0
        %930 = vst [vmem:[%s919 + $0x50] sm:$0xff] 0.0
        %931 = vst [vmem:[%s919 + $0x58] sm:$0xff] 0.0
      $region48: #{spatial_block_forward.1} parent=39 // pred_fallthru
        _
      %v932 = vld [vmem:[%s4] sm:$0x1]
      %v934 = vlaneseq
      %v935 = vshrl.u32 %v934, 7
      %v936 = vsub.s32 0, %v935
      %v937 = vrot.slane %v932, %v936
      %v939 = vld [vmem:[#allocation2] sm:$0xff]
      %v940 = vld [vmem:[#allocation2 + $0x8] sm:$0xff]
      %v941 = vld [vmem:[#allocation2 + $0x10] sm:$0xff]
      %v942 = vld [vmem:[#allocation2 + $0x18] sm:$0xff]
      %v943 = vld [vmem:[#allocation2 + $0x30] sm:$0xff]
      %v944 = vld [vmem:[#allocation2 + $0x38] sm:$0xff]
      %v945 = vld [vmem:[#allocation2 + $0x40] sm:$0xff]
      %v946 = vld [vmem:[#allocation2 + $0x48] sm:$0xff]
      %v947 = vld [vmem:[#allocation2 + $0x60] sm:$0xff]
      %v948 = vld [vmem:[#allocation2 + $0x68] sm:$0xff]
      %v949 = vld [vmem:[#allocation2 + $0x70] sm:$0xff]
      %v950 = vld [vmem:[#allocation2 + $0x78] sm:$0xff]
      %v951 = vld [vmem:[#allocation2 + $0x90] sm:$0xff]
      %v952 = vld [vmem:[#allocation2 + $0x98] sm:$0xff]
      %v953 = vld [vmem:[#allocation2 + $0xa0] sm:$0xff]
      %v954 = vld [vmem:[#allocation2 + $0xa8] sm:$0xff]
      %v955 = vld [vmem:[#allocation2 + $0xc0] sm:$0xff]
      %v956 = vld [vmem:[#allocation2 + $0xc8] sm:$0xff]
      %v957 = vld [vmem:[#allocation2 + $0xd0] sm:$0xff]
      %v958 = vld [vmem:[#allocation2 + $0xd8] sm:$0xff]
      %v959 = vld [vmem:[#allocation2 + $0xf0] sm:$0xff]
      %v960 = vld [vmem:[#allocation2 + $0xf8] sm:$0xff]
      %v961 = vld [vmem:[#allocation2 + $0x100] sm:$0xff]
      %v962 = vld [vmem:[#allocation2 + $0x108] sm:$0xff]
      %v963 = vld [vmem:[#allocation2 + $0x120] sm:$0xff]
      %v964 = vld [vmem:[#allocation2 + $0x128] sm:$0xff]
      %v965 = vld [vmem:[#allocation2 + $0x130] sm:$0xff]
      %v966 = vld [vmem:[#allocation2 + $0x138] sm:$0xff]
      %v967 = vld [vmem:[#allocation2 + $0x150] sm:$0xff]
      %v968 = vld [vmem:[#allocation2 + $0x158] sm:$0xff]
      %v969 = vld [vmem:[#allocation2 + $0x160] sm:$0xff]
      %v970 = vld [vmem:[#allocation2 + $0x168] sm:$0xff]
      %v971 = vld [vmem:[%s3] sm:$0xff]
      %v972 = vld [vmem:[%s3 + $0x8] sm:$0xff]
      %v973 = vld [vmem:[%s3 + $0x10] sm:$0xff]
      %v974 = vld [vmem:[%s3 + $0x18] sm:$0xff]
      %v975 = vld [vmem:[%s3 + $0x20] sm:$0xff]
      %v976 = vld [vmem:[%s3 + $0x28] sm:$0xff]
      %v977 = vld [vmem:[%s3 + $0x30] sm:$0xff]
      %v978 = vld [vmem:[%s3 + $0x38] sm:$0xff]
      %v979 = vld [vmem:[%s3 + $0x40] sm:$0xff]
      %v980 = vld [vmem:[%s3 + $0x48] sm:$0xff]
      %v981 = vld [vmem:[%s3 + $0x50] sm:$0xff]
      %v982 = vld [vmem:[%s3 + $0x58] sm:$0xff]
      %v983 = vld [vmem:[%s3 + $0x60] sm:$0xff]
      %v984 = vld [vmem:[%s3 + $0x68] sm:$0xff]
      %v985 = vld [vmem:[%s3 + $0x70] sm:$0xff]
      %v986 = vld [vmem:[%s3 + $0x78] sm:$0xff]
      %v987 = vld [vmem:[%s3 + $0x80] sm:$0xff]
      %v988 = vld [vmem:[%s3 + $0x88] sm:$0xff]
      %v989 = vld [vmem:[%s3 + $0x90] sm:$0xff]
      %v990 = vld [vmem:[%s3 + $0x98] sm:$0xff]
      %v991 = vld [vmem:[%s3 + $0xa0] sm:$0xff]
      %v992 = vld [vmem:[%s3 + $0xa8] sm:$0xff]
      %v993 = vld [vmem:[%s3 + $0xb0] sm:$0xff]
      %v994 = vld [vmem:[%s3 + $0xb8] sm:$0xff]
      %v995 = vld [vmem:[%s3 + $0xc0] sm:$0xff]
      %v996 = vld [vmem:[%s3 + $0xc8] sm:$0xff]
      %v997 = vld [vmem:[%s3 + $0xd0] sm:$0xff]
      %v998 = vld [vmem:[%s3 + $0xd8] sm:$0xff]
      %v999 = vld [vmem:[%s3 + $0xe0] sm:$0xff]
      %v1000 = vld [vmem:[%s3 + $0xe8] sm:$0xff]
      %v1001 = vld [vmem:[%s3 + $0xf0] sm:$0xff]
      %v1002 = vld [vmem:[%s3 + $0xf8] sm:$0xff]
      %1003 = vmatprep.subr.mxu0 0.0
      %1004 = vmatpush1.msra.mxu0 %v971
      %1005 = vmatprep.subr.mxu0 0.0
      %1006 = vmatpush1.msra.mxu0 %v972
      %1007 = vmatprep.subr.mxu0 0.0
      %1008 = vmatpush1.msra.mxu0 %v973
      %1009 = vmatprep.subr.mxu0 0.0
      %1010 = vmatpush1.msra.mxu0 %v974
      %1011 = vmatprep.subr.mxu0 0.0
      %1012 = vmatpush1.msra.mxu0 %v975
      %1013 = vmatprep.subr.mxu0 0.0
      %1014 = vmatpush1.msra.mxu0 %v976
      %1015 = vmatprep.subr.mxu0 0.0
      %1016 = vmatpush1.msra.mxu0 %v977
      %1017 = vmatprep.subr.mxu0 0.0
      %1018 = vmatpush1.msra.mxu0 %v978
      %1019 = vmatprep.subr.mxu0 0.0
      %1020 = vmatpush1.msra.mxu0 %v979
      %1021 = vmatprep.subr.mxu0 0.0
      %1022 = vmatpush1.msra.mxu0 %v980
      %1023 = vmatprep.subr.mxu0 0.0
      %1024 = vmatpush1.msra.mxu0 %v981
      %1025 = vmatprep.subr.mxu0 0.0
      %1026 = vmatpush1.msra.mxu0 %v982
      %1027 = vmatprep.subr.mxu0 0.0
      %1028 = vmatpush1.msra.mxu0 %v983
      %1029 = vmatprep.subr.mxu0 0.0
      %1030 = vmatpush1.msra.mxu0 %v984
      %1031 = vmatprep.subr.mxu0 0.0
      %1032 = vmatpush1.msra.mxu0 %v985
      %1033 = vmatprep.subr.mxu0 0.0
      %1034 = vmatpush1.msra.mxu0 %v986
      %1035 = vmatprep.subr.mxu0 0.0
      %1036 = vmatpush1.msra.mxu0 %v987
      %1037 = vmatprep.subr.mxu0 0.0
      %1038 = vmatpush1.msra.mxu0 %v988
      %1039 = vmatprep.subr.mxu0 0.0
      %1040 = vmatpush1.msra.mxu0 %v989
      %1041 = vmatprep.subr.mxu0 0.0
      %1042 = vmatpush1.msra.mxu0 %v990
      %1043 = vmatprep.subr.mxu0 0.0
      %1044 = vmatpush1.msra.mxu0 %v991
      %1045 = vmatprep.subr.mxu0 0.0
      %1046 = vmatpush1.msra.mxu0 %v992
      %1047 = vmatprep.subr.mxu0 0.0
      %1048 = vmatpush1.msra.mxu0 %v993
      %1049 = vmatprep.subr.mxu0 0.0
      %1050 = vmatpush1.msra.mxu0 %v994
      %1051 = vmatprep.subr.mxu0 0.0
      %1052 = vmatpush1.msra.mxu0 %v995
      %1053 = vmatprep.subr.mxu0 0.0
      %1054 = vmatpush1.msra.mxu0 %v996
      %1055 = vmatprep.subr.mxu0 0.0
      %1056 = vmatpush1.msra.mxu0 %v997
      %1057 = vmatprep.subr.mxu0 0.0
      %1058 = vmatpush1.msra.mxu0 %v998
      %1059 = vmatprep.subr.mxu0 0.0
      %1060 = vmatpush1.msra.mxu0 %v999
      %1061 = vmatprep.subr.mxu0 0.0
      %1062 = vmatpush1.msra.mxu0 %v1000
      %1063 = vmatprep.subr.mxu0 0.0
      %1064 = vmatpush1.msra.mxu0 %v1001
      %1065 = vmatprep.subr.mxu0 0.0
      %1066 = vmatpush1.msra.mxu0 %v1002
      %1067 = vmatprep.mubr.f32.mxu0 %v940
      %1068 = vmatmul.mubr.f32.gmra.mrb[0].mxu0 %v939
      %v1069 = vpop.f32.mrb[0].mxu0
      %v1070 = vadd.f32 0.0, %v1069
      %v1071 = vpop.f32.mrb[0].mxu0
      %1072 = vmatprep.mubr.f32.mxu0 %v942
      %1073 = vmatmul.mubr.f32.gmra.mrb[0].mxu0 %v941
      %v1074 = vpop.f32.mrb[0].mxu0
      %v1075 = vadd.f32 0.0, %v1074
      %v1076 = vpop.f32.mrb[0].mxu0
      %1077 = vmatprep.mubr.f32.mxu0 %v944
      %1078 = vmatmul.mubr.f32.gmra.mrb[0].mxu0 %v943
      %v1079 = vpop.f32.mrb[0].mxu0
      %v1080 = vadd.f32 0.0, %v1079
      %v1081 = vpop.f32.mrb[0].mxu0
      %1082 = vmatprep.mubr.f32.mxu0 %v946
      %1083 = vmatmul.mubr.f32.gmra.mrb[0].mxu0 %v945
      %v1084 = vpop.f32.mrb[0].mxu0
      %v1085 = vadd.f32 0.0, %v1084
      %v1086 = vpop.f32.mrb[0].mxu0
      %1087 = vmatprep.mubr.f32.mxu0 %v948
      %1088 = vmatmul.mubr.f32.gmra.mrb[0].mxu0 %v947
      %v1089 = vpop.f32.mrb[0].mxu0
      %v1090 = vadd.f32 0.0, %v1089
      %v1091 = vpop.f32.mrb[0].mxu0
      %1092 = vmatprep.mubr.f32.mxu0 %v950
      %1093 = vmatmul.mubr.f32.gmra.mrb[0].mxu0 %v949
      %v1094 = vpop.f32.mrb[0].mxu0
      %v1095 = vadd.f32 0.0, %v1094
      %v1096 = vpop.f32.mrb[0].mxu0
      %1097 = vmatprep.mubr.f32.mxu0 %v952
      %1098 = vmatmul.mubr.f32.gmra.mrb[0].mxu0 %v951
      %v1099 = vpop.f32.mrb[0].mxu0
      %v1100 = vadd.f32 0.0, %v1099
      %v1101 = vpop.f32.mrb[0].mxu0
      %1102 = vmatprep.mubr.f32.mxu0 %v954
      %1103 = vmatmul.mubr.f32.gmra.mrb[0].mxu0 %v953
      %v1104 = vpop.f32.mrb[0].mxu0
      %v1105 = vadd.f32 0.0, %v1104
      %v1106 = vpop.f32.mrb[0].mxu0
      %1107 = vmatprep.mubr.f32.mxu0 %v956
      %1108 = vmatmul.mubr.f32.gmra.mrb[0].mxu0 %v955
      %v1109 = vpop.f32.mrb[0].mxu0
      %v1110 = vadd.f32 0.0, %v1109
      %v1111 = vpop.f32.mrb[0].mxu0
      %1112 = vmatprep.mubr.f32.mxu0 %v958
      %1113 = vmatmul.mubr.f32.gmra.mrb[0].mxu0 %v957
      %v1114 = vpop.f32.mrb[0].mxu0
      %v1115 = vadd.f32 0.0, %v1114
      %v1116 = vpop.f32.mrb[0].mxu0
      %1117 = vmatprep.mubr.f32.mxu0 %v960
      %1118 = vmatmul.mubr.f32.gmra.mrb[0].mxu0 %v959
      %v1119 = vpop.f32.mrb[0].mxu0
      %v1120 = vadd.f32 0.0, %v1119
      %v1121 = vpop.f32.mrb[0].mxu0
      %1122 = vmatprep.mubr.f32.mxu0 %v962
      %1123 = vmatmul.mubr.f32.gmra.mrb[0].mxu0 %v961
      %v1124 = vpop.f32.mrb[0].mxu0
      %v1125 = vadd.f32 0.0, %v1124
      %v1126 = vpop.f32.mrb[0].mxu0
      %1127 = vmatprep.mubr.f32.mxu0 %v964
      %1128 = vmatmul.mubr.f32.gmra.mrb[0].mxu0 %v963
      %v1129 = vpop.f32.mrb[0].mxu0
      %v1130 = vadd.f32 0.0, %v1129
      %v1131 = vpop.f32.mrb[0].mxu0
      %1132 = vmatprep.mubr.f32.mxu0 %v966
      %1133 = vmatmul.mubr.f32.gmra.mrb[0].mxu0 %v965
      %v1134 = vpop.f32.mrb[0].mxu0
      %v1135 = vadd.f32 0.0, %v1134
      %v1136 = vpop.f32.mrb[0].mxu0
      %1137 = vmatprep.mubr.f32.mxu0 %v968
      %1138 = vmatmul.mubr.f32.gmra.mrb[0].mxu0 %v967
      %v1139 = vpop.f32.mrb[0].mxu0
      %v1140 = vadd.f32 0.0, %v1139
      %v1141 = vpop.f32.mrb[0].mxu0
      %1142 = vmatprep.mubr.f32.mxu0 %v970
      %1143 = vmatmul.mubr.f32.gmra.mrb[0].mxu0 %v969
      %v1144 = vpop.f32.mrb[0].mxu0
      %v1145 = vadd.f32 0.0, %v1144
      %v1146 = vpop.f32.mrb[0].mxu0
      %1147 = vdwg.mxu0
      %v1148 = vadd.f32 %v937, %v1070
      %v1149 = vadd.f32 %v937, %v1075
      %v1150 = vadd.f32 %v937, %v1080
      %v1151 = vadd.f32 %v937, %v1085
      %v1152 = vadd.f32 %v937, %v1090
      %v1153 = vadd.f32 %v937, %v1095
      %v1154 = vadd.f32 %v937, %v1100
      %v1155 = vadd.f32 %v937, %v1105
      %v1156 = vadd.f32 %v937, %v1110
      %v1157 = vadd.f32 %v937, %v1115
      %v1158 = vadd.f32 %v937, %v1120
      %v1159 = vadd.f32 %v937, %v1125
      %v1160 = vadd.f32 %v937, %v1130
      %v1161 = vadd.f32 %v937, %v1135
      %v1162 = vadd.f32 %v937, %v1140
      %v1163 = vadd.f32 %v937, %v1145
      %v1164 = vld [vmem:[#allocation2] sm:$0xfc]
      %v1165 = vld [vmem:[#allocation2 + $0x8] sm:$0xfc]
      %v1166 = vld [vmem:[#allocation2 + $0x10] sm:$0xff]
      %v1167 = vld [vmem:[#allocation2 + $0x18] sm:$0xff]
      %v1168 = vld [vmem:[#allocation2 + $0x20] sm:$0x3]
      %v1169 = vld [vmem:[#allocation2 + $0x28] sm:$0x3]
      %v1170 = vld [vmem:[#allocation2 + $0x30] sm:$0xfc]
      %v1171 = vld [vmem:[#allocation2 + $0x38] sm:$0xfc]
      %v1172 = vld [vmem:[#allocation2 + $0x40] sm:$0xff]
      %v1173 = vld [vmem:[#allocation2 + $0x48] sm:$0xff]
      %v1174 = vld [vmem:[#allocation2 + $0x50] sm:$0x3]
      %v1175 = vld [vmem:[#allocation2 + $0x58] sm:$0x3]
      %v1176 = vld [vmem:[#allocation2 + $0x60] sm:$0xfc]
      %v1177 = vld [vmem:[#allocation2 + $0x68] sm:$0xfc]
      %v1178 = vld [vmem:[#allocation2 + $0x70] sm:$0xff]
      %v1179 = vld [vmem:[#allocation2 + $0x78] sm:$0xff]
      %v1180 = vld [vmem:[#allocation2 + $0x80] sm:$0x3]
      %v1181 = vld [vmem:[#allocation2 + $0x88] sm:$0x3]
      %v1182 = vld [vmem:[#allocation2 + $0x90] sm:$0xfc]
      %v1183 = vld [vmem:[#allocation2 + $0x98] sm:$0xfc]
      %v1184 = vld [vmem:[#allocation2 + $0xa0] sm:$0xff]
      %v1185 = vld [vmem:[#allocation2 + $0xa8] sm:$0xff]
      %v1186 = vld [vmem:[#allocation2 + $0xb0] sm:$0x3]
      %v1187 = vld [vmem:[#allocation2 + $0xb8] sm:$0x3]
      %v1188 = vld [vmem:[#allocation2 + $0xc0] sm:$0xfc]
      %v1189 = vld [vmem:[#allocation2 + $0xc8] sm:$0xfc]
      %v1190 = vld [vmem:[#allocation2 + $0xd0] sm:$0xff]
      %v1191 = vld [vmem:[#allocation2 + $0xd8] sm:$0xff]
      %v1192 = vld [vmem:[#allocation2 + $0xe0] sm:$0x3]
      %v1193 = vld [vmem:[#allocation2 + $0xe8] sm:$0x3]
      %v1194 = vld [vmem:[#allocation2 + $0xf0] sm:$0xfc]
      %v1195 = vld [vmem:[#allocation2 + $0xf8] sm:$0xfc]
      %v1196 = vld [vmem:[#allocation2 + $0x100] sm:$0xff]
      %v1197 = vld [vmem:[#allocation2 + $0x108] sm:$0xff]
      %v1198 = vld [vmem:[#allocation2 + $0x110] sm:$0x3]
      %v1199 = vld [vmem:[#allocation2 + $0x118] sm:$0x3]
      %v1200 = vld [vmem:[#allocation2 + $0x120] sm:$0xfc]
      %v1201 = vld [vmem:[#allocation2 + $0x128] sm:$0xfc]
      %v1202 = vld [vmem:[#allocation2 + $0x130] sm:$0xff]
      %v1203 = vld [vmem:[#allocation2 + $0x138] sm:$0xff]
      %v1204 = vld [vmem:[#allocation2 + $0x140] sm:$0x3]
      %v1205 = vld [vmem:[#allocation2 + $0x148] sm:$0x3]
      %v1206 = vld [vmem:[#allocation2 + $0x150] sm:$0xfc]
      %v1207 = vld [vmem:[#allocation2 + $0x158] sm:$0xfc]
      %v1208 = vld [vmem:[#allocation2 + $0x160] sm:$0xff]
      %v1209 = vld [vmem:[#allocation2 + $0x168] sm:$0xff]
      %v1210 = vld [vmem:[#allocation2 + $0x170] sm:$0x3]
      %v1211 = vld [vmem:[#allocation2 + $0x178] sm:$0x3]
      %vm1260 = vcmask 1045504
      %v1261 = vrot.slane %v1164, 2
      %v1262 = vrot.slane %v1166, 2
      %v1263 = vsel %vm1260, %v1261, %v1262
      %v1264 = vrot.slane %v1165, 2
      %v1265 = vrot.slane %v1167, 2
      %v1266 = vsel %vm1260, %v1264, %v1265
      %v1267 = vrot.slane %v1168, 2
      %v1268 = vsel %vm1260, %v1262, %v1267
      %v1269 = vrot.slane %v1169, 2
      %v1270 = vsel %vm1260, %v1265, %v1269
      %v1271 = vrot.slane %v1170, 2
      %v1272 = vrot.slane %v1172, 2
      %v1273 = vsel %vm1260, %v1271, %v1272
      %v1274 = vrot.slane %v1171, 2
      %v1275 = vrot.slane %v1173, 2
      %v1276 = vsel %vm1260, %v1274, %v1275
      %v1277 = vrot.slane %v1174, 2
      %v1278 = vsel %vm1260, %v1272, %v1277
      %v1279 = vrot.slane %v1175, 2
      %v1280 = vsel %vm1260, %v1275, %v1279
      %v1281 = vrot.slane %v1176, 2
      %v1282 = vrot.slane %v1178, 2
      %v1283 = vsel %vm1260, %v1281, %v1282
      %v1284 = vrot.slane %v1177, 2
      %v1285 = vrot.slane %v1179, 2
      %v1286 = vsel %vm1260, %v1284, %v1285
      %v1287 = vrot.slane %v1180, 2
      %v1288 = vsel %vm1260, %v1282, %v1287
      %v1289 = vrot.slane %v1181, 2
      %v1290 = vsel %vm1260, %v1285, %v1289
      %v1291 = vrot.slane %v1182, 2
      %v1292 = vrot.slane %v1184, 2
      %v1293 = vsel %vm1260, %v1291, %v1292
      %v1294 = vrot.slane %v1183, 2
      %v1295 = vrot.slane %v1185, 2
      %v1296 = vsel %vm1260, %v1294, %v1295
      %v1297 = vrot.slane %v1186, 2
      %v1298 = vsel %vm1260, %v1292, %v1297
      %v1299 = vrot.slane %v1187, 2
      %v1300 = vsel %vm1260, %v1295, %v1299
      %v1301 = vrot.slane %v1188, 2
      %v1302 = vrot.slane %v1190, 2
      %v1303 = vsel %vm1260, %v1301, %v1302
      %v1304 = vrot.slane %v1189, 2
      %v1305 = vrot.slane %v1191, 2
      %v1306 = vsel %vm1260, %v1304, %v1305
      %v1307 = vrot.slane %v1192, 2
      %v1308 = vsel %vm1260, %v1302, %v1307
      %v1309 = vrot.slane %v1193, 2
      %v1310 = vsel %vm1260, %v1305, %v1309
      %v1311 = vrot.slane %v1194, 2
      %v1312 = vrot.slane %v1196, 2
      %v1313 = vsel %vm1260, %v1311, %v1312
      %v1314 = vrot.slane %v1195, 2
      %v1315 = vrot.slane %v1197, 2
      %v1316 = vsel %vm1260, %v1314, %v1315
      %v1317 = vrot.slane %v1198, 2
      %v1318 = vsel %vm1260, %v1312, %v1317
      %v1319 = vrot.slane %v1199, 2
      %v1320 = vsel %vm1260, %v1315, %v1319
      %v1321 = vrot.slane %v1200, 2
      %v1322 = vrot.slane %v1202, 2
      %v1323 = vsel %vm1260, %v1321, %v1322
      %v1324 = vrot.slane %v1201, 2
      %v1325 = vrot.slane %v1203, 2
      %v1326 = vsel %vm1260, %v1324, %v1325
      %v1327 = vrot.slane %v1204, 2
      %v1328 = vsel %vm1260, %v1322, %v1327
      %v1329 = vrot.slane %v1205, 2
      %v1330 = vsel %vm1260, %v1325, %v1329
      %v1331 = vrot.slane %v1206, 2
      %v1332 = vrot.slane %v1208, 2
      %v1333 = vsel %vm1260, %v1331, %v1332
      %v1334 = vrot.slane %v1207, 2
      %v1335 = vrot.slane %v1209, 2
      %v1336 = vsel %vm1260, %v1334, %v1335
      %v1337 = vrot.slane %v1210, 2
      %v1338 = vsel %vm1260, %v1332, %v1337
      %v1339 = vrot.slane %v1211, 2
      %v1340 = vsel %vm1260, %v1335, %v1339
      %s1373 = scalar_lea.vmem %s3, 256
      %v1374 = vld [vmem:[%s1373] sm:$0xff]
      %v1375 = vld [vmem:[%s1373 + $0x8] sm:$0xff]
      %v1376 = vld [vmem:[%s1373 + $0x10] sm:$0xff]
      %v1377 = vld [vmem:[%s1373 + $0x18] sm:$0xff]
      %v1378 = vld [vmem:[%s1373 + $0x20] sm:$0xff]
      %v1379 = vld [vmem:[%s1373 + $0x28] sm:$0xff]
      %v1380 = vld [vmem:[%s1373 + $0x30] sm:$0xff]
      %v1381 = vld [vmem:[%s1373 + $0x38] sm:$0xff]
      %v1382 = vld [vmem:[%s1373 + $0x40] sm:$0xff]
      %v1383 = vld [vmem:[%s1373 + $0x48] sm:$0xff]
      %v1384 = vld [vmem:[%s1373 + $0x50] sm:$0xff]
      %v1385 = vld [vmem:[%s1373 + $0x58] sm:$0xff]
      %v1386 = vld [vmem:[%s1373 + $0x60] sm:$0xff]
      %v1387 = vld [vmem:[%s1373 + $0x68] sm:$0xff]
      %v1388 = vld [vmem:[%s1373 + $0x70] sm:$0xff]
      %v1389 = vld [vmem:[%s1373 + $0x78] sm:$0xff]
      %v1390 = vld [vmem:[%s1373 + $0x80] sm:$0xff]
      %v1391 = vld [vmem:[%s1373 + $0x88] sm:$0xff]
      %v1392 = vld [vmem:[%s1373 + $0x90] sm:$0xff]
      %v1393 = vld [vmem:[%s1373 + $0x98] sm:$0xff]
      %v1394 = vld [vmem:[%s1373 + $0xa0] sm:$0xff]
      %v1395 = vld [vmem:[%s1373 + $0xa8] sm:$0xff]
      %v1396 = vld [vmem:[%s1373 + $0xb0] sm:$0xff]
      %v1397 = vld [vmem:[%s1373 + $0xb8] sm:$0xff]
      %v1398 = vld [vmem:[%s1373 + $0xc0] sm:$0xff]
      %v1399 = vld [vmem:[%s1373 + $0xc8] sm:$0xff]
      %v1400 = vld [vmem:[%s1373 + $0xd0] sm:$0xff]
      %v1401 = vld [vmem:[%s1373 + $0xd8] sm:$0xff]
      %v1402 = vld [vmem:[%s1373 + $0xe0] sm:$0xff]
      %v1403 = vld [vmem:[%s1373 + $0xe8] sm:$0xff]
      %v1404 = vld [vmem:[%s1373 + $0xf0] sm:$0xff]
      %v1405 = vld [vmem:[%s1373 + $0xf8] sm:$0xff]
      %1406 = vmatprep.subr.mxu0 0.0
      %1407 = vmatpush1.msra.mxu0 %v1374
      %1408 = vmatprep.subr.mxu0 0.0
      %1409 = vmatpush1.msra.mxu0 %v1375
      %1410 = vmatprep.subr.mxu0 0.0
      %1411 = vmatpush1.msra.mxu0 %v1376
      %1412 = vmatprep.subr.mxu0 0.0
      %1413 = vmatpush1.msra.mxu0 %v1377
      %1414 = vmatprep.subr.mxu0 0.0
      %1415 = vmatpush1.msra.mxu0 %v1378
      %1416 = vmatprep.subr.mxu0 0.0
      %1417 = vmatpush1.msra.mxu0 %v1379
      %1418 = vmatprep.subr.mxu0 0.0
      %1419 = vmatpush1.msra.mxu0 %v1380
      %1420 = vmatprep.subr.mxu0 0.0
      %1421 = vmatpush1.msra.mxu0 %v1381
      %1422 = vmatprep.subr.mxu0 0.0
      %1423 = vmatpush1.msra.mxu0 %v1382
      %1424 = vmatprep.subr.mxu0 0.0
      %1425 = vmatpush1.msra.mxu0 %v1383
      %1426 = vmatprep.subr.mxu0 0.0
      %1427 = vmatpush1.msra.mxu0 %v1384
      %1428 = vmatprep.subr.mxu0 0.0
      %1429 = vmatpush1.msra.mxu0 %v1385
      %1430 = vmatprep.subr.mxu0 0.0
      %1431 = vmatpush1.msra.mxu0 %v1386
      %1432 = vmatprep.subr.mxu0 0.0
      %1433 = vmatpush1.msra.mxu0 %v1387
      %1434 = vmatprep.subr.mxu0 0.0
      %1435 = vmatpush1.msra.mxu0 %v1388
      %1436 = vmatprep.subr.mxu0 0.0
      %1437 = vmatpush1.msra.mxu0 %v1389
      %1438 = vmatprep.subr.mxu0 0.0
      %1439 = vmatpush1.msra.mxu0 %v1390
      %1440 = vmatprep.subr.mxu0 0.0
      %1441 = vmatpush1.msra.mxu0 %v1391
      %1442 = vmatprep.subr.mxu0 0.0
      %1443 = vmatpush1.msra.mxu0 %v1392
      %1444 = vmatprep.subr.mxu0 0.0
      %1445 = vmatpush1.msra.mxu0 %v1393
      %1446 = vmatprep.subr.mxu0 0.0
      %1447 = vmatpush1.msra.mxu0 %v1394
      %1448 = vmatprep.subr.mxu0 0.0
      %1449 = vmatpush1.msra.mxu0 %v1395
      %1450 = vmatprep.subr.mxu0 0.0
      %1451 = vmatpush1.msra.mxu0 %v1396
      %1452 = vmatprep.subr.mxu0 0.0
      %1453 = vmatpush1.msra.mxu0 %v1397
      %1454 = vmatprep.subr.mxu0 0.0
      %1455 = vmatpush1.msra.mxu0 %v1398
      %1456 = vmatprep.subr.mxu0 0.0
      %1457 = vmatpush1.msra.mxu0 %v1399
      %1458 = vmatprep.subr.mxu0 0.0
      %1459 = vmatpush1.msra.mxu0 %v1400
      %1460 = vmatprep.subr.mxu0 0.0
      %1461 = vmatpush1.msra.mxu0 %v1401
      %1462 = vmatprep.subr.mxu0 0.0
      %1463 = vmatpush1.msra.mxu0 %v1402
      %1464 = vmatprep.subr.mxu0 0.0
      %1465 = vmatpush1.msra.mxu0 %v1403
      %1466 = vmatprep.subr.mxu0 0.0
      %1467 = vmatpush1.msra.mxu0 %v1404
      %1468 = vmatprep.subr.mxu0 0.0
      %1469 = vmatpush1.msra.mxu0 %v1405
      %1470 = vmatprep.mubr.f32.mxu0 %v1266
      %1471 = vmatmul.mubr.f32.gmra.mrb[0].mxu0 %v1263
      %v1472 = vpop.f32.mrb[0].mxu0
      %v1473 = vadd.f32 0.0, %v1472
      %v1474 = vpop.f32.mrb[0].mxu0
      %1475 = vmatprep.mubr.f32.mxu0 %v1270
      %1476 = vmatmul.mubr.f32.gmra.mrb[0].mxu0 %v1268
      %v1477 = vpop.f32.mrb[0].mxu0
      %v1478 = vadd.f32 0.0, %v1477
      %v1479 = vpop.f32.mrb[0].mxu0
      %1480 = vmatprep.mubr.f32.mxu0 %v1276
      %1481 = vmatmul.mubr.f32.gmra.mrb[0].mxu0 %v1273
      %v1482 = vpop.f32.mrb[0].mxu0
      %v1483 = vadd.f32 0.0, %v1482
      %v1484 = vpop.f32.mrb[0].mxu0
      %1485 = vmatprep.mubr.f32.mxu0 %v1280
      %1486 = vmatmul.mubr.f32.gmra.mrb[0].mxu0 %v1278
      %v1487 = vpop.f32.mrb[0].mxu0
      %v1488 = vadd.f32 0.0, %v1487
      %v1489 = vpop.f32.mrb[0].mxu0
      %1490 = vmatprep.mubr.f32.mxu0 %v1286
      %1491 = vmatmul.mubr.f32.gmra.mrb[0].mxu0 %v1283
      %v1492 = vpop.f32.mrb[0].mxu0
      %v1493 = vadd.f32 0.0, %v1492
      %v1494 = vpop.f32.mrb[0].mxu0
      %1495 = vmatprep.mubr.f32.mxu0 %v1290
      %1496 = vmatmul.mubr.f32.gmra.mrb[0].mxu0 %v1288
      %v1497 = vpop.f32.mrb[0].mxu0
      %v1498 = vadd.f32 0.0, %v1497
      %v1499 = vpop.f32.mrb[0].mxu0
      %1500 = vmatprep.mubr.f32.mxu0 %v1296
      %1501 = vmatmul.mubr.f32.gmra.mrb[0].mxu0 %v1293
      %v1502 = vpop.f32.mrb[0].mxu0
      %v1503 = vadd.f32 0.0, %v1502
      %v1504 = vpop.f32.mrb[0].mxu0
      %1505 = vmatprep.mubr.f32.mxu0 %v1300
      %1506 = vmatmul.mubr.f32.gmra.mrb[0].mxu0 %v1298
      %v1507 = vpop.f32.mrb[0].mxu0
      %v1508 = vadd.f32 0.0, %v1507
      %v1509 = vpop.f32.mrb[0].mxu0
      %1510 = vmatprep.mubr.f32.mxu0 %v1306
      %1511 = vmatmul.mubr.f32.gmra.mrb[0].mxu0 %v1303
      %v1512 = vpop.f32.mrb[0].mxu0
      %v1513 = vadd.f32 0.0, %v1512
      %v1514 = vpop.f32.mrb[0].mxu0
      %1515 = vmatprep.mubr.f32.mxu0 %v1310
      %1516 = vmatmul.mubr.f32.gmra.mrb[0].mxu0 %v1308
      %v1517 = vpop.f32.mrb[0].mxu0
      %v1518 = vadd.f32 0.0, %v1517
      %v1519 = vpop.f32.mrb[0].mxu0
      %1520 = vmatprep.mubr.f32.mxu0 %v1316
      %1521 = vmatmul.mubr.f32.gmra.mrb[0].mxu0 %v1313
      %v1522 = vpop.f32.mrb[0].mxu0
      %v1523 = vadd.f32 0.0, %v1522
      %v1524 = vpop.f32.mrb[0].mxu0
      %1525 = vmatprep.mubr.f32.mxu0 %v1320
      %1526 = vmatmul.mubr.f32.gmra.mrb[0].mxu0 %v1318
      %v1527 = vpop.f32.mrb[0].mxu0
      %v1528 = vadd.f32 0.0, %v1527
      %v1529 = vpop.f32.mrb[0].mxu0
      %1530 = vmatprep.mubr.f32.mxu0 %v1326
      %1531 = vmatmul.mubr.f32.gmra.mrb[0].mxu0 %v1323
      %v1532 = vpop.f32.mrb[0].mxu0
      %v1533 = vadd.f32 0.0, %v1532
      %v1534 = vpop.f32.mrb[0].mxu0
      %1535 = vmatprep.mubr.f32.mxu0 %v1330
      %1536 = vmatmul.mubr.f32.gmra.mrb[0].mxu0 %v1328
      %v1537 = vpop.f32.mrb[0].mxu0
      %v1538 = vadd.f32 0.0, %v1537
      %v1539 = vpop.f32.mrb[0].mxu0
      %1540 = vmatprep.mubr.f32.mxu0 %v1336
      %1541 = vmatmul.mubr.f32.gmra.mrb[0].mxu0 %v1333
      %v1542 = vpop.f32.mrb[0].mxu0
      %v1543 = vadd.f32 0.0, %v1542
      %v1544 = vpop.f32.mrb[0].mxu0
      %1545 = vmatprep.mubr.f32.mxu0 %v1340
      %1546 = vmatmul.mubr.f32.gmra.mrb[0].mxu0 %v1338
      %v1547 = vpop.f32.mrb[0].mxu0
      %v1548 = vadd.f32 0.0, %v1547
      %v1549 = vpop.f32.mrb[0].mxu0
      %1550 = vdwg.mxu0
      %v1551 = vadd.f32 %v1148, %v1473
      %v1552 = vadd.f32 %v1149, %v1478
      %v1553 = vadd.f32 %v1150, %v1483
      %v1554 = vadd.f32 %v1151, %v1488
      %v1555 = vadd.f32 %v1152, %v1493
      %v1556 = vadd.f32 %v1153, %v1498
      %v1557 = vadd.f32 %v1154, %v1503
      %v1558 = vadd.f32 %v1155, %v1508
      %v1559 = vadd.f32 %v1156, %v1513
      %v1560 = vadd.f32 %v1157, %v1518
      %v1561 = vadd.f32 %v1158, %v1523
      %v1562 = vadd.f32 %v1159, %v1528
      %v1563 = vadd.f32 %v1160, %v1533
      %v1564 = vadd.f32 %v1161, %v1538
      %v1565 = vadd.f32 %v1162, %v1543
      %v1566 = vadd.f32 %v1163, %v1548
      %v1567 = vld [vmem:[#allocation2] sm:$0xf0]
      %v1568 = vld [vmem:[#allocation2 + $0x8] sm:$0xf0]
      %v1569 = vld [vmem:[#allocation2 + $0x20] sm:$0xf]
      %v1570 = vld [vmem:[#allocation2 + $0x28] sm:$0xf]
      %v1571 = vld [vmem:[#allocation2 + $0x30] sm:$0xf0]
      %v1572 = vld [vmem:[#allocation2 + $0x38] sm:$0xf0]
      %v1573 = vld [vmem:[#allocation2 + $0x50] sm:$0xf]
      %v1574 = vld [vmem:[#allocation2 + $0x58] sm:$0xf]
      %v1575 = vld [vmem:[#allocation2 + $0x60] sm:$0xf0]
      %v1576 = vld [vmem:[#allocation2 + $0x68] sm:$0xf0]
      %v1577 = vld [vmem:[#allocation2 + $0x80] sm:$0xf]
      %v1578 = vld [vmem:[#allocation2 + $0x88] sm:$0xf]
      %v1579 = vld [vmem:[#allocation2 + $0x90] sm:$0xf0]
      %v1580 = vld [vmem:[#allocation2 + $0x98] sm:$0xf0]
      %v1581 = vld [vmem:[#allocation2 + $0xb0] sm:$0xf]
      %v1582 = vld [vmem:[#allocation2 + $0xb8] sm:$0xf]
      %v1583 = vld [vmem:[#allocation2 + $0xc0] sm:$0xf0]
      %v1584 = vld [vmem:[#allocation2 + $0xc8] sm:$0xf0]
      %v1585 = vld [vmem:[#allocation2 + $0xe0] sm:$0xf]
      %v1586 = vld [vmem:[#allocation2 + $0xe8] sm:$0xf]
      %v1587 = vld [vmem:[#allocation2 + $0xf0] sm:$0xf0]
      %v1588 = vld [vmem:[#allocation2 + $0xf8] sm:$0xf0]
      %v1589 = vld [vmem:[#allocation2 + $0x110] sm:$0xf]
      %v1590 = vld [vmem:[#allocation2 + $0x118] sm:$0xf]
      %v1591 = vld [vmem:[#allocation2 + $0x120] sm:$0xf0]
      %v1592 = vld [vmem:[#allocation2 + $0x128] sm:$0xf0]
      %v1593 = vld [vmem:[#allocation2 + $0x140] sm:$0xf]
      %v1594 = vld [vmem:[#allocation2 + $0x148] sm:$0xf]
      %v1595 = vld [vmem:[#allocation2 + $0x150] sm:$0xf0]
      %v1596 = vld [vmem:[#allocation2 + $0x158] sm:$0xf0]
      %v1597 = vld [vmem:[#allocation2 + $0x170] sm:$0xf]
      %v1598 = vld [vmem:[#allocation2 + $0x178] sm:$0xf]
      %v1631 = vrot.slane %v1567, 4
      %v1632 = vrot.slane %v1166, 4
      %v1633 = vsel %vm421, %v1631, %v1632
      %v1634 = vrot.slane %v1568, 4
      %v1635 = vrot.slane %v1167, 4
      %v1636 = vsel %vm421, %v1634, %v1635
      %v1637 = vrot.slane %v1569, 4
      %v1638 = vsel %vm421, %v1632, %v1637
      %v1639 = vrot.slane %v1570, 4
      %v1640 = vsel %vm421, %v1635, %v1639
      %v1641 = vrot.slane %v1571, 4
      %v1642 = vrot.slane %v1172, 4
      %v1643 = vsel %vm421, %v1641, %v1642
      %v1644 = vrot.slane %v1572, 4
      %v1645 = vrot.slane %v1173, 4
      %v1646 = vsel %vm421, %v1644, %v1645
      %v1647 = vrot.slane %v1573, 4
      %v1648 = vsel %vm421, %v1642, %v1647
      %v1649 = vrot.slane %v1574, 4
      %v1650 = vsel %vm421, %v1645, %v1649
      %v1651 = vrot.slane %v1575, 4
      %v1652 = vrot.slane %v1178, 4
      %v1653 = vsel %vm421, %v1651, %v1652
      %v1654 = vrot.slane %v1576, 4
      %v1655 = vrot.slane %v1179, 4
      %v1656 = vsel %vm421, %v1654, %v1655
      %v1657 = vrot.slane %v1577, 4
      %v1658 = vsel %vm421, %v1652, %v1657
      %v1659 = vrot.slane %v1578, 4
      %v1660 = vsel %vm421, %v1655, %v1659
      %v1661 = vrot.slane %v1579, 4
      %v1662 = vrot.slane %v1184, 4
      %v1663 = vsel %vm421, %v1661, %v1662
      %v1664 = vrot.slane %v1580, 4
      %v1665 = vrot.slane %v1185, 4
      %v1666 = vsel %vm421, %v1664, %v1665
      %v1667 = vrot.slane %v1581, 4
      %v1668 = vsel %vm421, %v1662, %v1667
      %v1669 = vrot.slane %v1582, 4
      %v1670 = vsel %vm421, %v1665, %v1669
      %v1671 = vrot.slane %v1583, 4
      %v1672 = vrot.slane %v1190, 4
      %v1673 = vsel %vm421, %v1671, %v1672
      %v1674 = vrot.slane %v1584, 4
      %v1675 = vrot.slane %v1191, 4
      %v1676 = vsel %vm421, %v1674, %v1675
      %v1677 = vrot.slane %v1585, 4
      %v1678 = vsel %vm421, %v1672, %v1677
      %v1679 = vrot.slane %v1586, 4
      %v1680 = vsel %vm421, %v1675, %v1679
      %v1681 = vrot.slane %v1587, 4
      %v1682 = vrot.slane %v1196, 4
      %v1683 = vsel %vm421, %v1681, %v1682
      %v1684 = vrot.slane %v1588, 4
      %v1685 = vrot.slane %v1197, 4
      %v1686 = vsel %vm421, %v1684, %v1685
      %v1687 = vrot.slane %v1589, 4
      %v1688 = vsel %vm421, %v1682, %v1687
      %v1689 = vrot.slane %v1590, 4
      %v1690 = vsel %vm421, %v1685, %v1689
      %v1691 = vrot.slane %v1591, 4
      %v1692 = vrot.slane %v1202, 4
      %v1693 = vsel %vm421, %v1691, %v1692
      %v1694 = vrot.slane %v1592, 4
      %v1695 = vrot.slane %v1203, 4
      %v1696 = vsel %vm421, %v1694, %v1695
      %v1697 = vrot.slane %v1593, 4
      %v1698 = vsel %vm421, %v1692, %v1697
      %v1699 = vrot.slane %v1594, 4
      %v1700 = vsel %vm421, %v1695, %v1699
      %v1701 = vrot.slane %v1595, 4
      %v1702 = vrot.slane %v1208, 4
      %v1703 = vsel %vm421, %v1701, %v1702
      %v1704 = vrot.slane %v1596, 4
      %v1705 = vrot.slane %v1209, 4
      %v1706 = vsel %vm421, %v1704, %v1705
      %v1707 = vrot.slane %v1597, 4
      %v1708 = vsel %vm421, %v1702, %v1707
      %v1709 = vrot.slane %v1598, 4
      %v1710 = vsel %vm421, %v1705, %v1709
      %s1743 = scalar_lea.vmem %s3, 512
      %v1744 = vld [vmem:[%s1743] sm:$0xff]
      %v1745 = vld [vmem:[%s1743 + $0x8] sm:$0xff]
      %v1746 = vld [vmem:[%s1743 + $0x10] sm:$0xff]
      %v1747 = vld [vmem:[%s1743 + $0x18] sm:$0xff]
      %v1748 = vld [vmem:[%s1743 + $0x20] sm:$0xff]
      %v1749 = vld [vmem:[%s1743 + $0x28] sm:$0xff]
      %v1750 = vld [vmem:[%s1743 + $0x30] sm:$0xff]
      %v1751 = vld [vmem:[%s1743 + $0x38] sm:$0xff]
      %v1752 = vld [vmem:[%s1743 + $0x40] sm:$0xff]
      %v1753 = vld [vmem:[%s1743 + $0x48] sm:$0xff]
      %v1754 = vld [vmem:[%s1743 + $0x50] sm:$0xff]
      %v1755 = vld [vmem:[%s1743 + $0x58] sm:$0xff]
      %v1756 = vld [vmem:[%s1743 + $0x60] sm:$0xff]
      %v1757 = vld [vmem:[%s1743 + $0x68] sm:$0xff]
      %v1758 = vld [vmem:[%s1743 + $0x70] sm:$0xff]
      %v1759 = vld [vmem:[%s1743 + $0x78] sm:$0xff]
      %v1760 = vld [vmem:[%s1743 + $0x80] sm:$0xff]
      %v1761 = vld [vmem:[%s1743 + $0x88] sm:$0xff]
      %v1762 = vld [vmem:[%s1743 + $0x90] sm:$0xff]
      %v1763 = vld [vmem:[%s1743 + $0x98] sm:$0xff]
      %v1764 = vld [vmem:[%s1743 + $0xa0] sm:$0xff]
      %v1765 = vld [vmem:[%s1743 + $0xa8] sm:$0xff]
      %v1766 = vld [vmem:[%s1743 + $0xb0] sm:$0xff]
      %v1767 = vld [vmem:[%s1743 + $0xb8] sm:$0xff]
      %v1768 = vld [vmem:[%s1743 + $0xc0] sm:$0xff]
      %v1769 = vld [vmem:[%s1743 + $0xc8] sm:$0xff]
      %v1770 = vld [vmem:[%s1743 + $0xd0] sm:$0xff]
      %v1771 = vld [vmem:[%s1743 + $0xd8] sm:$0xff]
      %v1772 = vld [vmem:[%s1743 + $0xe0] sm:$0xff]
      %v1773 = vld [vmem:[%s1743 + $0xe8] sm:$0xff]
      %v1774 = vld [vmem:[%s1743 + $0xf0] sm:$0xff]
      %v1775 = vld [vmem:[%s1743 + $0xf8] sm:$0xff]
      %1776 = vmatprep.subr.mxu0 0.0
      %1777 = vmatpush1.msra.mxu0 %v1744
      %1778 = vmatprep.subr.mxu0 0.0
      %1779 = vmatpush1.msra.mxu0 %v1745
      %1780 = vmatprep.subr.mxu0 0.0
      %1781 = vmatpush1.msra.mxu0 %v1746
      %1782 = vmatprep.subr.mxu0 0.0
      %1783 = vmatpush1.msra.mxu0 %v1747
      %1784 = vmatprep.subr.mxu0 0.0
      %1785 = vmatpush1.msra.mxu0 %v1748
      %1786 = vmatprep.subr.mxu0 0.0
      %1787 = vmatpush1.msra.mxu0 %v1749
      %1788 = vmatprep.subr.mxu0 0.0
      %1789 = vmatpush1.msra.mxu0 %v1750
      %1790 = vmatprep.subr.mxu0 0.0
      %1791 = vmatpush1.msra.mxu0 %v1751
      %1792 = vmatprep.subr.mxu0 0.0
      %1793 = vmatpush1.msra.mxu0 %v1752
      %1794 = vmatprep.subr.mxu0 0.0
      %1795 = vmatpush1.msra.mxu0 %v1753
      %1796 = vmatprep.subr.mxu0 0.0
      %1797 = vmatpush1.msra.mxu0 %v1754
      %1798 = vmatprep.subr.mxu0 0.0
      %1799 = vmatpush1.msra.mxu0 %v1755
      %1800 = vmatprep.subr.mxu0 0.0
      %1801 = vmatpush1.msra.mxu0 %v1756
      %1802 = vmatprep.subr.mxu0 0.0
      %1803 = vmatpush1.msra.mxu0 %v1757
      %1804 = vmatprep.subr.mxu0 0.0
      %1805 = vmatpush1.msra.mxu0 %v1758
      %1806 = vmatprep.subr.mxu0 0.0
      %1807 = vmatpush1.msra.mxu0 %v1759
      %1808 = vmatprep.subr.mxu0 0.0
      %1809 = vmatpush1.msra.mxu0 %v1760
      %1810 = vmatprep.subr.mxu0 0.0
      %1811 = vmatpush1.msra.mxu0 %v1761
      %1812 = vmatprep.subr.mxu0 0.0
      %1813 = vmatpush1.msra.mxu0 %v1762
      %1814 = vmatprep.subr.mxu0 0.0
      %1815 = vmatpush1.msra.mxu0 %v1763
      %1816 = vmatprep.subr.mxu0 0.0
      %1817 = vmatpush1.msra.mxu0 %v1764
      %1818 = vmatprep.subr.mxu0 0.0
      %1819 = vmatpush1.msra.mxu0 %v1765
      %1820 = vmatprep.subr.mxu0 0.0
      %1821 = vmatpush1.msra.mxu0 %v1766
      %1822 = vmatprep.subr.mxu0 0.0
      %1823 = vmatpush1.msra.mxu0 %v1767
      %1824 = vmatprep.subr.mxu0 0.0
      %1825 = vmatpush1.msra.mxu0 %v1768
      %1826 = vmatprep.subr.mxu0 0.0
      %1827 = vmatpush1.msra.mxu0 %v1769
      %1828 = vmatprep.subr.mxu0 0.0
      %1829 = vmatpush1.msra.mxu0 %v1770
      %1830 = vmatprep.subr.mxu0 0.0
      %1831 = vmatpush1.msra.mxu0 %v1771
      %1832 = vmatprep.subr.mxu0 0.0
      %1833 = vmatpush1.msra.mxu0 %v1772
      %1834 = vmatprep.subr.mxu0 0.0
      %1835 = vmatpush1.msra.mxu0 %v1773
      %1836 = vmatprep.subr.mxu0 0.0
      %1837 = vmatpush1.msra.mxu0 %v1774
      %1838 = vmatprep.subr.mxu0 0.0
      %1839 = vmatpush1.msra.mxu0 %v1775
      %1840 = vmatprep.mubr.f32.mxu0 %v1636
      %1841 = vmatmul.mubr.f32.gmra.mrb[0].mxu0 %v1633
      %v1842 = vpop.f32.mrb[0].mxu0
      %v1843 = vadd.f32 0.0, %v1842
      %v1844 = vpop.f32.mrb[0].mxu0
      %1845 = vmatprep.mubr.f32.mxu0 %v1640
      %1846 = vmatmul.mubr.f32.gmra.mrb[0].mxu0 %v1638
      %v1847 = vpop.f32.mrb[0].mxu0
      %v1848 = vadd.f32 0.0, %v1847
      %v1849 = vpop.f32.mrb[0].mxu0
      %1850 = vmatprep.mubr.f32.mxu0 %v1646
      %1851 = vmatmul.mubr.f32.gmra.mrb[0].mxu0 %v1643
      %v1852 = vpop.f32.mrb[0].mxu0
      %v1853 = vadd.f32 0.0, %v1852
      %v1854 = vpop.f32.mrb[0].mxu0
      %1855 = vmatprep.mubr.f32.mxu0 %v1650
      %1856 = vmatmul.mubr.f32.gmra.mrb[0].mxu0 %v1648
      %v1857 = vpop.f32.mrb[0].mxu0
      %v1858 = vadd.f32 0.0, %v1857
      %v1859 = vpop.f32.mrb[0].mxu0
      %1860 = vmatprep.mubr.f32.mxu0 %v1656
      %1861 = vmatmul.mubr.f32.gmra.mrb[0].mxu0 %v1653
      %v1862 = vpop.f32.mrb[0].mxu0
      %v1863 = vadd.f32 0.0, %v1862
      %v1864 = vpop.f32.mrb[0].mxu0
      %1865 = vmatprep.mubr.f32.mxu0 %v1660
      %1866 = vmatmul.mubr.f32.gmra.mrb[0].mxu0 %v1658
      %v1867 = vpop.f32.mrb[0].mxu0
      %v1868 = vadd.f32 0.0, %v1867
      %v1869 = vpop.f32.mrb[0].mxu0
      %1870 = vmatprep.mubr.f32.mxu0 %v1666
      %1871 = vmatmul.mubr.f32.gmra.mrb[0].mxu0 %v1663
      %v1872 = vpop.f32.mrb[0].mxu0
      %v1873 = vadd.f32 0.0, %v1872
      %v1874 = vpop.f32.mrb[0].mxu0
      %1875 = vmatprep.mubr.f32.mxu0 %v1670
      %1876 = vmatmul.mubr.f32.gmra.mrb[0].mxu0 %v1668
      %v1877 = vpop.f32.mrb[0].mxu0
      %v1878 = vadd.f32 0.0, %v1877
      %v1879 = vpop.f32.mrb[0].mxu0
      %1880 = vmatprep.mubr.f32.mxu0 %v1676
      %1881 = vmatmul.mubr.f32.gmra.mrb[0].mxu0 %v1673
      %v1882 = vpop.f32.mrb[0].mxu0
      %v1883 = vadd.f32 0.0, %v1882
      %v1884 = vpop.f32.mrb[0].mxu0
      %1885 = vmatprep.mubr.f32.mxu0 %v1680
      %1886 = vmatmul.mubr.f32.gmra.mrb[0].mxu0 %v1678
      %v1887 = vpop.f32.mrb[0].mxu0
      %v1888 = vadd.f32 0.0, %v1887
      %v1889 = vpop.f32.mrb[0].mxu0
      %1890 = vmatprep.mubr.f32.mxu0 %v1686
      %1891 = vmatmul.mubr.f32.gmra.mrb[0].mxu0 %v1683
      %v1892 = vpop.f32.mrb[0].mxu0
      %v1893 = vadd.f32 0.0, %v1892
      %v1894 = vpop.f32.mrb[0].mxu0
      %1895 = vmatprep.mubr.f32.mxu0 %v1690
      %1896 = vmatmul.mubr.f32.gmra.mrb[0].mxu0 %v1688
      %v1897 = vpop.f32.mrb[0].mxu0
      %v1898 = vadd.f32 0.0, %v1897
      %v1899 = vpop.f32.mrb[0].mxu0
      %1900 = vmatprep.mubr.f32.mxu0 %v1696
      %1901 = vmatmul.mubr.f32.gmra.mrb[0].mxu0 %v1693
      %v1902 = vpop.f32.mrb[0].mxu0
      %v1903 = vadd.f32 0.0, %v1902
      %v1904 = vpop.f32.mrb[0].mxu0
      %1905 = vmatprep.mubr.f32.mxu0 %v1700
      %1906 = vmatmul.mubr.f32.gmra.mrb[0].mxu0 %v1698
      %v1907 = vpop.f32.mrb[0].mxu0
      %v1908 = vadd.f32 0.0, %v1907
      %v1909 = vpop.f32.mrb[0].mxu0
      %1910 = vmatprep.mubr.f32.mxu0 %v1706
      %1911 = vmatmul.mubr.f32.gmra.mrb[0].mxu0 %v1703
      %v1912 = vpop.f32.mrb[0].mxu0
      %v1913 = vadd.f32 0.0, %v1912
      %v1914 = vpop.f32.mrb[0].mxu0
      %1915 = vmatprep.mubr.f32.mxu0 %v1710
      %1916 = vmatmul.mubr.f32.gmra.mrb[0].mxu0 %v1708
      %v1917 = vpop.f32.mrb[0].mxu0
      %v1918 = vadd.f32 0.0, %v1917
      %v1919 = vpop.f32.mrb[0].mxu0
      %1920 = vdwg.mxu0
      %v1921 = vadd.f32 %v1551, %v1843
      %v1922 = vadd.f32 %v1552, %v1848
      %v1923 = vadd.f32 %v1553, %v1853
      %v1924 = vadd.f32 %v1554, %v1858
      %v1925 = vadd.f32 %v1555, %v1863
      %v1926 = vadd.f32 %v1556, %v1868
      %v1927 = vadd.f32 %v1557, %v1873
      %v1928 = vadd.f32 %v1558, %v1878
      %v1929 = vadd.f32 %v1559, %v1883
      %v1930 = vadd.f32 %v1560, %v1888
      %v1931 = vadd.f32 %v1561, %v1893
      %v1932 = vadd.f32 %v1562, %v1898
      %v1933 = vadd.f32 %v1563, %v1903
      %v1934 = vadd.f32 %v1564, %v1908
      %v1935 = vadd.f32 %v1565, %v1913
      %v1936 = vadd.f32 %v1566, %v1918
      %s1937 = scalar_lea.vmem [#allocation2], 96
      %v1938 = vld [vmem:[%s1937] sm:$0xff]
      %v1939 = vld [vmem:[%s1937 + $0x8] sm:$0xff]
      %v1940 = vld [vmem:[%s1937 + $0x10] sm:$0xff]
      %v1941 = vld [vmem:[%s1937 + $0x18] sm:$0xff]
      %v1942 = vld [vmem:[%s1937 + $0x30] sm:$0xff]
      %v1943 = vld [vmem:[%s1937 + $0x38] sm:$0xff]
      %v1944 = vld [vmem:[%s1937 + $0x40] sm:$0xff]
      %v1945 = vld [vmem:[%s1937 + $0x48] sm:$0xff]
      %v1946 = vld [vmem:[%s1937 + $0x60] sm:$0xff]
      %v1947 = vld [vmem:[%s1937 + $0x68] sm:$0xff]
      %v1948 = vld [vmem:[%s1937 + $0x70] sm:$0xff]
      %v1949 = vld [vmem:[%s1937 + $0x78] sm:$0xff]
      %v1950 = vld [vmem:[%s1937 + $0x90] sm:$0xff]
      %v1951 = vld [vmem:[%s1937 + $0x98] sm:$0xff]
      %v1952 = vld [vmem:[%s1937 + $0xa0] sm:$0xff]
      %v1953 = vld [vmem:[%s1937 + $0xa8] sm:$0xff]
      %v1954 = vld [vmem:[%s1937 + $0xc0] sm:$0xff]
      %v1955 = vld [vmem:[%s1937 + $0xc8] sm:$0xff]
      %v1956 = vld [vmem:[%s1937 + $0xd0] sm:$0xff]
      %v1957 = vld [vmem:[%s1937 + $0xd8] sm:$0xff]
      %v1958 = vld [vmem:[%s1937 + $0xf0] sm:$0xff]
      %v1959 = vld [vmem:[%s1937 + $0xf8] sm:$0xff]
      %v1960 = vld [vmem:[%s1937 + $0x100] sm:$0xff]
      %v1961 = vld [vmem:[%s1937 + $0x108] sm:$0xff]
      %v1962 = vld [vmem:[%s1937 + $0x120] sm:$0xff]
      %v1963 = vld [vmem:[%s1937 + $0x128] sm:$0xff]
      %v1964 = vld [vmem:[%s1937 + $0x130] sm:$0xff]
      %v1965 = vld [vmem:[%s1937 + $0x138] sm:$0xff]
      %v1966 = vld [vmem:[%s1937 + $0x150] sm:$0xff]
      %v1967 = vld [vmem:[%s1937 + $0x158] sm:$0xff]
      %v1968 = vld [vmem:[%s1937 + $0x160] sm:$0xff]
      %v1969 = vld [vmem:[%s1937 + $0x168] sm:$0xff]
      %s1970 = scalar_lea.vmem %s3, 768
      %v1971 = vld [vmem:[%s1970] sm:$0xff]
      %v1972 = vld [vmem:[%s1970 + $0x8] sm:$0xff]
      %v1973 = vld [vmem:[%s1970 + $0x10] sm:$0xff]
      %v1974 = vld [vmem:[%s1970 + $0x18] sm:$0xff]
      %v1975 = vld [vmem:[%s1970 + $0x20] sm:$0xff]
      %v1976 = vld [vmem:[%s1970 + $0x28] sm:$0xff]
      %v1977 = vld [vmem:[%s1970 + $0x30] sm:$0xff]
      %v1978 = vld [vmem:[%s1970 + $0x38] sm:$0xff]
      %v1979 = vld [vmem:[%s1970 + $0x40] sm:$0xff]
      %v1980 = vld [vmem:[%s1970 + $0x48] sm:$0xff]
      %v1981 = vld [vmem:[%s1970 + $0x50] sm:$0xff]
      %v1982 = vld [vmem:[%s1970 + $0x58] sm:$0xff]
      %v1983 = vld [vmem:[%s1970 + $0x60] sm:$0xff]
      %v1984 = vld [vmem:[%s1970 + $0x68] sm:$0xff]
      %v1985 = vld [vmem:[%s1970 + $0x70] sm:$0xff]
      %v1986 = vld [vmem:[%s1970 + $0x78] sm:$0xff]
      %v1987 = vld [vmem:[%s1970 + $0x80] sm:$0xff]
      %v1988 = vld [vmem:[%s1970 + $0x88] sm:$0xff]
      %v1989 = vld [vmem:[%s1970 + $0x90] sm:$0xff]
      %v1990 = vld [vmem:[%s1970 + $0x98] sm:$0xff]
      %v1991 = vld [vmem:[%s1970 + $0xa0] sm:$0xff]
      %v1992 = vld [vmem:[%s1970 + $0xa8] sm:$0xff]
      %v1993 = vld [vmem:[%s1970 + $0xb0] sm:$0xff]
      %v1994 = vld [vmem:[%s1970 + $0xb8] sm:$0xff]
      %v1995 = vld [vmem:[%s1970 + $0xc0] sm:$0xff]
      %v1996 = vld [vmem:[%s1970 + $0xc8] sm:$0xff]
      %v1997 = vld [vmem:[%s1970 + $0xd0] sm:$0xff]
      %v1998 = vld [vmem:[%s1970 + $0xd8] sm:$0xff]
      %v1999 = vld [vmem:[%s1970 + $0xe0] sm:$0xff]
      %v2000 = vld [vmem:[%s1970 + $0xe8] sm:$0xff]
      %v2001 = vld [vmem:[%s1970 + $0xf0] sm:$0xff]
      %v2002 = vld [vmem:[%s1970 + $0xf8] sm:$0xff]
      %2003 = vmatprep.subr.mxu0 0.0
      %2004 = vmatpush1.msra.mxu0 %v1971
      %2005 = vmatprep.subr.mxu0 0.0
      %2006 = vmatpush1.msra.mxu0 %v1972
      %2007 = vmatprep.subr.mxu0 0.0
      %2008 = vmatpush1.msra.mxu0 %v1973
      %2009 = vmatprep.subr.mxu0 0.0
      %2010 = vmatpush1.msra.mxu0 %v1974
      %2011 = vmatprep.subr.mxu0 0.0
      %2012 = vmatpush1.msra.mxu0 %v1975
      %2013 = vmatprep.subr.mxu0 0.0
      %2014 = vmatpush1.msra.mxu0 %v1976
      %2015 = vmatprep.subr.mxu0 0.0
      %2016 = vmatpush1.msra.mxu0 %v1977
      %2017 = vmatprep.subr.mxu0 0.0
      %2018 = vmatpush1.msra.mxu0 %v1978
      %2019 = vmatprep.subr.mxu0 0.0
      %2020 = vmatpush1.msra.mxu0 %v1979
      %2021 = vmatprep.subr.mxu0 0.0
      %2022 = vmatpush1.msra.mxu0 %v1980
      %2023 = vmatprep.subr.mxu0 0.0
      %2024 = vmatpush1.msra.mxu0 %v1981
      %2025 = vmatprep.subr.mxu0 0.0
      %2026 = vmatpush1.msra.mxu0 %v1982
      %2027 = vmatprep.subr.mxu0 0.0
      %2028 = vmatpush1.msra.mxu0 %v1983
      %2029 = vmatprep.subr.mxu0 0.0
      %2030 = vmatpush1.msra.mxu0 %v1984
      %2031 = vmatprep.subr.mxu0 0.0
      %2032 = vmatpush1.msra.mxu0 %v1985
      %2033 = vmatprep.subr.mxu0 0.0
      %2034 = vmatpush1.msra.mxu0 %v1986
      %2035 = vmatprep.subr.mxu0 0.0
      %2036 = vmatpush1.msra.mxu0 %v1987
      %2037 = vmatprep.subr.mxu0 0.0
      %2038 = vmatpush1.msra.mxu0 %v1988
      %2039 = vmatprep.subr.mxu0 0.0
      %2040 = vmatpush1.msra.mxu0 %v1989
      %2041 = vmatprep.subr.mxu0 0.0
      %2042 = vmatpush1.msra.mxu0 %v1990
      %2043 = vmatprep.subr.mxu0 0.0
      %2044 = vmatpush1.msra.mxu0 %v1991
      %2045 = vmatprep.subr.mxu0 0.0
      %2046 = vmatpush1.msra.mxu0 %v1992
      %2047 = vmatprep.subr.mxu0 0.0
      %2048 = vmatpush1.msra.mxu0 %v1993
      %2049 = vmatprep.subr.mxu0 0.0
      %2050 = vmatpush1.msra.mxu0 %v1994
      %2051 = vmatprep.subr.mxu0 0.0
      %2052 = vmatpush1.msra.mxu0 %v1995
      %2053 = vmatprep.subr.mxu0 0.0
      %2054 = vmatpush1.msra.mxu0 %v1996
      %2055 = vmatprep.subr.mxu0 0.0
      %2056 = vmatpush1.msra.mxu0 %v1997
      %2057 = vmatprep.subr.mxu0 0.0
      %2058 = vmatpush1.msra.mxu0 %v1998
      %2059 = vmatprep.subr.mxu0 0.0
      %2060 = vmatpush1.msra.mxu0 %v1999
      %2061 = vmatprep.subr.mxu0 0.0
      %2062 = vmatpush1.msra.mxu0 %v2000
      %2063 = vmatprep.subr.mxu0 0.0
      %2064 = vmatpush1.msra.mxu0 %v2001
      %2065 = vmatprep.subr.mxu0 0.0
      %2066 = vmatpush1.msra.mxu0 %v2002
      %2067 = vmatprep.mubr.f32.mxu0 %v1939
      %2068 = vmatmul.mubr.f32.gmra.mrb[0].mxu0 %v1938
      %v2069 = vpop.f32.mrb[0].mxu0
      %v2070 = vadd.f32 0.0, %v2069
      %v2071 = vpop.f32.mrb[0].mxu0
      %2072 = vmatprep.mubr.f32.mxu0 %v1941
      %2073 = vmatmul.mubr.f32.gmra.mrb[0].mxu0 %v1940
      %v2074 = vpop.f32.mrb[0].mxu0
      %v2075 = vadd.f32 0.0, %v2074
      %v2076 = vpop.f32.mrb[0].mxu0
      %2077 = vmatprep.mubr.f32.mxu0 %v1943
      %2078 = vmatmul.mubr.f32.gmra.mrb[0].mxu0 %v1942
      %v2079 = vpop.f32.mrb[0].mxu0
      %v2080 = vadd.f32 0.0, %v2079
      %v2081 = vpop.f32.mrb[0].mxu0
      %2082 = vmatprep.mubr.f32.mxu0 %v1945
      %2083 = vmatmul.mubr.f32.gmra.mrb[0].mxu0 %v1944
      %v2084 = vpop.f32.mrb[0].mxu0
      %v2085 = vadd.f32 0.0, %v2084
      %v2086 = vpop.f32.mrb[0].mxu0
      %2087 = vmatprep.mubr.f32.mxu0 %v1947
      %2088 = vmatmul.mubr.f32.gmra.mrb[0].mxu0 %v1946
      %v2089 = vpop.f32.mrb[0].mxu0
      %v2090 = vadd.f32 0.0, %v2089
      %v2091 = vpop.f32.mrb[0].mxu0
      %2092 = vmatprep.mubr.f32.mxu0 %v1949
      %2093 = vmatmul.mubr.f32.gmra.mrb[0].mxu0 %v1948
      %v2094 = vpop.f32.mrb[0].mxu0
      %v2095 = vadd.f32 0.0, %v2094
      %v2096 = vpop.f32.mrb[0].mxu0
      %2097 = vmatprep.mubr.f32.mxu0 %v1951
      %2098 = vmatmul.mubr.f32.gmra.mrb[0].mxu0 %v1950
      %v2099 = vpop.f32.mrb[0].mxu0
      %v2100 = vadd.f32 0.0, %v2099
      %v2101 = vpop.f32.mrb[0].mxu0
      %2102 = vmatprep.mubr.f32.mxu0 %v1953
      %2103 = vmatmul.mubr.f32.gmra.mrb[0].mxu0 %v1952
      %v2104 = vpop.f32.mrb[0].mxu0
      %v2105 = vadd.f32 0.0, %v2104
      %v2106 = vpop.f32.mrb[0].mxu0
      %2107 = vmatprep.mubr.f32.mxu0 %v1955
      %2108 = vmatmul.mubr.f32.gmra.mrb[0].mxu0 %v1954
      %v2109 = vpop.f32.mrb[0].mxu0
      %v2110 = vadd.f32 0.0, %v2109
      %v2111 = vpop.f32.mrb[0].mxu0
      %2112 = vmatprep.mubr.f32.mxu0 %v1957
      %2113 = vmatmul.mubr.f32.gmra.mrb[0].mxu0 %v1956
      %v2114 = vpop.f32.mrb[0].mxu0
      %v2115 = vadd.f32 0.0, %v2114
      %v2116 = vpop.f32.mrb[0].mxu0
      %2117 = vmatprep.mubr.f32.mxu0 %v1959
      %2118 = vmatmul.mubr.f32.gmra.mrb[0].mxu0 %v1958
      %v2119 = vpop.f32.mrb[0].mxu0
      %v2120 = vadd.f32 0.0, %v2119
      %v2121 = vpop.f32.mrb[0].mxu0
      %2122 = vmatprep.mubr.f32.mxu0 %v1961
      %2123 = vmatmul.mubr.f32.gmra.mrb[0].mxu0 %v1960
      %v2124 = vpop.f32.mrb[0].mxu0
      %v2125 = vadd.f32 0.0, %v2124
      %v2126 = vpop.f32.mrb[0].mxu0
      %2127 = vmatprep.mubr.f32.mxu0 %v1963
      %2128 = vmatmul.mubr.f32.gmra.mrb[0].mxu0 %v1962
      %v2129 = vpop.f32.mrb[0].mxu0
      %v2130 = vadd.f32 0.0, %v2129
      %v2131 = vpop.f32.mrb[0].mxu0
      %2132 = vmatprep.mubr.f32.mxu0 %v1965
      %2133 = vmatmul.mubr.f32.gmra.mrb[0].mxu0 %v1964
      %v2134 = vpop.f32.mrb[0].mxu0
      %v2135 = vadd.f32 0.0, %v2134
      %v2136 = vpop.f32.mrb[0].mxu0
      %2137 = vmatprep.mubr.f32.mxu0 %v1967
      %2138 = vmatmul.mubr.f32.gmra.mrb[0].mxu0 %v1966
      %v2139 = vpop.f32.mrb[0].mxu0
      %v2140 = vadd.f32 0.0, %v2139
      %v2141 = vpop.f32.mrb[0].mxu0
      %2142 = vmatprep.mubr.f32.mxu0 %v1969
      %2143 = vmatmul.mubr.f32.gmra.mrb[0].mxu0 %v1968
      %v2144 = vpop.f32.mrb[0].mxu0
      %v2145 = vadd.f32 0.0, %v2144
      %v2146 = vpop.f32.mrb[0].mxu0
      %2147 = vdwg.mxu0
      %v2148 = vadd.f32 %v1921, %v2070
      %v2149 = vadd.f32 %v1922, %v2075
      %v2150 = vadd.f32 %v1923, %v2080
      %v2151 = vadd.f32 %v1924, %v2085
      %v2152 = vadd.f32 %v1925, %v2090
      %v2153 = vadd.f32 %v1926, %v2095
      %v2154 = vadd.f32 %v1927, %v2100
      %v2155 = vadd.f32 %v1928, %v2105
      %v2156 = vadd.f32 %v1929, %v2110
      %v2157 = vadd.f32 %v1930, %v2115
      %v2158 = vadd.f32 %v1931, %v2120
      %v2159 = vadd.f32 %v1932, %v2125
      %v2160 = vadd.f32 %v1933, %v2130
      %v2161 = vadd.f32 %v1934, %v2135
      %v2162 = vadd.f32 %v1935, %v2140
      %v2163 = vadd.f32 %v1936, %v2145
      %v2164 = vld [vmem:[%s1937] sm:$0xfc]
      %v2165 = vld [vmem:[%s1937 + $0x8] sm:$0xfc]
      %v2166 = vld [vmem:[%s1937 + $0x10] sm:$0xff]
      %v2167 = vld [vmem:[%s1937 + $0x18] sm:$0xff]
      %v2168 = vld [vmem:[%s1937 + $0x20] sm:$0x3]
      %v2169 = vld [vmem:[%s1937 + $0x28] sm:$0x3]
      %v2170 = vld [vmem:[%s1937 + $0x30] sm:$0xfc]
      %v2171 = vld [vmem:[%s1937 + $0x38] sm:$0xfc]
      %v2172 = vld [vmem:[%s1937 + $0x40] sm:$0xff]
      %v2173 = vld [vmem:[%s1937 + $0x48] sm:$0xff]
      %v2174 = vld [vmem:[%s1937 + $0x50] sm:$0x3]
      %v2175 = vld [vmem:[%s1937 + $0x58] sm:$0x3]
      %v2176 = vld [vmem:[%s1937 + $0x60] sm:$0xfc]
      %v2177 = vld [vmem:[%s1937 + $0x68] sm:$0xfc]
      %v2178 = vld [vmem:[%s1937 + $0x70] sm:$0xff]
      %v2179 = vld [vmem:[%s1937 + $0x78] sm:$0xff]
      %v2180 = vld [vmem:[%s1937 + $0x80] sm:$0x3]
      %v2181 = vld [vmem:[%s1937 + $0x88] sm:$0x3]
      %v2182 = vld [vmem:[%s1937 + $0x90] sm:$0xfc]
      %v2183 = vld [vmem:[%s1937 + $0x98] sm:$0xfc]
      %v2184 = vld [vmem:[%s1937 + $0xa0] sm:$0xff]
      %v2185 = vld [vmem:[%s1937 + $0xa8] sm:$0xff]
      %v2186 = vld [vmem:[%s1937 + $0xb0] sm:$0x3]
      %v2187 = vld [vmem:[%s1937 + $0xb8] sm:$0x3]
      %v2188 = vld [vmem:[%s1937 + $0xc0] sm:$0xfc]
      %v2189 = vld [vmem:[%s1937 + $0xc8] sm:$0xfc]
      %v2190 = vld [vmem:[%s1937 + $0xd0] sm:$0xff]
      %v2191 = vld [vmem:[%s1937 + $0xd8] sm:$0xff]
      %v2192 = vld [vmem:[%s1937 + $0xe0] sm:$0x3]
      %v2193 = vld [vmem:[%s1937 + $0xe8] sm:$0x3]
      %v2194 = vld [vmem:[%s1937 + $0xf0] sm:$0xfc]
      %v2195 = vld [vmem:[%s1937 + $0xf8] sm:$0xfc]
      %v2196 = vld [vmem:[%s1937 + $0x100] sm:$0xff]
      %v2197 = vld [vmem:[%s1937 + $0x108] sm:$0xff]
      %v2198 = vld [vmem:[%s1937 + $0x110] sm:$0x3]
      %v2199 = vld [vmem:[%s1937 + $0x118] sm:$0x3]
      %v2200 = vld [vmem:[%s1937 + $0x120] sm:$0xfc]
      %v2201 = vld [vmem:[%s1937 + $0x128] sm:$0xfc]
      %v2202 = vld [vmem:[%s1937 + $0x130] sm:$0xff]
      %v2203 = vld [vmem:[%s1937 + $0x138] sm:$0xff]
      %v2204 = vld [vmem:[%s1937 + $0x140] sm:$0x3]
      %v2205 = vld [vmem:[%s1937 + $0x148] sm:$0x3]
      %v2206 = vld [vmem:[%s1937 + $0x150] sm:$0xfc]
      %v2207 = vld [vmem:[%s1937 + $0x158] sm:$0xfc]
      %v2208 = vld [vmem:[%s1937 + $0x160] sm:$0xff]
      %v2209 = vld [vmem:[%s1937 + $0x168] sm:$0xff]
      %v2210 = vld [vmem:[%s1937 + $0x170] sm:$0x3]
      %v2211 = vld [vmem:[%s1937 + $0x178] sm:$0x3]
      %v2260 = vrot.slane %v2164, 2
      %v2261 = vrot.slane %v2166, 2
      %v2262 = vsel %vm1260, %v2260, %v2261
      %v2263 = vrot.slane %v2165, 2
      %v2264 = vrot.slane %v2167, 2
      %v2265 = vsel %vm1260, %v2263, %v2264
      %v2266 = vrot.slane %v2168, 2
      %v2267 = vsel %vm1260, %v2261, %v2266
      %v2268 = vrot.slane %v2169, 2
      %v2269 = vsel %vm1260, %v2264, %v2268
      %v2270 = vrot.slane %v2170, 2
      %v2271 = vrot.slane %v2172, 2
      %v2272 = vsel %vm1260, %v2270, %v2271
      %v2273 = vrot.slane %v2171, 2
      %v2274 = vrot.slane %v2173, 2
      %v2275 = vsel %vm1260, %v2273, %v2274
      %v2276 = vrot.slane %v2174, 2
      %v2277 = vsel %vm1260, %v2271, %v2276
      %v2278 = vrot.slane %v2175, 2
      %v2279 = vsel %vm1260, %v2274, %v2278
      %v2280 = vrot.slane %v2176, 2
      %v2281 = vrot.slane %v2178, 2
      %v2282 = vsel %vm1260, %v2280, %v2281
      %v2283 = vrot.slane %v2177, 2
      %v2284 = vrot.slane %v2179, 2
      %v2285 = vsel %vm1260, %v2283, %v2284
      %v2286 = vrot.slane %v2180, 2
      %v2287 = vsel %vm1260, %v2281, %v2286
      %v2288 = vrot.slane %v2181, 2
      %v2289 = vsel %vm1260, %v2284, %v2288
      %v2290 = vrot.slane %v2182, 2
      %v2291 = vrot.slane %v2184, 2
      %v2292 = vsel %vm1260, %v2290, %v2291
      %v2293 = vrot.slane %v2183, 2
      %v2294 = vrot.slane %v2185, 2
      %v2295 = vsel %vm1260, %v2293, %v2294
      %v2296 = vrot.slane %v2186, 2
      %v2297 = vsel %vm1260, %v2291, %v2296
      %v2298 = vrot.slane %v2187, 2
      %v2299 = vsel %vm1260, %v2294, %v2298
      %v2300 = vrot.slane %v2188, 2
      %v2301 = vrot.slane %v2190, 2
      %v2302 = vsel %vm1260, %v2300, %v2301
      %v2303 = vrot.slane %v2189, 2
      %v2304 = vrot.slane %v2191, 2
      %v2305 = vsel %vm1260, %v2303, %v2304
      %v2306 = vrot.slane %v2192, 2
      %v2307 = vsel %vm1260, %v2301, %v2306
      %v2308 = vrot.slane %v2193, 2
      %v2309 = vsel %vm1260, %v2304, %v2308
      %v2310 = vrot.slane %v2194, 2
      %v2311 = vrot.slane %v2196, 2
      %v2312 = vsel %vm1260, %v2310, %v2311
      %v2313 = vrot.slane %v2195, 2
      %v2314 = vrot.slane %v2197, 2
      %v2315 = vsel %vm1260, %v2313, %v2314
      %v2316 = vrot.slane %v2198, 2
      %v2317 = vsel %vm1260, %v2311, %v2316
      %v2318 = vrot.slane %v2199, 2
      %v2319 = vsel %vm1260, %v2314, %v2318
      %v2320 = vrot.slane %v2200, 2
      %v2321 = vrot.slane %v2202, 2
      %v2322 = vsel %vm1260, %v2320, %v2321
      %v2323 = vrot.slane %v2201, 2
      %v2324 = vrot.slane %v2203, 2
      %v2325 = vsel %vm1260, %v2323, %v2324
      %v2326 = vrot.slane %v2204, 2
      %v2327 = vsel %vm1260, %v2321, %v2326
      %v2328 = vrot.slane %v2205, 2
      %v2329 = vsel %vm1260, %v2324, %v2328
      %v2330 = vrot.slane %v2206, 2
      %v2331 = vrot.slane %v2208, 2
      %v2332 = vsel %vm1260, %v2330, %v2331
      %v2333 = vrot.slane %v2207, 2
      %v2334 = vrot.slane %v2209, 2
      %v2335 = vsel %vm1260, %v2333, %v2334
      %v2336 = vrot.slane %v2210, 2
      %v2337 = vsel %vm1260, %v2331, %v2336
      %v2338 = vrot.slane %v2211, 2
      %v2339 = vsel %vm1260, %v2334, %v2338
      %s2372 = scalar_lea.vmem %s3, 1024
      %v2373 = vld [vmem:[%s2372] sm:$0xff]
      %v2374 = vld [vmem:[%s2372 + $0x8] sm:$0xff]
      %v2375 = vld [vmem:[%s2372 + $0x10] sm:$0xff]
      %v2376 = vld [vmem:[%s2372 + $0x18] sm:$0xff]
      %v2377 = vld [vmem:[%s2372 + $0x20] sm:$0xff]
      %v2378 = vld [vmem:[%s2372 + $0x28] sm:$0xff]
      %v2379 = vld [vmem:[%s2372 + $0x30] sm:$0xff]
      %v2380 = vld [vmem:[%s2372 + $0x38] sm:$0xff]
      %v2381 = vld [vmem:[%s2372 + $0x40] sm:$0xff]
      %v2382 = vld [vmem:[%s2372 + $0x48] sm:$0xff]
      %v2383 = vld [vmem:[%s2372 + $0x50] sm:$0xff]
      %v2384 = vld [vmem:[%s2372 + $0x58] sm:$0xff]
      %v2385 = vld [vmem:[%s2372 + $0x60] sm:$0xff]
      %v2386 = vld [vmem:[%s2372 + $0x68] sm:$0xff]
      %v2387 = vld [vmem:[%s2372 + $0x70] sm:$0xff]
      %v2388 = vld [vmem:[%s2372 + $0x78] sm:$0xff]
      %v2389 = vld [vmem:[%s2372 + $0x80] sm:$0xff]
      %v2390 = vld [vmem:[%s2372 + $0x88] sm:$0xff]
      %v2391 = vld [vmem:[%s2372 + $0x90] sm:$0xff]
      %v2392 = vld [vmem:[%s2372 + $0x98] sm:$0xff]
      %v2393 = vld [vmem:[%s2372 + $0xa0] sm:$0xff]
      %v2394 = vld [vmem:[%s2372 + $0xa8] sm:$0xff]
      %v2395 = vld [vmem:[%s2372 + $0xb0] sm:$0xff]
      %v2396 = vld [vmem:[%s2372 + $0xb8] sm:$0xff]
      %v2397 = vld [vmem:[%s2372 + $0xc0] sm:$0xff]
      %v2398 = vld [vmem:[%s2372 + $0xc8] sm:$0xff]
      %v2399 = vld [vmem:[%s2372 + $0xd0] sm:$0xff]
      %v2400 = vld [vmem:[%s2372 + $0xd8] sm:$0xff]
      %v2401 = vld [vmem:[%s2372 + $0xe0] sm:$0xff]
      %v2402 = vld [vmem:[%s2372 + $0xe8] sm:$0xff]
      %v2403 = vld [vmem:[%s2372 + $0xf0] sm:$0xff]
      %v2404 = vld [vmem:[%s2372 + $0xf8] sm:$0xff]
      %2405 = vmatprep.subr.mxu0 0.0
      %2406 = vmatpush1.msra.mxu0 %v2373
      %2407 = vmatprep.subr.mxu0 0.0
      %2408 = vmatpush1.msra.mxu0 %v2374
      %2409 = vmatprep.subr.mxu0 0.0
      %2410 = vmatpush1.msra.mxu0 %v2375
      %2411 = vmatprep.subr.mxu0 0.0
      %2412 = vmatpush1.msra.mxu0 %v2376
      %2413 = vmatprep.subr.mxu0 0.0
      %2414 = vmatpush1.msra.mxu0 %v2377
      %2415 = vmatprep.subr.mxu0 0.0
      %2416 = vmatpush1.msra.mxu0 %v2378
      %2417 = vmatprep.subr.mxu0 0.0
      %2418 = vmatpush1.msra.mxu0 %v2379
      %2419 = vmatprep.subr.mxu0 0.0
      %2420 = vmatpush1.msra.mxu0 %v2380
      %2421 = vmatprep.subr.mxu0 0.0
      %2422 = vmatpush1.msra.mxu0 %v2381
      %2423 = vmatprep.subr.mxu0 0.0
      %2424 = vmatpush1.msra.mxu0 %v2382
      %2425 = vmatprep.subr.mxu0 0.0
      %2426 = vmatpush1.msra.mxu0 %v2383
      %2427 = vmatprep.subr.mxu0 0.0
      %2428 = vmatpush1.msra.mxu0 %v2384
      %2429 = vmatprep.subr.mxu0 0.0
      %2430 = vmatpush1.msra.mxu0 %v2385
      %2431 = vmatprep.subr.mxu0 0.0
      %2432 = vmatpush1.msra.mxu0 %v2386
      %2433 = vmatprep.subr.mxu0 0.0
      %2434 = vmatpush1.msra.mxu0 %v2387
      %2435 = vmatprep.subr.mxu0 0.0
      %2436 = vmatpush1.msra.mxu0 %v2388
      %2437 = vmatprep.subr.mxu0 0.0
      %2438 = vmatpush1.msra.mxu0 %v2389
      %2439 = vmatprep.subr.mxu0 0.0
      %2440 = vmatpush1.msra.mxu0 %v2390
      %2441 = vmatprep.subr.mxu0 0.0
      %2442 = vmatpush1.msra.mxu0 %v2391
      %2443 = vmatprep.subr.mxu0 0.0
      %2444 = vmatpush1.msra.mxu0 %v2392
      %2445 = vmatprep.subr.mxu0 0.0
      %2446 = vmatpush1.msra.mxu0 %v2393
      %2447 = vmatprep.subr.mxu0 0.0
      %2448 = vmatpush1.msra.mxu0 %v2394
      %2449 = vmatprep.subr.mxu0 0.0
      %2450 = vmatpush1.msra.mxu0 %v2395
      %2451 = vmatprep.subr.mxu0 0.0
      %2452 = vmatpush1.msra.mxu0 %v2396
      %2453 = vmatprep.subr.mxu0 0.0
      %2454 = vmatpush1.msra.mxu0 %v2397
      %2455 = vmatprep.subr.mxu0 0.0
      %2456 = vmatpush1.msra.mxu0 %v2398
      %2457 = vmatprep.subr.mxu0 0.0
      %2458 = vmatpush1.msra.mxu0 %v2399
      %2459 = vmatprep.subr.mxu0 0.0
      %2460 = vmatpush1.msra.mxu0 %v2400
      %2461 = vmatprep.subr.mxu0 0.0
      %2462 = vmatpush1.msra.mxu0 %v2401
      %2463 = vmatprep.subr.mxu0 0.0
      %2464 = vmatpush1.msra.mxu0 %v2402
      %2465 = vmatprep.subr.mxu0 0.0
      %2466 = vmatpush1.msra.mxu0 %v2403
      %2467 = vmatprep.subr.mxu0 0.0
      %2468 = vmatpush1.msra.mxu0 %v2404
      %2469 = vmatprep.mubr.f32.mxu0 %v2265
      %2470 = vmatmul.mubr.f32.gmra.mrb[0].mxu0 %v2262
      %v2471 = vpop.f32.mrb[0].mxu0
      %v2472 = vadd.f32 0.0, %v2471
      %v2473 = vpop.f32.mrb[0].mxu0
      %2474 = vmatprep.mubr.f32.mxu0 %v2269
      %2475 = vmatmul.mubr.f32.gmra.mrb[0].mxu0 %v2267
      %v2476 = vpop.f32.mrb[0].mxu0
      %v2477 = vadd.f32 0.0, %v2476
      %v2478 = vpop.f32.mrb[0].mxu0
      %2479 = vmatprep.mubr.f32.mxu0 %v2275
      %2480 = vmatmul.mubr.f32.gmra.mrb[0].mxu0 %v2272
      %v2481 = vpop.f32.mrb[0].mxu0
      %v2482 = vadd.f32 0.0, %v2481
      %v2483 = vpop.f32.mrb[0].mxu0
      %2484 = vmatprep.mubr.f32.mxu0 %v2279
      %2485 = vmatmul.mubr.f32.gmra.mrb[0].mxu0 %v2277
      %v2486 = vpop.f32.mrb[0].mxu0
      %v2487 = vadd.f32 0.0, %v2486
      %v2488 = vpop.f32.mrb[0].mxu0
      %2489 = vmatprep.mubr.f32.mxu0 %v2285
      %2490 = vmatmul.mubr.f32.gmra.mrb[0].mxu0 %v2282
      %v2491 = vpop.f32.mrb[0].mxu0
      %v2492 = vadd.f32 0.0, %v2491
      %v2493 = vpop.f32.mrb[0].mxu0
      %2494 = vmatprep.mubr.f32.mxu0 %v2289
      %2495 = vmatmul.mubr.f32.gmra.mrb[0].mxu0 %v2287
      %v2496 = vpop.f32.mrb[0].mxu0
      %v2497 = vadd.f32 0.0, %v2496
      %v2498 = vpop.f32.mrb[0].mxu0
      %2499 = vmatprep.mubr.f32.mxu0 %v2295
      %2500 = vmatmul.mubr.f32.gmra.mrb[0].mxu0 %v2292
      %v2501 = vpop.f32.mrb[0].mxu0
      %v2502 = vadd.f32 0.0, %v2501
      %v2503 = vpop.f32.mrb[0].mxu0
      %2504 = vmatprep.mubr.f32.mxu0 %v2299
      %2505 = vmatmul.mubr.f32.gmra.mrb[0].mxu0 %v2297
      %v2506 = vpop.f32.mrb[0].mxu0
      %v2507 = vadd.f32 0.0, %v2506
      %v2508 = vpop.f32.mrb[0].mxu0
      %2509 = vmatprep.mubr.f32.mxu0 %v2305
      %2510 = vmatmul.mubr.f32.gmra.mrb[0].mxu0 %v2302
      %v2511 = vpop.f32.mrb[0].mxu0
      %v2512 = vadd.f32 0.0, %v2511
      %v2513 = vpop.f32.mrb[0].mxu0
      %2514 = vmatprep.mubr.f32.mxu0 %v2309
      %2515 = vmatmul.mubr.f32.gmra.mrb[0].mxu0 %v2307
      %v2516 = vpop.f32.mrb[0].mxu0
      %v2517 = vadd.f32 0.0, %v2516
      %v2518 = vpop.f32.mrb[0].mxu0
      %2519 = vmatprep.mubr.f32.mxu0 %v2315
      %2520 = vmatmul.mubr.f32.gmra.mrb[0].mxu0 %v2312
      %v2521 = vpop.f32.mrb[0].mxu0
      %v2522 = vadd.f32 0.0, %v2521
      %v2523 = vpop.f32.mrb[0].mxu0
      %2524 = vmatprep.mubr.f32.mxu0 %v2319
      %2525 = vmatmul.mubr.f32.gmra.mrb[0].mxu0 %v2317
      %v2526 = vpop.f32.mrb[0].mxu0
      %v2527 = vadd.f32 0.0, %v2526
      %v2528 = vpop.f32.mrb[0].mxu0
      %2529 = vmatprep.mubr.f32.mxu0 %v2325
      %2530 = vmatmul.mubr.f32.gmra.mrb[0].mxu0 %v2322
      %v2531 = vpop.f32.mrb[0].mxu0
      %v2532 = vadd.f32 0.0, %v2531
      %v2533 = vpop.f32.mrb[0].mxu0
      %2534 = vmatprep.mubr.f32.mxu0 %v2329
      %2535 = vmatmul.mubr.f32.gmra.mrb[0].mxu0 %v2327
      %v2536 = vpop.f32.mrb[0].mxu0
      %v2537 = vadd.f32 0.0, %v2536
      %v2538 = vpop.f32.mrb[0].mxu0
      %2539 = vmatprep.mubr.f32.mxu0 %v2335
      %2540 = vmatmul.mubr.f32.gmra.mrb[0].mxu0 %v2332
      %v2541 = vpop.f32.mrb[0].mxu0
      %v2542 = vadd.f32 0.0, %v2541
      %v2543 = vpop.f32.mrb[0].mxu0
      %2544 = vmatprep.mubr.f32.mxu0 %v2339
      %2545 = vmatmul.mubr.f32.gmra.mrb[0].mxu0 %v2337
      %v2546 = vpop.f32.mrb[0].mxu0
      %v2547 = vadd.f32 0.0, %v2546
      %v2548 = vpop.f32.mrb[0].mxu0
      %2549 = vdwg.mxu0
      %v2550 = vadd.f32 %v2148, %v2472
      %v2551 = vadd.f32 %v2149, %v2477
      %v2552 = vadd.f32 %v2150, %v2482
      %v2553 = vadd.f32 %v2151, %v2487
      %v2554 = vadd.f32 %v2152, %v2492
      %v2555 = vadd.f32 %v2153, %v2497
      %v2556 = vadd.f32 %v2154, %v2502
      %v2557 = vadd.f32 %v2155, %v2507
      %v2558 = vadd.f32 %v2156, %v2512
      %v2559 = vadd.f32 %v2157, %v2517
      %v2560 = vadd.f32 %v2158, %v2522
      %v2561 = vadd.f32 %v2159, %v2527
      %v2562 = vadd.f32 %v2160, %v2532
      %v2563 = vadd.f32 %v2161, %v2537
      %v2564 = vadd.f32 %v2162, %v2542
      %v2565 = vadd.f32 %v2163, %v2547
      %v2566 = vld [vmem:[%s1937] sm:$0xf0]
      %v2567 = vld [vmem:[%s1937 + $0x8] sm:$0xf0]
      %v2568 = vld [vmem:[%s1937 + $0x20] sm:$0xf]
      %v2569 = vld [vmem:[%s1937 + $0x28] sm:$0xf]
      %v2570 = vld [vmem:[%s1937 + $0x30] sm:$0xf0]
      %v2571 = vld [vmem:[%s1937 + $0x38] sm:$0xf0]
      %v2572 = vld [vmem:[%s1937 + $0x50] sm:$0xf]
      %v2573 = vld [vmem:[%s1937 + $0x58] sm:$0xf]
      %v2574 = vld [vmem:[%s1937 + $0x60] sm:$0xf0]
      %v2575 = vld [vmem:[%s1937 + $0x68] sm:$0xf0]
      %v2576 = vld [vmem:[%s1937 + $0x80] sm:$0xf]
      %v2577 = vld [vmem:[%s1937 + $0x88] sm:$0xf]
      %v2578 = vld [vmem:[%s1937 + $0x90] sm:$0xf0]
      %v2579 = vld [vmem:[%s1937 + $0x98] sm:$0xf0]
      %v2580 = vld [vmem:[%s1937 + $0xb0] sm:$0xf]
      %v2581 = vld [vmem:[%s1937 + $0xb8] sm:$0xf]
      %v2582 = vld [vmem:[%s1937 + $0xc0] sm:$0xf0]
      %v2583 = vld [vmem:[%s1937 + $0xc8] sm:$0xf0]
      %v2584 = vld [vmem:[%s1937 + $0xe0] sm:$0xf]
      %v2585 = vld [vmem:[%s1937 + $0xe8] sm:$0xf]
      %v2586 = vld [vmem:[%s1937 + $0xf0] sm:$0xf0]
      %v2587 = vld [vmem:[%s1937 + $0xf8] sm:$0xf0]
      %v2588 = vld [vmem:[%s1937 + $0x110] sm:$0xf]
      %v2589 = vld [vmem:[%s1937 + $0x118] sm:$0xf]
      %v2590 = vld [vmem:[%s1937 + $0x120] sm:$0xf0]
      %v2591 = vld [vmem:[%s1937 + $0x128] sm:$0xf0]
      %v2592 = vld [vmem:[%s1937 + $0x140] sm:$0xf]
      %v2593 = vld [vmem:[%s1937 + $0x148] sm:$0xf]
      %v2594 = vld [vmem:[%s1937 + $0x150] sm:$0xf0]
      %v2595 = vld [vmem:[%s1937 + $0x158] sm:$0xf0]
      %v2596 = vld [vmem:[%s1937 + $0x170] sm:$0xf]
      %v2597 = vld [vmem:[%s1937 + $0x178] sm:$0xf]
      %v2630 = vrot.slane %v2566, 4
      %v2631 = vrot.slane %v2166, 4
      %v2632 = vsel %vm421, %v2630, %v2631
      %v2633 = vrot.slane %v2567, 4
      %v2634 = vrot.slane %v2167, 4
      %v2635 = vsel %vm421, %v2633, %v2634
      %v2636 = vrot.slane %v2568, 4
      %v2637 = vsel %vm421, %v2631, %v2636
      %v2638 = vrot.slane %v2569, 4
      %v2639 = vsel %vm421, %v2634, %v2638
      %v2640 = vrot.slane %v2570, 4
      %v2641 = vrot.slane %v2172, 4
      %v2642 = vsel %vm421, %v2640, %v2641
      %v2643 = vrot.slane %v2571, 4
      %v2644 = vrot.slane %v2173, 4
      %v2645 = vsel %vm421, %v2643, %v2644
      %v2646 = vrot.slane %v2572, 4
      %v2647 = vsel %vm421, %v2641, %v2646
      %v2648 = vrot.slane %v2573, 4
      %v2649 = vsel %vm421, %v2644, %v2648
      %v2650 = vrot.slane %v2574, 4
      %v2651 = vrot.slane %v2178, 4
      %v2652 = vsel %vm421, %v2650, %v2651
      %v2653 = vrot.slane %v2575, 4
      %v2654 = vrot.slane %v2179, 4
      %v2655 = vsel %vm421, %v2653, %v2654
      %v2656 = vrot.slane %v2576, 4
      %v2657 = vsel %vm421, %v2651, %v2656
      %v2658 = vrot.slane %v2577, 4
      %v2659 = vsel %vm421, %v2654, %v2658
      %v2660 = vrot.slane %v2578, 4
      %v2661 = vrot.slane %v2184, 4
      %v2662 = vsel %vm421, %v2660, %v2661
      %v2663 = vrot.slane %v2579, 4
      %v2664 = vrot.slane %v2185, 4
      %v2665 = vsel %vm421, %v2663, %v2664
      %v2666 = vrot.slane %v2580, 4
      %v2667 = vsel %vm421, %v2661, %v2666
      %v2668 = vrot.slane %v2581, 4
      %v2669 = vsel %vm421, %v2664, %v2668
      %v2670 = vrot.slane %v2582, 4
      %v2671 = vrot.slane %v2190, 4
      %v2672 = vsel %vm421, %v2670, %v2671
      %v2673 = vrot.slane %v2583, 4
      %v2674 = vrot.slane %v2191, 4
      %v2675 = vsel %vm421, %v2673, %v2674
      %v2676 = vrot.slane %v2584, 4
      %v2677 = vsel %vm421, %v2671, %v2676
      %v2678 = vrot.slane %v2585, 4
      %v2679 = vsel %vm421, %v2674, %v2678
      %v2680 = vrot.slane %v2586, 4
      %v2681 = vrot.slane %v2196, 4
      %v2682 = vsel %vm421, %v2680, %v2681
      %v2683 = vrot.slane %v2587, 4
      %v2684 = vrot.slane %v2197, 4
      %v2685 = vsel %vm421, %v2683, %v2684
      %v2686 = vrot.slane %v2588, 4
      %v2687 = vsel %vm421, %v2681, %v2686
      %v2688 = vrot.slane %v2589, 4
      %v2689 = vsel %vm421, %v2684, %v2688
      %v2690 = vrot.slane %v2590, 4
      %v2691 = vrot.slane %v2202, 4
      %v2692 = vsel %vm421, %v2690, %v2691
      %v2693 = vrot.slane %v2591, 4
      %v2694 = vrot.slane %v2203, 4
      %v2695 = vsel %vm421, %v2693, %v2694
      %v2696 = vrot.slane %v2592, 4
      %v2697 = vsel %vm421, %v2691, %v2696
      %v2698 = vrot.slane %v2593, 4
      %v2699 = vsel %vm421, %v2694, %v2698
      %v2700 = vrot.slane %v2594, 4
      %v2701 = vrot.slane %v2208, 4
      %v2702 = vsel %vm421, %v2700, %v2701
      %v2703 = vrot.slane %v2595, 4
      %v2704 = vrot.slane %v2209, 4
      %v2705 = vsel %vm421, %v2703, %v2704
      %v2706 = vrot.slane %v2596, 4
      %v2707 = vsel %vm421, %v2701, %v2706
      %v2708 = vrot.slane %v2597, 4
      %v2709 = vsel %vm421, %v2704, %v2708
      %s2742 = scalar_lea.vmem %s3, 1280
      %v2743 = vld [vmem:[%s2742] sm:$0xff]
      %v2744 = vld [vmem:[%s2742 + $0x8] sm:$0xff]
      %v2745 = vld [vmem:[%s2742 + $0x10] sm:$0xff]
      %v2746 = vld [vmem:[%s2742 + $0x18] sm:$0xff]
      %v2747 = vld [vmem:[%s2742 + $0x20] sm:$0xff]
      %v2748 = vld [vmem:[%s2742 + $0x28] sm:$0xff]
      %v2749 = vld [vmem:[%s2742 + $0x30] sm:$0xff]
      %v2750 = vld [vmem:[%s2742 + $0x38] sm:$0xff]
      %v2751 = vld [vmem:[%s2742 + $0x40] sm:$0xff]
      %v2752 = vld [vmem:[%s2742 + $0x48] sm:$0xff]
      %v2753 = vld [vmem:[%s2742 + $0x50] sm:$0xff]
      %v2754 = vld [vmem:[%s2742 + $0x58] sm:$0xff]
      %v2755 = vld [vmem:[%s2742 + $0x60] sm:$0xff]
      %v2756 = vld [vmem:[%s2742 + $0x68] sm:$0xff]
      %v2757 = vld [vmem:[%s2742 + $0x70] sm:$0xff]
      %v2758 = vld [vmem:[%s2742 + $0x78] sm:$0xff]
      %v2759 = vld [vmem:[%s2742 + $0x80] sm:$0xff]
      %v2760 = vld [vmem:[%s2742 + $0x88] sm:$0xff]
      %v2761 = vld [vmem:[%s2742 + $0x90] sm:$0xff]
      %v2762 = vld [vmem:[%s2742 + $0x98] sm:$0xff]
      %v2763 = vld [vmem:[%s2742 + $0xa0] sm:$0xff]
      %v2764 = vld [vmem:[%s2742 + $0xa8] sm:$0xff]
      %v2765 = vld [vmem:[%s2742 + $0xb0] sm:$0xff]
      %v2766 = vld [vmem:[%s2742 + $0xb8] sm:$0xff]
      %v2767 = vld [vmem:[%s2742 + $0xc0] sm:$0xff]
      %v2768 = vld [vmem:[%s2742 + $0xc8] sm:$0xff]
      %v2769 = vld [vmem:[%s2742 + $0xd0] sm:$0xff]
      %v2770 = vld [vmem:[%s2742 + $0xd8] sm:$0xff]
      %v2771 = vld [vmem:[%s2742 + $0xe0] sm:$0xff]
      %v2772 = vld [vmem:[%s2742 + $0xe8] sm:$0xff]
      %v2773 = vld [vmem:[%s2742 + $0xf0] sm:$0xff]
      %v2774 = vld [vmem:[%s2742 + $0xf8] sm:$0xff]
      %2775 = vmatprep.subr.mxu0 0.0
      %2776 = vmatpush1.msra.mxu0 %v2743
      %2777 = vmatprep.subr.mxu0 0.0
      %2778 = vmatpush1.msra.mxu0 %v2744
      %2779 = vmatprep.subr.mxu0 0.0
      %2780 = vmatpush1.msra.mxu0 %v2745
      %2781 = vmatprep.subr.mxu0 0.0
      %2782 = vmatpush1.msra.mxu0 %v2746
      %2783 = vmatprep.subr.mxu0 0.0
      %2784 = vmatpush1.msra.mxu0 %v2747
      %2785 = vmatprep.subr.mxu0 0.0
      %2786 = vmatpush1.msra.mxu0 %v2748
      %2787 = vmatprep.subr.mxu0 0.0
      %2788 = vmatpush1.msra.mxu0 %v2749
      %2789 = vmatprep.subr.mxu0 0.0
      %2790 = vmatpush1.msra.mxu0 %v2750
      %2791 = vmatprep.subr.mxu0 0.0
      %2792 = vmatpush1.msra.mxu0 %v2751
      %2793 = vmatprep.subr.mxu0 0.0
      %2794 = vmatpush1.msra.mxu0 %v2752
      %2795 = vmatprep.subr.mxu0 0.0
      %2796 = vmatpush1.msra.mxu0 %v2753
      %2797 = vmatprep.subr.mxu0 0.0
      %2798 = vmatpush1.msra.mxu0 %v2754
      %2799 = vmatprep.subr.mxu0 0.0
      %2800 = vmatpush1.msra.mxu0 %v2755
      %2801 = vmatprep.subr.mxu0 0.0
      %2802 = vmatpush1.msra.mxu0 %v2756
      %2803 = vmatprep.subr.mxu0 0.0
      %2804 = vmatpush1.msra.mxu0 %v2757
      %2805 = vmatprep.subr.mxu0 0.0
      %2806 = vmatpush1.msra.mxu0 %v2758
      %2807 = vmatprep.subr.mxu0 0.0
      %2808 = vmatpush1.msra.mxu0 %v2759
      %2809 = vmatprep.subr.mxu0 0.0
      %2810 = vmatpush1.msra.mxu0 %v2760
      %2811 = vmatprep.subr.mxu0 0.0
      %2812 = vmatpush1.msra.mxu0 %v2761
      %2813 = vmatprep.subr.mxu0 0.0
      %2814 = vmatpush1.msra.mxu0 %v2762
      %2815 = vmatprep.subr.mxu0 0.0
      %2816 = vmatpush1.msra.mxu0 %v2763
      %2817 = vmatprep.subr.mxu0 0.0
      %2818 = vmatpush1.msra.mxu0 %v2764
      %2819 = vmatprep.subr.mxu0 0.0
      %2820 = vmatpush1.msra.mxu0 %v2765
      %2821 = vmatprep.subr.mxu0 0.0
      %2822 = vmatpush1.msra.mxu0 %v2766
      %2823 = vmatprep.subr.mxu0 0.0
      %2824 = vmatpush1.msra.mxu0 %v2767
      %2825 = vmatprep.subr.mxu0 0.0
      %2826 = vmatpush1.msra.mxu0 %v2768
      %2827 = vmatprep.subr.mxu0 0.0
      %2828 = vmatpush1.msra.mxu0 %v2769
      %2829 = vmatprep.subr.mxu0 0.0
      %2830 = vmatpush1.msra.mxu0 %v2770
      %2831 = vmatprep.subr.mxu0 0.0
      %2832 = vmatpush1.msra.mxu0 %v2771
      %2833 = vmatprep.subr.mxu0 0.0
      %2834 = vmatpush1.msra.mxu0 %v2772
      %2835 = vmatprep.subr.mxu0 0.0
      %2836 = vmatpush1.msra.mxu0 %v2773
      %2837 = vmatprep.subr.mxu0 0.0
      %2838 = vmatpush1.msra.mxu0 %v2774
      %2839 = vmatprep.mubr.f32.mxu0 %v2635
      %2840 = vmatmul.mubr.f32.gmra.mrb[0].mxu0 %v2632
      %v2841 = vpop.f32.mrb[0].mxu0
      %v2842 = vadd.f32 0.0, %v2841
      %v2843 = vpop.f32.mrb[0].mxu0
      %2844 = vmatprep.mubr.f32.mxu0 %v2639
      %2845 = vmatmul.mubr.f32.gmra.mrb[0].mxu0 %v2637
      %v2846 = vpop.f32.mrb[0].mxu0
      %v2847 = vadd.f32 0.0, %v2846
      %v2848 = vpop.f32.mrb[0].mxu0
      %2849 = vmatprep.mubr.f32.mxu0 %v2645
      %2850 = vmatmul.mubr.f32.gmra.mrb[0].mxu0 %v2642
      %v2851 = vpop.f32.mrb[0].mxu0
      %v2852 = vadd.f32 0.0, %v2851
      %v2853 = vpop.f32.mrb[0].mxu0
      %2854 = vmatprep.mubr.f32.mxu0 %v2649
      %2855 = vmatmul.mubr.f32.gmra.mrb[0].mxu0 %v2647
      %v2856 = vpop.f32.mrb[0].mxu0
      %v2857 = vadd.f32 0.0, %v2856
      %v2858 = vpop.f32.mrb[0].mxu0
      %2859 = vmatprep.mubr.f32.mxu0 %v2655
      %2860 = vmatmul.mubr.f32.gmra.mrb[0].mxu0 %v2652
      %v2861 = vpop.f32.mrb[0].mxu0
      %v2862 = vadd.f32 0.0, %v2861
      %v2863 = vpop.f32.mrb[0].mxu0
      %2864 = vmatprep.mubr.f32.mxu0 %v2659
      %2865 = vmatmul.mubr.f32.gmra.mrb[0].mxu0 %v2657
      %v2866 = vpop.f32.mrb[0].mxu0
      %v2867 = vadd.f32 0.0, %v2866
      %v2868 = vpop.f32.mrb[0].mxu0
      %2869 = vmatprep.mubr.f32.mxu0 %v2665
      %2870 = vmatmul.mubr.f32.gmra.mrb[0].mxu0 %v2662
      %v2871 = vpop.f32.mrb[0].mxu0
      %v2872 = vadd.f32 0.0, %v2871
      %v2873 = vpop.f32.mrb[0].mxu0
      %2874 = vmatprep.mubr.f32.mxu0 %v2669
      %2875 = vmatmul.mubr.f32.gmra.mrb[0].mxu0 %v2667
      %v2876 = vpop.f32.mrb[0].mxu0
      %v2877 = vadd.f32 0.0, %v2876
      %v2878 = vpop.f32.mrb[0].mxu0
      %2879 = vmatprep.mubr.f32.mxu0 %v2675
      %2880 = vmatmul.mubr.f32.gmra.mrb[0].mxu0 %v2672
      %v2881 = vpop.f32.mrb[0].mxu0
      %v2882 = vadd.f32 0.0, %v2881
      %v2883 = vpop.f32.mrb[0].mxu0
      %2884 = vmatprep.mubr.f32.mxu0 %v2679
      %2885 = vmatmul.mubr.f32.gmra.mrb[0].mxu0 %v2677
      %v2886 = vpop.f32.mrb[0].mxu0
      %v2887 = vadd.f32 0.0, %v2886
      %v2888 = vpop.f32.mrb[0].mxu0
      %2889 = vmatprep.mubr.f32.mxu0 %v2685
      %2890 = vmatmul.mubr.f32.gmra.mrb[0].mxu0 %v2682
      %v2891 = vpop.f32.mrb[0].mxu0
      %v2892 = vadd.f32 0.0, %v2891
      %v2893 = vpop.f32.mrb[0].mxu0
      %2894 = vmatprep.mubr.f32.mxu0 %v2689
      %2895 = vmatmul.mubr.f32.gmra.mrb[0].mxu0 %v2687
      %v2896 = vpop.f32.mrb[0].mxu0
      %v2897 = vadd.f32 0.0, %v2896
      %v2898 = vpop.f32.mrb[0].mxu0
      %2899 = vmatprep.mubr.f32.mxu0 %v2695
      %2900 = vmatmul.mubr.f32.gmra.mrb[0].mxu0 %v2692
      %v2901 = vpop.f32.mrb[0].mxu0
      %v2902 = vadd.f32 0.0, %v2901
      %v2903 = vpop.f32.mrb[0].mxu0
      %2904 = vmatprep.mubr.f32.mxu0 %v2699
      %2905 = vmatmul.mubr.f32.gmra.mrb[0].mxu0 %v2697
      %v2906 = vpop.f32.mrb[0].mxu0
      %v2907 = vadd.f32 0.0, %v2906
      %v2908 = vpop.f32.mrb[0].mxu0
      %2909 = vmatprep.mubr.f32.mxu0 %v2705
      %2910 = vmatmul.mubr.f32.gmra.mrb[0].mxu0 %v2702
      %v2911 = vpop.f32.mrb[0].mxu0
      %v2912 = vadd.f32 0.0, %v2911
      %v2913 = vpop.f32.mrb[0].mxu0
      %2914 = vmatprep.mubr.f32.mxu0 %v2709
      %2915 = vmatmul.mubr.f32.gmra.mrb[0].mxu0 %v2707
      %v2916 = vpop.f32.mrb[0].mxu0
      %v2917 = vadd.f32 0.0, %v2916
      %v2918 = vpop.f32.mrb[0].mxu0
      %2919 = vdwg.mxu0
      %v2920 = vadd.f32 %v2550, %v2842
      %v2921 = vadd.f32 %v2551, %v2847
      %v2922 = vadd.f32 %v2552, %v2852
      %v2923 = vadd.f32 %v2553, %v2857
      %v2924 = vadd.f32 %v2554, %v2862
      %v2925 = vadd.f32 %v2555, %v2867
      %v2926 = vadd.f32 %v2556, %v2872
      %v2927 = vadd.f32 %v2557, %v2877
      %v2928 = vadd.f32 %v2558, %v2882
      %v2929 = vadd.f32 %v2559, %v2887
      %v2930 = vadd.f32 %v2560, %v2892
      %v2931 = vadd.f32 %v2561, %v2897
      %v2932 = vadd.f32 %v2562, %v2902
      %v2933 = vadd.f32 %v2563, %v2907
      %v2934 = vadd.f32 %v2564, %v2912
      %v2935 = vadd.f32 %v2565, %v2917
      %s2936 = scalar_lea.vmem [#allocation2], 192
      %v2937 = vld [vmem:[%s2936] sm:$0xff]
      %v2938 = vld [vmem:[%s2936 + $0x8] sm:$0xff]
      %v2939 = vld [vmem:[%s2936 + $0x10] sm:$0xff]
      %v2940 = vld [vmem:[%s2936 + $0x18] sm:$0xff]
      %v2941 = vld [vmem:[%s2936 + $0x30] sm:$0xff]
      %v2942 = vld [vmem:[%s2936 + $0x38] sm:$0xff]
      %v2943 = vld [vmem:[%s2936 + $0x40] sm:$0xff]
      %v2944 = vld [vmem:[%s2936 + $0x48] sm:$0xff]
      %v2945 = vld [vmem:[%s2936 + $0x60] sm:$0xff]
      %v2946 = vld [vmem:[%s2936 + $0x68] sm:$0xff]
      %v2947 = vld [vmem:[%s2936 + $0x70] sm:$0xff]
      %v2948 = vld [vmem:[%s2936 + $0x78] sm:$0xff]
      %v2949 = vld [vmem:[%s2936 + $0x90] sm:$0xff]
      %v2950 = vld [vmem:[%s2936 + $0x98] sm:$0xff]
      %v2951 = vld [vmem:[%s2936 + $0xa0] sm:$0xff]
      %v2952 = vld [vmem:[%s2936 + $0xa8] sm:$0xff]
      %v2953 = vld [vmem:[%s2936 + $0xc0] sm:$0xff]
      %v2954 = vld [vmem:[%s2936 + $0xc8] sm:$0xff]
      %v2955 = vld [vmem:[%s2936 + $0xd0] sm:$0xff]
      %v2956 = vld [vmem:[%s2936 + $0xd8] sm:$0xff]
      %v2957 = vld [vmem:[%s2936 + $0xf0] sm:$0xff]
      %v2958 = vld [vmem:[%s2936 + $0xf8] sm:$0xff]
      %v2959 = vld [vmem:[%s2936 + $0x100] sm:$0xff]
      %v2960 = vld [vmem:[%s2936 + $0x108] sm:$0xff]
      %v2961 = vld [vmem:[%s2936 + $0x120] sm:$0xff]
      %v2962 = vld [vmem:[%s2936 + $0x128] sm:$0xff]
      %v2963 = vld [vmem:[%s2936 + $0x130] sm:$0xff]
      %v2964 = vld [vmem:[%s2936 + $0x138] sm:$0xff]
      %v2965 = vld [vmem:[%s2936 + $0x150] sm:$0xff]
      %v2966 = vld [vmem:[%s2936 + $0x158] sm:$0xff]
      %v2967 = vld [vmem:[%s2936 + $0x160] sm:$0xff]
      %v2968 = vld [vmem:[%s2936 + $0x168] sm:$0xff]
      %s2969 = scalar_lea.vmem %s3, 1536
      %v2970 = vld [vmem:[%s2969] sm:$0xff]
      %v2971 = vld [vmem:[%s2969 + $0x8] sm:$0xff]
      %v2972 = vld [vmem:[%s2969 + $0x10] sm:$0xff]
      %v2973 = vld [vmem:[%s2969 + $0x18] sm:$0xff]
      %v2974 = vld [vmem:[%s2969 + $0x20] sm:$0xff]
      %v2975 = vld [vmem:[%s2969 + $0x28] sm:$0xff]
      %v2976 = vld [vmem:[%s2969 + $0x30] sm:$0xff]
      %v2977 = vld [vmem:[%s2969 + $0x38] sm:$0xff]
      %v2978 = vld [vmem:[%s2969 + $0x40] sm:$0xff]
      %v2979 = vld [vmem:[%s2969 + $0x48] sm:$0xff]
      %v2980 = vld [vmem:[%s2969 + $0x50] sm:$0xff]
      %v2981 = vld [vmem:[%s2969 + $0x58] sm:$0xff]
      %v2982 = vld [vmem:[%s2969 + $0x60] sm:$0xff]
      %v2983 = vld [vmem:[%s2969 + $0x68] sm:$0xff]
      %v2984 = vld [vmem:[%s2969 + $0x70] sm:$0xff]
      %v2985 = vld [vmem:[%s2969 + $0x78] sm:$0xff]
      %v2986 = vld [vmem:[%s2969 + $0x80] sm:$0xff]
      %v2987 = vld [vmem:[%s2969 + $0x88] sm:$0xff]
      %v2988 = vld [vmem:[%s2969 + $0x90] sm:$0xff]
      %v2989 = vld [vmem:[%s2969 + $0x98] sm:$0xff]
      %v2990 = vld [vmem:[%s2969 + $0xa0] sm:$0xff]
      %v2991 = vld [vmem:[%s2969 + $0xa8] sm:$0xff]
      %v2992 = vld [vmem:[%s2969 + $0xb0] sm:$0xff]
      %v2993 = vld [vmem:[%s2969 + $0xb8] sm:$0xff]
      %v2994 = vld [vmem:[%s2969 + $0xc0] sm:$0xff]
      %v2995 = vld [vmem:[%s2969 + $0xc8] sm:$0xff]
      %v2996 = vld [vmem:[%s2969 + $0xd0] sm:$0xff]
      %v2997 = vld [vmem:[%s2969 + $0xd8] sm:$0xff]
      %v2998 = vld [vmem:[%s2969 + $0xe0] sm:$0xff]
      %v2999 = vld [vmem:[%s2969 + $0xe8] sm:$0xff]
      %v3000 = vld [vmem:[%s2969 + $0xf0] sm:$0xff]
      %v3001 = vld [vmem:[%s2969 + $0xf8] sm:$0xff]
      %3002 = vmatprep.subr.mxu0 0.0
      %3003 = vmatpush1.msra.mxu0 %v2970
      %3004 = vmatprep.subr.mxu0 0.0
      %3005 = vmatpush1.msra.mxu0 %v2971
      %3006 = vmatprep.subr.mxu0 0.0
      %3007 = vmatpush1.msra.mxu0 %v2972
      %3008 = vmatprep.subr.mxu0 0.0
      %3009 = vmatpush1.msra.mxu0 %v2973
      %3010 = vmatprep.subr.mxu0 0.0
      %3011 = vmatpush1.msra.mxu0 %v2974
      %3012 = vmatprep.subr.mxu0 0.0
      %3013 = vmatpush1.msra.mxu0 %v2975
      %3014 = vmatprep.subr.mxu0 0.0
      %3015 = vmatpush1.msra.mxu0 %v2976
      %3016 = vmatprep.subr.mxu0 0.0
      %3017 = vmatpush1.msra.mxu0 %v2977
      %3018 = vmatprep.subr.mxu0 0.0
      %3019 = vmatpush1.msra.mxu0 %v2978
      %3020 = vmatprep.subr.mxu0 0.0
      %3021 = vmatpush1.msra.mxu0 %v2979
      %3022 = vmatprep.subr.mxu0 0.0
      %3023 = vmatpush1.msra.mxu0 %v2980
      %3024 = vmatprep.subr.mxu0 0.0
      %3025 = vmatpush1.msra.mxu0 %v2981
      %3026 = vmatprep.subr.mxu0 0.0
      %3027 = vmatpush1.msra.mxu0 %v2982
      %3028 = vmatprep.subr.mxu0 0.0
      %3029 = vmatpush1.msra.mxu0 %v2983
      %3030 = vmatprep.subr.mxu0 0.0
      %3031 = vmatpush1.msra.mxu0 %v2984
      %3032 = vmatprep.subr.mxu0 0.0
      %3033 = vmatpush1.msra.mxu0 %v2985
      %3034 = vmatprep.subr.mxu0 0.0
      %3035 = vmatpush1.msra.mxu0 %v2986
      %3036 = vmatprep.subr.mxu0 0.0
      %3037 = vmatpush1.msra.mxu0 %v2987
      %3038 = vmatprep.subr.mxu0 0.0
      %3039 = vmatpush1.msra.mxu0 %v2988
      %3040 = vmatprep.subr.mxu0 0.0
      %3041 = vmatpush1.msra.mxu0 %v2989
      %3042 = vmatprep.subr.mxu0 0.0
      %3043 = vmatpush1.msra.mxu0 %v2990
      %3044 = vmatprep.subr.mxu0 0.0
      %3045 = vmatpush1.msra.mxu0 %v2991
      %3046 = vmatprep.subr.mxu0 0.0
      %3047 = vmatpush1.msra.mxu0 %v2992
      %3048 = vmatprep.subr.mxu0 0.0
      %3049 = vmatpush1.msra.mxu0 %v2993
      %3050 = vmatprep.subr.mxu0 0.0
      %3051 = vmatpush1.msra.mxu0 %v2994
      %3052 = vmatprep.subr.mxu0 0.0
      %3053 = vmatpush1.msra.mxu0 %v2995
      %3054 = vmatprep.subr.mxu0 0.0
      %3055 = vmatpush1.msra.mxu0 %v2996
      %3056 = vmatprep.subr.mxu0 0.0
      %3057 = vmatpush1.msra.mxu0 %v2997
      %3058 = vmatprep.subr.mxu0 0.0
      %3059 = vmatpush1.msra.mxu0 %v2998
      %3060 = vmatprep.subr.mxu0 0.0
      %3061 = vmatpush1.msra.mxu0 %v2999
      %3062 = vmatprep.subr.mxu0 0.0
      %3063 = vmatpush1.msra.mxu0 %v3000
      %3064 = vmatprep.subr.mxu0 0.0
      %3065 = vmatpush1.msra.mxu0 %v3001
      %3066 = vmatprep.mubr.f32.mxu0 %v2938
      %3067 = vmatmul.mubr.f32.gmra.mrb[0].mxu0 %v2937
      %v3068 = vpop.f32.mrb[0].mxu0
      %v3069 = vadd.f32 0.0, %v3068
      %v3070 = vpop.f32.mrb[0].mxu0
      %3071 = vmatprep.mubr.f32.mxu0 %v2940
      %3072 = vmatmul.mubr.f32.gmra.mrb[0].mxu0 %v2939
      %v3073 = vpop.f32.mrb[0].mxu0
      %v3074 = vadd.f32 0.0, %v3073
      %v3075 = vpop.f32.mrb[0].mxu0
      %3076 = vmatprep.mubr.f32.mxu0 %v2942
      %3077 = vmatmul.mubr.f32.gmra.mrb[0].mxu0 %v2941
      %v3078 = vpop.f32.mrb[0].mxu0
      %v3079 = vadd.f32 0.0, %v3078
      %v3080 = vpop.f32.mrb[0].mxu0
      %3081 = vmatprep.mubr.f32.mxu0 %v2944
      %3082 = vmatmul.mubr.f32.gmra.mrb[0].mxu0 %v2943
      %v3083 = vpop.f32.mrb[0].mxu0
      %v3084 = vadd.f32 0.0, %v3083
      %v3085 = vpop.f32.mrb[0].mxu0
      %3086 = vmatprep.mubr.f32.mxu0 %v2946
      %3087 = vmatmul.mubr.f32.gmra.mrb[0].mxu0 %v2945
      %v3088 = vpop.f32.mrb[0].mxu0
      %v3089 = vadd.f32 0.0, %v3088
      %v3090 = vpop.f32.mrb[0].mxu0
      %3091 = vmatprep.mubr.f32.mxu0 %v2948
      %3092 = vmatmul.mubr.f32.gmra.mrb[0].mxu0 %v2947
      %v3093 = vpop.f32.mrb[0].mxu0
      %v3094 = vadd.f32 0.0, %v3093
      %v3095 = vpop.f32.mrb[0].mxu0
      %3096 = vmatprep.mubr.f32.mxu0 %v2950
      %3097 = vmatmul.mubr.f32.gmra.mrb[0].mxu0 %v2949
      %v3098 = vpop.f32.mrb[0].mxu0
      %v3099 = vadd.f32 0.0, %v3098
      %v3100 = vpop.f32.mrb[0].mxu0
      %3101 = vmatprep.mubr.f32.mxu0 %v2952
      %3102 = vmatmul.mubr.f32.gmra.mrb[0].mxu0 %v2951
      %v3103 = vpop.f32.mrb[0].mxu0
      %v3104 = vadd.f32 0.0, %v3103
      %v3105 = vpop.f32.mrb[0].mxu0
      %3106 = vmatprep.mubr.f32.mxu0 %v2954
      %3107 = vmatmul.mubr.f32.gmra.mrb[0].mxu0 %v2953
      %v3108 = vpop.f32.mrb[0].mxu0
      %v3109 = vadd.f32 0.0, %v3108
      %v3110 = vpop.f32.mrb[0].mxu0
      %3111 = vmatprep.mubr.f32.mxu0 %v2956
      %3112 = vmatmul.mubr.f32.gmra.mrb[0].mxu0 %v2955
      %v3113 = vpop.f32.mrb[0].mxu0
      %v3114 = vadd.f32 0.0, %v3113
      %v3115 = vpop.f32.mrb[0].mxu0
      %3116 = vmatprep.mubr.f32.mxu0 %v2958
      %3117 = vmatmul.mubr.f32.gmra.mrb[0].mxu0 %v2957
      %v3118 = vpop.f32.mrb[0].mxu0
      %v3119 = vadd.f32 0.0, %v3118
      %v3120 = vpop.f32.mrb[0].mxu0
      %3121 = vmatprep.mubr.f32.mxu0 %v2960
      %3122 = vmatmul.mubr.f32.gmra.mrb[0].mxu0 %v2959
      %v3123 = vpop.f32.mrb[0].mxu0
      %v3124 = vadd.f32 0.0, %v3123
      %v3125 = vpop.f32.mrb[0].mxu0
      %3126 = vmatprep.mubr.f32.mxu0 %v2962
      %3127 = vmatmul.mubr.f32.gmra.mrb[0].mxu0 %v2961
      %v3128 = vpop.f32.mrb[0].mxu0
      %v3129 = vadd.f32 0.0, %v3128
      %v3130 = vpop.f32.mrb[0].mxu0
      %3131 = vmatprep.mubr.f32.mxu0 %v2964
      %3132 = vmatmul.mubr.f32.gmra.mrb[0].mxu0 %v2963
      %v3133 = vpop.f32.mrb[0].mxu0
      %v3134 = vadd.f32 0.0, %v3133
      %v3135 = vpop.f32.mrb[0].mxu0
      %3136 = vmatprep.mubr.f32.mxu0 %v2966
      %3137 = vmatmul.mubr.f32.gmra.mrb[0].mxu0 %v2965
      %v3138 = vpop.f32.mrb[0].mxu0
      %v3139 = vadd.f32 0.0, %v3138
      %v3140 = vpop.f32.mrb[0].mxu0
      %3141 = vmatprep.mubr.f32.mxu0 %v2968
      %3142 = vmatmul.mubr.f32.gmra.mrb[0].mxu0 %v2967
      %v3143 = vpop.f32.mrb[0].mxu0
      %v3144 = vadd.f32 0.0, %v3143
      %v3145 = vpop.f32.mrb[0].mxu0
      %3146 = vdwg.mxu0
      %v3147 = vadd.f32 %v2920, %v3069
      %v3148 = vadd.f32 %v2921, %v3074
      %v3149 = vadd.f32 %v2922, %v3079
      %v3150 = vadd.f32 %v2923, %v3084
      %v3151 = vadd.f32 %v2924, %v3089
      %v3152 = vadd.f32 %v2925, %v3094
      %v3153 = vadd.f32 %v2926, %v3099
      %v3154 = vadd.f32 %v2927, %v3104
      %v3155 = vadd.f32 %v2928, %v3109
      %v3156 = vadd.f32 %v2929, %v3114
      %v3157 = vadd.f32 %v2930, %v3119
      %v3158 = vadd.f32 %v2931, %v3124
      %v3159 = vadd.f32 %v2932, %v3129
      %v3160 = vadd.f32 %v2933, %v3134
      %v3161 = vadd.f32 %v2934, %v3139
      %v3162 = vadd.f32 %v2935, %v3144
      %v3163 = vld [vmem:[%s2936] sm:$0xfc]
      %v3164 = vld [vmem:[%s2936 + $0x8] sm:$0xfc]
      %v3165 = vld [vmem:[%s2936 + $0x10] sm:$0xff]
      %v3166 = vld [vmem:[%s2936 + $0x18] sm:$0xff]
      %v3167 = vld [vmem:[%s2936 + $0x20] sm:$0x3]
      %v3168 = vld [vmem:[%s2936 + $0x28] sm:$0x3]
      %v3169 = vld [vmem:[%s2936 + $0x30] sm:$0xfc]
      %v3170 = vld [vmem:[%s2936 + $0x38] sm:$0xfc]
      %v3171 = vld [vmem:[%s2936 + $0x40] sm:$0xff]
      %v3172 = vld [vmem:[%s2936 + $0x48] sm:$0xff]
      %v3173 = vld [vmem:[%s2936 + $0x50] sm:$0x3]
      %v3174 = vld [vmem:[%s2936 + $0x58] sm:$0x3]
      %v3175 = vld [vmem:[%s2936 + $0x60] sm:$0xfc]
      %v3176 = vld [vmem:[%s2936 + $0x68] sm:$0xfc]
      %v3177 = vld [vmem:[%s2936 + $0x70] sm:$0xff]
      %v3178 = vld [vmem:[%s2936 + $0x78] sm:$0xff]
      %v3179 = vld [vmem:[%s2936 + $0x80] sm:$0x3]
      %v3180 = vld [vmem:[%s2936 + $0x88] sm:$0x3]
      %v3181 = vld [vmem:[%s2936 + $0x90] sm:$0xfc]
      %v3182 = vld [vmem:[%s2936 + $0x98] sm:$0xfc]
      %v3183 = vld [vmem:[%s2936 + $0xa0] sm:$0xff]
      %v3184 = vld [vmem:[%s2936 + $0xa8] sm:$0xff]
      %v3185 = vld [vmem:[%s2936 + $0xb0] sm:$0x3]
      %v3186 = vld [vmem:[%s2936 + $0xb8] sm:$0x3]
      %v3187 = vld [vmem:[%s2936 + $0xc0] sm:$0xfc]
      %v3188 = vld [vmem:[%s2936 + $0xc8] sm:$0xfc]
      %v3189 = vld [vmem:[%s2936 + $0xd0] sm:$0xff]
      %v3190 = vld [vmem:[%s2936 + $0xd8] sm:$0xff]
      %v3191 = vld [vmem:[%s2936 + $0xe0] sm:$0x3]
      %v3192 = vld [vmem:[%s2936 + $0xe8] sm:$0x3]
      %v3193 = vld [vmem:[%s2936 + $0xf0] sm:$0xfc]
      %v3194 = vld [vmem:[%s2936 + $0xf8] sm:$0xfc]
      %v3195 = vld [vmem:[%s2936 + $0x100] sm:$0xff]
      %v3196 = vld [vmem:[%s2936 + $0x108] sm:$0xff]
      %v3197 = vld [vmem:[%s2936 + $0x110] sm:$0x3]
      %v3198 = vld [vmem:[%s2936 + $0x118] sm:$0x3]
      %v3199 = vld [vmem:[%s2936 + $0x120] sm:$0xfc]
      %v3200 = vld [vmem:[%s2936 + $0x128] sm:$0xfc]
      %v3201 = vld [vmem:[%s2936 + $0x130] sm:$0xff]
      %v3202 = vld [vmem:[%s2936 + $0x138] sm:$0xff]
      %v3203 = vld [vmem:[%s2936 + $0x140] sm:$0x3]
      %v3204 = vld [vmem:[%s2936 + $0x148] sm:$0x3]
      %v3205 = vld [vmem:[%s2936 + $0x150] sm:$0xfc]
      %v3206 = vld [vmem:[%s2936 + $0x158] sm:$0xfc]
      %v3207 = vld [vmem:[%s2936 + $0x160] sm:$0xff]
      %v3208 = vld [vmem:[%s2936 + $0x168] sm:$0xff]
      %v3209 = vld [vmem:[%s2936 + $0x170] sm:$0x3]
      %v3210 = vld [vmem:[%s2936 + $0x178] sm:$0x3]
      %v3259 = vrot.slane %v3163, 2
      %v3260 = vrot.slane %v3165, 2
      %v3261 = vsel %vm1260, %v3259, %v3260
      %v3262 = vrot.slane %v3164, 2
      %v3263 = vrot.slane %v3166, 2
      %v3264 = vsel %vm1260, %v3262, %v3263
      %v3265 = vrot.slane %v3167, 2
      %v3266 = vsel %vm1260, %v3260, %v3265
      %v3267 = vrot.slane %v3168, 2
      %v3268 = vsel %vm1260, %v3263, %v3267
      %v3269 = vrot.slane %v3169, 2
      %v3270 = vrot.slane %v3171, 2
      %v3271 = vsel %vm1260, %v3269, %v3270
      %v3272 = vrot.slane %v3170, 2
      %v3273 = vrot.slane %v3172, 2
      %v3274 = vsel %vm1260, %v3272, %v3273
      %v3275 = vrot.slane %v3173, 2
      %v3276 = vsel %vm1260, %v3270, %v3275
      %v3277 = vrot.slane %v3174, 2
      %v3278 = vsel %vm1260, %v3273, %v3277
      %v3279 = vrot.slane %v3175, 2
      %v3280 = vrot.slane %v3177, 2
      %v3281 = vsel %vm1260, %v3279, %v3280
      %v3282 = vrot.slane %v3176, 2
      %v3283 = vrot.slane %v3178, 2
      %v3284 = vsel %vm1260, %v3282, %v3283
      %v3285 = vrot.slane %v3179, 2
      %v3286 = vsel %vm1260, %v3280, %v3285
      %v3287 = vrot.slane %v3180, 2
      %v3288 = vsel %vm1260, %v3283, %v3287
      %v3289 = vrot.slane %v3181, 2
      %v3290 = vrot.slane %v3183, 2
      %v3291 = vsel %vm1260, %v3289, %v3290
      %v3292 = vrot.slane %v3182, 2
      %v3293 = vrot.slane %v3184, 2
      %v3294 = vsel %vm1260, %v3292, %v3293
      %v3295 = vrot.slane %v3185, 2
      %v3296 = vsel %vm1260, %v3290, %v3295
      %v3297 = vrot.slane %v3186, 2
      %v3298 = vsel %vm1260, %v3293, %v3297
      %v3299 = vrot.slane %v3187, 2
      %v3300 = vrot.slane %v3189, 2
      %v3301 = vsel %vm1260, %v3299, %v3300
      %v3302 = vrot.slane %v3188, 2
      %v3303 = vrot.slane %v3190, 2
      %v3304 = vsel %vm1260, %v3302, %v3303
      %v3305 = vrot.slane %v3191, 2
      %v3306 = vsel %vm1260, %v3300, %v3305
      %v3307 = vrot.slane %v3192, 2
      %v3308 = vsel %vm1260, %v3303, %v3307
      %v3309 = vrot.slane %v3193, 2
      %v3310 = vrot.slane %v3195, 2
      %v3311 = vsel %vm1260, %v3309, %v3310
      %v3312 = vrot.slane %v3194, 2
      %v3313 = vrot.slane %v3196, 2
      %v3314 = vsel %vm1260, %v3312, %v3313
      %v3315 = vrot.slane %v3197, 2
      %v3316 = vsel %vm1260, %v3310, %v3315
      %v3317 = vrot.slane %v3198, 2
      %v3318 = vsel %vm1260, %v3313, %v3317
      %v3319 = vrot.slane %v3199, 2
      %v3320 = vrot.slane %v3201, 2
      %v3321 = vsel %vm1260, %v3319, %v3320
      %v3322 = vrot.slane %v3200, 2
      %v3323 = vrot.slane %v3202, 2
      %v3324 = vsel %vm1260, %v3322, %v3323
      %v3325 = vrot.slane %v3203, 2
      %v3326 = vsel %vm1260, %v3320, %v3325
      %v3327 = vrot.slane %v3204, 2
      %v3328 = vsel %vm1260, %v3323, %v3327
      %v3329 = vrot.slane %v3205, 2
      %v3330 = vrot.slane %v3207, 2
      %v3331 = vsel %vm1260, %v3329, %v3330
      %v3332 = vrot.slane %v3206, 2
      %v3333 = vrot.slane %v3208, 2
      %v3334 = vsel %vm1260, %v3332, %v3333
      %v3335 = vrot.slane %v3209, 2
      %v3336 = vsel %vm1260, %v3330, %v3335
      %v3337 = vrot.slane %v3210, 2
      %v3338 = vsel %vm1260, %v3333, %v3337
      %s3371 = scalar_lea.vmem %s3, 1792
      %v3372 = vld [vmem:[%s3371] sm:$0xff]
      %v3373 = vld [vmem:[%s3371 + $0x8] sm:$0xff]
      %v3374 = vld [vmem:[%s3371 + $0x10] sm:$0xff]
      %v3375 = vld [vmem:[%s3371 + $0x18] sm:$0xff]
      %v3376 = vld [vmem:[%s3371 + $0x20] sm:$0xff]
      %v3377 = vld [vmem:[%s3371 + $0x28] sm:$0xff]
      %v3378 = vld [vmem:[%s3371 + $0x30] sm:$0xff]
      %v3379 = vld [vmem:[%s3371 + $0x38] sm:$0xff]
      %v3380 = vld [vmem:[%s3371 + $0x40] sm:$0xff]
      %v3381 = vld [vmem:[%s3371 + $0x48] sm:$0xff]
      %v3382 = vld [vmem:[%s3371 + $0x50] sm:$0xff]
      %v3383 = vld [vmem:[%s3371 + $0x58] sm:$0xff]
      %v3384 = vld [vmem:[%s3371 + $0x60] sm:$0xff]
      %v3385 = vld [vmem:[%s3371 + $0x68] sm:$0xff]
      %v3386 = vld [vmem:[%s3371 + $0x70] sm:$0xff]
      %v3387 = vld [vmem:[%s3371 + $0x78] sm:$0xff]
      %v3388 = vld [vmem:[%s3371 + $0x80] sm:$0xff]
      %v3389 = vld [vmem:[%s3371 + $0x88] sm:$0xff]
      %v3390 = vld [vmem:[%s3371 + $0x90] sm:$0xff]
      %v3391 = vld [vmem:[%s3371 + $0x98] sm:$0xff]
      %v3392 = vld [vmem:[%s3371 + $0xa0] sm:$0xff]
      %v3393 = vld [vmem:[%s3371 + $0xa8] sm:$0xff]
      %v3394 = vld [vmem:[%s3371 + $0xb0] sm:$0xff]
      %v3395 = vld [vmem:[%s3371 + $0xb8] sm:$0xff]
      %v3396 = vld [vmem:[%s3371 + $0xc0] sm:$0xff]
      %v3397 = vld [vmem:[%s3371 + $0xc8] sm:$0xff]
      %v3398 = vld [vmem:[%s3371 + $0xd0] sm:$0xff]
      %v3399 = vld [vmem:[%s3371 + $0xd8] sm:$0xff]
      %v3400 = vld [vmem:[%s3371 + $0xe0] sm:$0xff]
      %v3401 = vld [vmem:[%s3371 + $0xe8] sm:$0xff]
      %v3402 = vld [vmem:[%s3371 + $0xf0] sm:$0xff]
      %v3403 = vld [vmem:[%s3371 + $0xf8] sm:$0xff]
      %3404 = vmatprep.subr.mxu0 0.0
      %3405 = vmatpush1.msra.mxu0 %v3372
      %3406 = vmatprep.subr.mxu0 0.0
      %3407 = vmatpush1.msra.mxu0 %v3373
      %3408 = vmatprep.subr.mxu0 0.0
      %3409 = vmatpush1.msra.mxu0 %v3374
      %3410 = vmatprep.subr.mxu0 0.0
      %3411 = vmatpush1.msra.mxu0 %v3375
      %3412 = vmatprep.subr.mxu0 0.0
      %3413 = vmatpush1.msra.mxu0 %v3376
      %3414 = vmatprep.subr.mxu0 0.0
      %3415 = vmatpush1.msra.mxu0 %v3377
      %3416 = vmatprep.subr.mxu0 0.0
      %3417 = vmatpush1.msra.mxu0 %v3378
      %3418 = vmatprep.subr.mxu0 0.0
      %3419 = vmatpush1.msra.mxu0 %v3379
      %3420 = vmatprep.subr.mxu0 0.0
      %3421 = vmatpush1.msra.mxu0 %v3380
      %3422 = vmatprep.subr.mxu0 0.0
      %3423 = vmatpush1.msra.mxu0 %v3381
      %3424 = vmatprep.subr.mxu0 0.0
      %3425 = vmatpush1.msra.mxu0 %v3382
      %3426 = vmatprep.subr.mxu0 0.0
      %3427 = vmatpush1.msra.mxu0 %v3383
      %3428 = vmatprep.subr.mxu0 0.0
      %3429 = vmatpush1.msra.mxu0 %v3384
      %3430 = vmatprep.subr.mxu0 0.0
      %3431 = vmatpush1.msra.mxu0 %v3385
      %3432 = vmatprep.subr.mxu0 0.0
      %3433 = vmatpush1.msra.mxu0 %v3386
      %3434 = vmatprep.subr.mxu0 0.0
      %3435 = vmatpush1.msra.mxu0 %v3387
      %3436 = vmatprep.subr.mxu0 0.0
      %3437 = vmatpush1.msra.mxu0 %v3388
      %3438 = vmatprep.subr.mxu0 0.0
      %3439 = vmatpush1.msra.mxu0 %v3389
      %3440 = vmatprep.subr.mxu0 0.0
      %3441 = vmatpush1.msra.mxu0 %v3390
      %3442 = vmatprep.subr.mxu0 0.0
      %3443 = vmatpush1.msra.mxu0 %v3391
      %3444 = vmatprep.subr.mxu0 0.0
      %3445 = vmatpush1.msra.mxu0 %v3392
      %3446 = vmatprep.subr.mxu0 0.0
      %3447 = vmatpush1.msra.mxu0 %v3393
      %3448 = vmatprep.subr.mxu0 0.0
      %3449 = vmatpush1.msra.mxu0 %v3394
      %3450 = vmatprep.subr.mxu0 0.0
      %3451 = vmatpush1.msra.mxu0 %v3395
      %3452 = vmatprep.subr.mxu0 0.0
      %3453 = vmatpush1.msra.mxu0 %v3396
      %3454 = vmatprep.subr.mxu0 0.0
      %3455 = vmatpush1.msra.mxu0 %v3397
      %3456 = vmatprep.subr.mxu0 0.0
      %3457 = vmatpush1.msra.mxu0 %v3398
      %3458 = vmatprep.subr.mxu0 0.0
      %3459 = vmatpush1.msra.mxu0 %v3399
      %3460 = vmatprep.subr.mxu0 0.0
      %3461 = vmatpush1.msra.mxu0 %v3400
      %3462 = vmatprep.subr.mxu0 0.0
      %3463 = vmatpush1.msra.mxu0 %v3401
      %3464 = vmatprep.subr.mxu0 0.0
      %3465 = vmatpush1.msra.mxu0 %v3402
      %3466 = vmatprep.subr.mxu0 0.0
      %3467 = vmatpush1.msra.mxu0 %v3403
      %3468 = vmatprep.mubr.f32.mxu0 %v3264
      %3469 = vmatmul.mubr.f32.gmra.mrb[0].mxu0 %v3261
      %v3470 = vpop.f32.mrb[0].mxu0
      %v3471 = vadd.f32 0.0, %v3470
      %v3472 = vpop.f32.mrb[0].mxu0
      %3473 = vmatprep.mubr.f32.mxu0 %v3268
      %3474 = vmatmul.mubr.f32.gmra.mrb[0].mxu0 %v3266
      %v3475 = vpop.f32.mrb[0].mxu0
      %v3476 = vadd.f32 0.0, %v3475
      %v3477 = vpop.f32.mrb[0].mxu0
      %3478 = vmatprep.mubr.f32.mxu0 %v3274
      %3479 = vmatmul.mubr.f32.gmra.mrb[0].mxu0 %v3271
      %v3480 = vpop.f32.mrb[0].mxu0
      %v3481 = vadd.f32 0.0, %v3480
      %v3482 = vpop.f32.mrb[0].mxu0
      %3483 = vmatprep.mubr.f32.mxu0 %v3278
      %3484 = vmatmul.mubr.f32.gmra.mrb[0].mxu0 %v3276
      %v3485 = vpop.f32.mrb[0].mxu0
      %v3486 = vadd.f32 0.0, %v3485
      %v3487 = vpop.f32.mrb[0].mxu0
      %3488 = vmatprep.mubr.f32.mxu0 %v3284
      %3489 = vmatmul.mubr.f32.gmra.mrb[0].mxu0 %v3281
      %v3490 = vpop.f32.mrb[0].mxu0
      %v3491 = vadd.f32 0.0, %v3490
      %v3492 = vpop.f32.mrb[0].mxu0
      %3493 = vmatprep.mubr.f32.mxu0 %v3288
      %3494 = vmatmul.mubr.f32.gmra.mrb[0].mxu0 %v3286
      %v3495 = vpop.f32.mrb[0].mxu0
      %v3496 = vadd.f32 0.0, %v3495
      %v3497 = vpop.f32.mrb[0].mxu0
      %3498 = vmatprep.mubr.f32.mxu0 %v3294
      %3499 = vmatmul.mubr.f32.gmra.mrb[0].mxu0 %v3291
      %v3500 = vpop.f32.mrb[0].mxu0
      %v3501 = vadd.f32 0.0, %v3500
      %v3502 = vpop.f32.mrb[0].mxu0
      %3503 = vmatprep.mubr.f32.mxu0 %v3298
      %3504 = vmatmul.mubr.f32.gmra.mrb[0].mxu0 %v3296
      %v3505 = vpop.f32.mrb[0].mxu0
      %v3506 = vadd.f32 0.0, %v3505
      %v3507 = vpop.f32.mrb[0].mxu0
      %3508 = vmatprep.mubr.f32.mxu0 %v3304
      %3509 = vmatmul.mubr.f32.gmra.mrb[0].mxu0 %v3301
      %v3510 = vpop.f32.mrb[0].mxu0
      %v3511 = vadd.f32 0.0, %v3510
      %v3512 = vpop.f32.mrb[0].mxu0
      %3513 = vmatprep.mubr.f32.mxu0 %v3308
      %3514 = vmatmul.mubr.f32.gmra.mrb[0].mxu0 %v3306
      %v3515 = vpop.f32.mrb[0].mxu0
      %v3516 = vadd.f32 0.0, %v3515
      %v3517 = vpop.f32.mrb[0].mxu0
      %3518 = vmatprep.mubr.f32.mxu0 %v3314
      %3519 = vmatmul.mubr.f32.gmra.mrb[0].mxu0 %v3311
      %v3520 = vpop.f32.mrb[0].mxu0
      %v3521 = vadd.f32 0.0, %v3520
      %v3522 = vpop.f32.mrb[0].mxu0
      %3523 = vmatprep.mubr.f32.mxu0 %v3318
      %3524 = vmatmul.mubr.f32.gmra.mrb[0].mxu0 %v3316
      %v3525 = vpop.f32.mrb[0].mxu0
      %v3526 = vadd.f32 0.0, %v3525
      %v3527 = vpop.f32.mrb[0].mxu0
      %3528 = vmatprep.mubr.f32.mxu0 %v3324
      %3529 = vmatmul.mubr.f32.gmra.mrb[0].mxu0 %v3321
      %v3530 = vpop.f32.mrb[0].mxu0
      %v3531 = vadd.f32 0.0, %v3530
      %v3532 = vpop.f32.mrb[0].mxu0
      %3533 = vmatprep.mubr.f32.mxu0 %v3328
      %3534 = vmatmul.mubr.f32.gmra.mrb[0].mxu0 %v3326
      %v3535 = vpop.f32.mrb[0].mxu0
      %v3536 = vadd.f32 0.0, %v3535
      %v3537 = vpop.f32.mrb[0].mxu0
      %3538 = vmatprep.mubr.f32.mxu0 %v3334
      %3539 = vmatmul.mubr.f32.gmra.mrb[0].mxu0 %v3331
      %v3540 = vpop.f32.mrb[0].mxu0
      %v3541 = vadd.f32 0.0, %v3540
      %v3542 = vpop.f32.mrb[0].mxu0
      %3543 = vmatprep.mubr.f32.mxu0 %v3338
      %3544 = vmatmul.mubr.f32.gmra.mrb[0].mxu0 %v3336
      %v3545 = vpop.f32.mrb[0].mxu0
      %v3546 = vadd.f32 0.0, %v3545
      %v3547 = vpop.f32.mrb[0].mxu0
      %3548 = vdwg.mxu0
      %v3549 = vadd.f32 %v3147, %v3471
      %v3550 = vadd.f32 %v3148, %v3476
      %v3551 = vadd.f32 %v3149, %v3481
      %v3552 = vadd.f32 %v3150, %v3486
      %v3553 = vadd.f32 %v3151, %v3491
      %v3554 = vadd.f32 %v3152, %v3496
      %v3555 = vadd.f32 %v3153, %v3501
      %v3556 = vadd.f32 %v3154, %v3506
      %v3557 = vadd.f32 %v3155, %v3511
      %v3558 = vadd.f32 %v3156, %v3516
      %v3559 = vadd.f32 %v3157, %v3521
      %v3560 = vadd.f32 %v3158, %v3526
      %v3561 = vadd.f32 %v3159, %v3531
      %v3562 = vadd.f32 %v3160, %v3536
      %v3563 = vadd.f32 %v3161, %v3541
      %v3564 = vadd.f32 %v3162, %v3546
      %v3565 = vld [vmem:[%s2936] sm:$0xf0]
      %v3566 = vld [vmem:[%s2936 + $0x8] sm:$0xf0]
      %v3567 = vld [vmem:[%s2936 + $0x20] sm:$0xf]
      %v3568 = vld [vmem:[%s2936 + $0x28] sm:$0xf]
      %v3569 = vld [vmem:[%s2936 + $0x30] sm:$0xf0]
      %v3570 = vld [vmem:[%s2936 + $0x38] sm:$0xf0]
      %v3571 = vld [vmem:[%s2936 + $0x50] sm:$0xf]
      %v3572 = vld [vmem:[%s2936 + $0x58] sm:$0xf]
      %v3573 = vld [vmem:[%s2936 + $0x60] sm:$0xf0]
      %v3574 = vld [vmem:[%s2936 + $0x68] sm:$0xf0]
      %v3575 = vld [vmem:[%s2936 + $0x80] sm:$0xf]
      %v3576 = vld [vmem:[%s2936 + $0x88] sm:$0xf]
      %v3577 = vld [vmem:[%s2936 + $0x90] sm:$0xf0]
      %v3578 = vld [vmem:[%s2936 + $0x98] sm:$0xf0]
      %v3579 = vld [vmem:[%s2936 + $0xb0] sm:$0xf]
      %v3580 = vld [vmem:[%s2936 + $0xb8] sm:$0xf]
      %v3581 = vld [vmem:[%s2936 + $0xc0] sm:$0xf0]
      %v3582 = vld [vmem:[%s2936 + $0xc8] sm:$0xf0]
      %v3583 = vld [vmem:[%s2936 + $0xe0] sm:$0xf]
      %v3584 = vld [vmem:[%s2936 + $0xe8] sm:$0xf]
      %v3585 = vld [vmem:[%s2936 + $0xf0] sm:$0xf0]
      %v3586 = vld [vmem:[%s2936 + $0xf8] sm:$0xf0]
      %v3587 = vld [vmem:[%s2936 + $0x110] sm:$0xf]
      %v3588 = vld [vmem:[%s2936 + $0x118] sm:$0xf]
      %v3589 = vld [vmem:[%s2936 + $0x120] sm:$0xf0]
      %v3590 = vld [vmem:[%s2936 + $0x128] sm:$0xf0]
      %v3591 = vld [vmem:[%s2936 + $0x140] sm:$0xf]
      %v3592 = vld [vmem:[%s2936 + $0x148] sm:$0xf]
      %v3593 = vld [vmem:[%s2936 + $0x150] sm:$0xf0]
      %v3594 = vld [vmem:[%s2936 + $0x158] sm:$0xf0]
      %v3595 = vld [vmem:[%s2936 + $0x170] sm:$0xf]
      %v3596 = vld [vmem:[%s2936 + $0x178] sm:$0xf]
      %v3629 = vrot.slane %v3565, 4
      %v3630 = vrot.slane %v3165, 4
      %v3631 = vsel %vm421, %v3629, %v3630
      %v3632 = vrot.slane %v3566, 4
      %v3633 = vrot.slane %v3166, 4
      %v3634 = vsel %vm421, %v3632, %v3633
      %v3635 = vrot.slane %v3567, 4
      %v3636 = vsel %vm421, %v3630, %v3635
      %v3637 = vrot.slane %v3568, 4
      %v3638 = vsel %vm421, %v3633, %v3637
      %v3639 = vrot.slane %v3569, 4
      %v3640 = vrot.slane %v3171, 4
      %v3641 = vsel %vm421, %v3639, %v3640
      %v3642 = vrot.slane %v3570, 4
      %v3643 = vrot.slane %v3172, 4
      %v3644 = vsel %vm421, %v3642, %v3643
      %v3645 = vrot.slane %v3571, 4
      %v3646 = vsel %vm421, %v3640, %v3645
      %v3647 = vrot.slane %v3572, 4
      %v3648 = vsel %vm421, %v3643, %v3647
      %v3649 = vrot.slane %v3573, 4
      %v3650 = vrot.slane %v3177, 4
      %v3651 = vsel %vm421, %v3649, %v3650
      %v3652 = vrot.slane %v3574, 4
      %v3653 = vrot.slane %v3178, 4
      %v3654 = vsel %vm421, %v3652, %v3653
      %v3655 = vrot.slane %v3575, 4
      %v3656 = vsel %vm421, %v3650, %v3655
      %v3657 = vrot.slane %v3576, 4
      %v3658 = vsel %vm421, %v3653, %v3657
      %v3659 = vrot.slane %v3577, 4
      %v3660 = vrot.slane %v3183, 4
      %v3661 = vsel %vm421, %v3659, %v3660
      %v3662 = vrot.slane %v3578, 4
      %v3663 = vrot.slane %v3184, 4
      %v3664 = vsel %vm421, %v3662, %v3663
      %v3665 = vrot.slane %v3579, 4
      %v3666 = vsel %vm421, %v3660, %v3665
      %v3667 = vrot.slane %v3580, 4
      %v3668 = vsel %vm421, %v3663, %v3667
      %v3669 = vrot.slane %v3581, 4
      %v3670 = vrot.slane %v3189, 4
      %v3671 = vsel %vm421, %v3669, %v3670
      %v3672 = vrot.slane %v3582, 4
      %v3673 = vrot.slane %v3190, 4
      %v3674 = vsel %vm421, %v3672, %v3673
      %v3675 = vrot.slane %v3583, 4
      %v3676 = vsel %vm421, %v3670, %v3675
      %v3677 = vrot.slane %v3584, 4
      %v3678 = vsel %vm421, %v3673, %v3677
      %v3679 = vrot.slane %v3585, 4
      %v3680 = vrot.slane %v3195, 4
      %v3681 = vsel %vm421, %v3679, %v3680
      %v3682 = vrot.slane %v3586, 4
      %v3683 = vrot.slane %v3196, 4
      %v3684 = vsel %vm421, %v3682, %v3683
      %v3685 = vrot.slane %v3587, 4
      %v3686 = vsel %vm421, %v3680, %v3685
      %v3687 = vrot.slane %v3588, 4
      %v3688 = vsel %vm421, %v3683, %v3687
      %v3689 = vrot.slane %v3589, 4
      %v3690 = vrot.slane %v3201, 4
      %v3691 = vsel %vm421, %v3689, %v3690
      %v3692 = vrot.slane %v3590, 4
      %v3693 = vrot.slane %v3202, 4
      %v3694 = vsel %vm421, %v3692, %v3693
      %v3695 = vrot.slane %v3591, 4
      %v3696 = vsel %vm421, %v3690, %v3695
      %v3697 = vrot.slane %v3592, 4
      %v3698 = vsel %vm421, %v3693, %v3697
      %v3699 = vrot.slane %v3593, 4
      %v3700 = vrot.slane %v3207, 4
      %v3701 = vsel %vm421, %v3699, %v3700
      %v3702 = vrot.slane %v3594, 4
      %v3703 = vrot.slane %v3208, 4
      %v3704 = vsel %vm421, %v3702, %v3703
      %v3705 = vrot.slane %v3595, 4
      %v3706 = vsel %vm421, %v3700, %v3705
      %v3707 = vrot.slane %v3596, 4
      %v3708 = vsel %vm421, %v3703, %v3707
      %s3741 = scalar_lea.vmem %s3, 2048
      %v3742 = vld [vmem:[%s3741] sm:$0xff]
      %v3743 = vld [vmem:[%s3741 + $0x8] sm:$0xff]
      %v3744 = vld [vmem:[%s3741 + $0x10] sm:$0xff]
      %v3745 = vld [vmem:[%s3741 + $0x18] sm:$0xff]
      %v3746 = vld [vmem:[%s3741 + $0x20] sm:$0xff]
      %v3747 = vld [vmem:[%s3741 + $0x28] sm:$0xff]
      %v3748 = vld [vmem:[%s3741 + $0x30] sm:$0xff]
      %v3749 = vld [vmem:[%s3741 + $0x38] sm:$0xff]
      %v3750 = vld [vmem:[%s3741 + $0x40] sm:$0xff]
      %v3751 = vld [vmem:[%s3741 + $0x48] sm:$0xff]
      %v3752 = vld [vmem:[%s3741 + $0x50] sm:$0xff]
      %v3753 = vld [vmem:[%s3741 + $0x58] sm:$0xff]
      %v3754 = vld [vmem:[%s3741 + $0x60] sm:$0xff]
      %v3755 = vld [vmem:[%s3741 + $0x68] sm:$0xff]
      %v3756 = vld [vmem:[%s3741 + $0x70] sm:$0xff]
      %v3757 = vld [vmem:[%s3741 + $0x78] sm:$0xff]
      %v3758 = vld [vmem:[%s3741 + $0x80] sm:$0xff]
      %v3759 = vld [vmem:[%s3741 + $0x88] sm:$0xff]
      %v3760 = vld [vmem:[%s3741 + $0x90] sm:$0xff]
      %v3761 = vld [vmem:[%s3741 + $0x98] sm:$0xff]
      %v3762 = vld [vmem:[%s3741 + $0xa0] sm:$0xff]
      %v3763 = vld [vmem:[%s3741 + $0xa8] sm:$0xff]
      %v3764 = vld [vmem:[%s3741 + $0xb0] sm:$0xff]
      %v3765 = vld [vmem:[%s3741 + $0xb8] sm:$0xff]
      %v3766 = vld [vmem:[%s3741 + $0xc0] sm:$0xff]
      %v3767 = vld [vmem:[%s3741 + $0xc8] sm:$0xff]
      %v3768 = vld [vmem:[%s3741 + $0xd0] sm:$0xff]
      %v3769 = vld [vmem:[%s3741 + $0xd8] sm:$0xff]
      %v3770 = vld [vmem:[%s3741 + $0xe0] sm:$0xff]
      %v3771 = vld [vmem:[%s3741 + $0xe8] sm:$0xff]
      %v3772 = vld [vmem:[%s3741 + $0xf0] sm:$0xff]
      %v3773 = vld [vmem:[%s3741 + $0xf8] sm:$0xff]
      %3774 = vmatprep.subr.mxu0 0.0
      %3775 = vmatpush1.msra.mxu0 %v3742
      %3776 = vmatprep.subr.mxu0 0.0
      %3777 = vmatpush1.msra.mxu0 %v3743
      %3778 = vmatprep.subr.mxu0 0.0
      %3779 = vmatpush1.msra.mxu0 %v3744
      %3780 = vmatprep.subr.mxu0 0.0
      %3781 = vmatpush1.msra.mxu0 %v3745
      %3782 = vmatprep.subr.mxu0 0.0
      %3783 = vmatpush1.msra.mxu0 %v3746
      %3784 = vmatprep.subr.mxu0 0.0
      %3785 = vmatpush1.msra.mxu0 %v3747
      %3786 = vmatprep.subr.mxu0 0.0
      %3787 = vmatpush1.msra.mxu0 %v3748
      %3788 = vmatprep.subr.mxu0 0.0
      %3789 = vmatpush1.msra.mxu0 %v3749
      %3790 = vmatprep.subr.mxu0 0.0
      %3791 = vmatpush1.msra.mxu0 %v3750
      %3792 = vmatprep.subr.mxu0 0.0
      %3793 = vmatpush1.msra.mxu0 %v3751
      %3794 = vmatprep.subr.mxu0 0.0
      %3795 = vmatpush1.msra.mxu0 %v3752
      %3796 = vmatprep.subr.mxu0 0.0
      %3797 = vmatpush1.msra.mxu0 %v3753
      %3798 = vmatprep.subr.mxu0 0.0
      %3799 = vmatpush1.msra.mxu0 %v3754
      %3800 = vmatprep.subr.mxu0 0.0
      %3801 = vmatpush1.msra.mxu0 %v3755
      %3802 = vmatprep.subr.mxu0 0.0
      %3803 = vmatpush1.msra.mxu0 %v3756
      %3804 = vmatprep.subr.mxu0 0.0
      %3805 = vmatpush1.msra.mxu0 %v3757
      %3806 = vmatprep.subr.mxu0 0.0
      %3807 = vmatpush1.msra.mxu0 %v3758
      %3808 = vmatprep.subr.mxu0 0.0
      %3809 = vmatpush1.msra.mxu0 %v3759
      %3810 = vmatprep.subr.mxu0 0.0
      %3811 = vmatpush1.msra.mxu0 %v3760
      %3812 = vmatprep.subr.mxu0 0.0
      %3813 = vmatpush1.msra.mxu0 %v3761
      %3814 = vmatprep.subr.mxu0 0.0
      %3815 = vmatpush1.msra.mxu0 %v3762
      %3816 = vmatprep.subr.mxu0 0.0
      %3817 = vmatpush1.msra.mxu0 %v3763
      %3818 = vmatprep.subr.mxu0 0.0
      %3819 = vmatpush1.msra.mxu0 %v3764
      %3820 = vmatprep.subr.mxu0 0.0
      %3821 = vmatpush1.msra.mxu0 %v3765
      %3822 = vmatprep.subr.mxu0 0.0
      %3823 = vmatpush1.msra.mxu0 %v3766
      %3824 = vmatprep.subr.mxu0 0.0
      %3825 = vmatpush1.msra.mxu0 %v3767
      %3826 = vmatprep.subr.mxu0 0.0
      %3827 = vmatpush1.msra.mxu0 %v3768
      %3828 = vmatprep.subr.mxu0 0.0
      %3829 = vmatpush1.msra.mxu0 %v3769
      %3830 = vmatprep.subr.mxu0 0.0
      %3831 = vmatpush1.msra.mxu0 %v3770
      %3832 = vmatprep.subr.mxu0 0.0
      %3833 = vmatpush1.msra.mxu0 %v3771
      %3834 = vmatprep.subr.mxu0 0.0
      %3835 = vmatpush1.msra.mxu0 %v3772
      %3836 = vmatprep.subr.mxu0 0.0
      %3837 = vmatpush1.msra.mxu0 %v3773
      %3838 = vmatprep.mubr.f32.mxu0 %v3634
      %3839 = vmatmul.mubr.f32.gmra.mrb[0].mxu0 %v3631
      %v3840 = vpop.f32.mrb[0].mxu0
      %v3841 = vadd.f32 0.0, %v3840
      %v3842 = vpop.f32.mrb[0].mxu0
      %3843 = vmatprep.mubr.f32.mxu0 %v3638
      %3844 = vmatmul.mubr.f32.gmra.mrb[0].mxu0 %v3636
      %v3845 = vpop.f32.mrb[0].mxu0
      %v3846 = vadd.f32 0.0, %v3845
      %v3847 = vpop.f32.mrb[0].mxu0
      %3848 = vmatprep.mubr.f32.mxu0 %v3644
      %3849 = vmatmul.mubr.f32.gmra.mrb[0].mxu0 %v3641
      %v3850 = vpop.f32.mrb[0].mxu0
      %v3851 = vadd.f32 0.0, %v3850
      %v3852 = vpop.f32.mrb[0].mxu0
      %3853 = vmatprep.mubr.f32.mxu0 %v3648
      %3854 = vmatmul.mubr.f32.gmra.mrb[0].mxu0 %v3646
      %v3855 = vpop.f32.mrb[0].mxu0
      %v3856 = vadd.f32 0.0, %v3855
      %v3857 = vpop.f32.mrb[0].mxu0
      %3858 = vmatprep.mubr.f32.mxu0 %v3654
      %3859 = vmatmul.mubr.f32.gmra.mrb[0].mxu0 %v3651
      %v3860 = vpop.f32.mrb[0].mxu0
      %v3861 = vadd.f32 0.0, %v3860
      %v3862 = vpop.f32.mrb[0].mxu0
      %3863 = vmatprep.mubr.f32.mxu0 %v3658
      %3864 = vmatmul.mubr.f32.gmra.mrb[0].mxu0 %v3656
      %v3865 = vpop.f32.mrb[0].mxu0
      %v3866 = vadd.f32 0.0, %v3865
      %v3867 = vpop.f32.mrb[0].mxu0
      %3868 = vmatprep.mubr.f32.mxu0 %v3664
      %3869 = vmatmul.mubr.f32.gmra.mrb[0].mxu0 %v3661
      %v3870 = vpop.f32.mrb[0].mxu0
      %v3871 = vadd.f32 0.0, %v3870
      %v3872 = vpop.f32.mrb[0].mxu0
      %3873 = vmatprep.mubr.f32.mxu0 %v3668
      %3874 = vmatmul.mubr.f32.gmra.mrb[0].mxu0 %v3666
      %v3875 = vpop.f32.mrb[0].mxu0
      %v3876 = vadd.f32 0.0, %v3875
      %v3877 = vpop.f32.mrb[0].mxu0
      %3878 = vmatprep.mubr.f32.mxu0 %v3674
      %3879 = vmatmul.mubr.f32.gmra.mrb[0].mxu0 %v3671
      %v3880 = vpop.f32.mrb[0].mxu0
      %v3881 = vadd.f32 0.0, %v3880
      %v3882 = vpop.f32.mrb[0].mxu0
      %3883 = vmatprep.mubr.f32.mxu0 %v3678
      %3884 = vmatmul.mubr.f32.gmra.mrb[0].mxu0 %v3676
      %v3885 = vpop.f32.mrb[0].mxu0
      %v3886 = vadd.f32 0.0, %v3885
      %v3887 = vpop.f32.mrb[0].mxu0
      %3888 = vmatprep.mubr.f32.mxu0 %v3684
      %3889 = vmatmul.mubr.f32.gmra.mrb[0].mxu0 %v3681
      %v3890 = vpop.f32.mrb[0].mxu0
      %v3891 = vadd.f32 0.0, %v3890
      %v3892 = vpop.f32.mrb[0].mxu0
      %3893 = vmatprep.mubr.f32.mxu0 %v3688
      %3894 = vmatmul.mubr.f32.gmra.mrb[0].mxu0 %v3686
      %v3895 = vpop.f32.mrb[0].mxu0
      %v3896 = vadd.f32 0.0, %v3895
      %v3897 = vpop.f32.mrb[0].mxu0
      %3898 = vmatprep.mubr.f32.mxu0 %v3694
      %3899 = vmatmul.mubr.f32.gmra.mrb[0].mxu0 %v3691
      %v3900 = vpop.f32.mrb[0].mxu0
      %v3901 = vadd.f32 0.0, %v3900
      %v3902 = vpop.f32.mrb[0].mxu0
      %3903 = vmatprep.mubr.f32.mxu0 %v3698
      %3904 = vmatmul.mubr.f32.gmra.mrb[0].mxu0 %v3696
      %v3905 = vpop.f32.mrb[0].mxu0
      %v3906 = vadd.f32 0.0, %v3905
      %v3907 = vpop.f32.mrb[0].mxu0
      %3908 = vmatprep.mubr.f32.mxu0 %v3704
      %3909 = vmatmul.mubr.f32.gmra.mrb[0].mxu0 %v3701
      %v3910 = vpop.f32.mrb[0].mxu0
      %v3911 = vadd.f32 0.0, %v3910
      %v3912 = vpop.f32.mrb[0].mxu0
      %3913 = vmatprep.mubr.f32.mxu0 %v3708
      %3914 = vmatmul.mubr.f32.gmra.mrb[0].mxu0 %v3706
      %v3915 = vpop.f32.mrb[0].mxu0
      %v3916 = vadd.f32 0.0, %v3915
      %v3917 = vpop.f32.mrb[0].mxu0
      %3918 = vdwg.mxu0
      %v3919 = vadd.f32 %v3549, %v3841
      %v3920 = vadd.f32 %v3550, %v3846
      %v3921 = vadd.f32 %v3551, %v3851
      %v3922 = vadd.f32 %v3552, %v3856
      %v3923 = vadd.f32 %v3553, %v3861
      %v3924 = vadd.f32 %v3554, %v3866
      %v3925 = vadd.f32 %v3555, %v3871
      %v3926 = vadd.f32 %v3556, %v3876
      %v3927 = vadd.f32 %v3557, %v3881
      %v3928 = vadd.f32 %v3558, %v3886
      %v3929 = vadd.f32 %v3559, %v3891
      %v3930 = vadd.f32 %v3560, %v3896
      %v3931 = vadd.f32 %v3561, %v3901
      %v3932 = vadd.f32 %v3562, %v3906
      %v3933 = vadd.f32 %v3563, %v3911
      %v3934 = vadd.f32 %v3564, %v3916
      %v3935 = vmax.f32 %v3919, 0.0
      %v3936 = vmax.f32 %v3920, 0.0
      %v3937 = vmax.f32 %v3921, 0.0
      %v3938 = vmax.f32 %v3922, 0.0
      %v3939 = vmax.f32 %v3923, 0.0
      %v3940 = vmax.f32 %v3924, 0.0
      %v3941 = vmax.f32 %v3925, 0.0
      %v3942 = vmax.f32 %v3926, 0.0
      %v3943 = vmax.f32 %v3927, 0.0
      %v3944 = vmax.f32 %v3928, 0.0
      %v3945 = vmax.f32 %v3929, 0.0
      %v3946 = vmax.f32 %v3930, 0.0
      %v3947 = vmax.f32 %v3931, 0.0
      %v3948 = vmax.f32 %v3932, 0.0
      %v3949 = vmax.f32 %v3933, 0.0
      %v3950 = vmax.f32 %v3934, 0.0
      %3951 = vst [vmem:[%s258] sm:$0xff] %v3935
      %3952 = vst [vmem:[%s258 + $0x8] sm:$0xff] %v3936
      %3953 = vst [vmem:[%s258 + $0x10] sm:$0xff] %v3937
      %3954 = vst [vmem:[%s258 + $0x18] sm:$0xff] %v3938
      %3955 = vst [vmem:[%s258 + $0x20] sm:$0xff] %v3939
      %3956 = vst [vmem:[%s258 + $0x28] sm:$0xff] %v3940
      %3957 = vst [vmem:[%s258 + $0x30] sm:$0xff] %v3941
      %3958 = vst [vmem:[%s258 + $0x38] sm:$0xff] %v3942
      %3959 = vst [vmem:[%s258 + $0x40] sm:$0xff] %v3943
      %3960 = vst [vmem:[%s258 + $0x48] sm:$0xff] %v3944
      %3961 = vst [vmem:[%s258 + $0x50] sm:$0xff] %v3945
      %3962 = vst [vmem:[%s258 + $0x58] sm:$0xff] %v3946
      %3963 = vst [vmem:[%s258 + $0x60] sm:$0xff] %v3947
      %3964 = vst [vmem:[%s258 + $0x68] sm:$0xff] %v3948
      %3965 = vst [vmem:[%s258 + $0x70] sm:$0xff] %v3949
      %3966 = vst [vmem:[%s258 + $0x78] sm:$0xff] %v3950
      %s3967 = smul.u32 %s20, 2
      %s3968 = sadd.s32 %s3967, %s21
      %p3969 = scmp.lt.s32.totalorder %s3968, 3
      %s3970 = scalar_select %p3969, %s3968, 3
      %s3971 = smul.addr %s3970, 16
      %s3972 = smul.addr %s3971, 8
      %s3973 = scalar_lea.vmem %s5, %s3972
      // Predicated region
      $region49: #{spatial_block_forward.1} parent=39 // pred_check
        %p3974 = pneg %p164
      $region50: #{spatial_block_forward.1} parent=39 // pred_check_branch
        %3976 = sbr.rel (%p3974) target = $region52
      $region51: #{spatial_block_forward.1} parent=39 // pred_region
        %s3977 = smul.u32 %s20, 2
        %s3978 = sadd.s32 %s3977, %s21
      $region52: #{spatial_block_forward.1} parent=39 // pred_fallthru
        _
    $region40: #{spatial_block_forward.1} parent=5 // pred_fallthru
      _
    %p3979 = scmp.le.s32.totalorder 2, %s11
    // Predicated region
    $region53: #{spatial_block_forward.1} parent=5 // pred_check
      %p3980 = pneg %p3979
    $region54: #{spatial_block_forward.1} parent=5 // pred_check_branch
      %3982 = sbr.rel (%p3980) target = $region56
    $region55: #{spatial_block_forward.1} parent=5 // pred_region
      %s3983 = ssub.s32 %s11, 2
      // Predicated region
      $region57: #{spatial_block_forward.1} parent=55 // pred_check
        %p3984 = pneg %p170
      $region58: #{spatial_block_forward.1} parent=55 // pred_check_branch
        %3986 = sbr.rel (%p3984) target = $region60
      $region59: #{spatial_block_forward.1} parent=55 // pred_region
        %s3987 = smul.u32 %s22, 2
        %s3988 = sadd.s32 %s3987, %s23
        %p3989 = scmp.lt.s32.totalorder %s3988, 3
        %s3990 = scalar_select %p3989, %s3988, 3
        %s3991 = smul.addr %s3990, 16
        %s3992 = smul.addr %s3991, 8
        %s3993 = scalar_lea.vmem %s5, %s3992
      $region60: #{spatial_block_forward.1} parent=55 // pred_fallthru
        _
    $region56: #{spatial_block_forward.1} parent=5 // pred_fallthru
      _
  $region6: #{spatial_block_forward.1} parent=0 // loop_footer
    %s15 = sadd.s32 1, %s11
  $region7: #{spatial_block_forward.1} parent=0 // loop_footer_branch
    %10 = sbr.rel target = $region3
  $region8: #{spatial_block_forward.1} parent=0 // loop_exit
    _

</llo_original>
